<compile_context>
chip_gen: v7x
topology: tpu7x:2x2x1
jax: 0.10.0
libtpu: 0.0.40
codegen_flags: <defaults>
</compile_context>

<pallas_src>
import functools

import jax
import jax.numpy as jnp
import numpy as np
from jax.experimental import pallas as pl
from jax.experimental.pallas import tpu as pltpu


# ---------------------------------------------------------------------------
# Pallas kernel: the whole Discriminator forward for one batch tile (1 sample)
# ---------------------------------------------------------------------------
def _disc_kernel(
    patches_ref, w1_ref, b1_ref,
    g2_ref, w2_ref, b2_ref, sc2_ref, sh2_ref,
    g3_ref, w3_ref, b3_ref, sc3_ref, sh3_ref,
    g4_ref, w4_ref, b4_ref, sc4_ref, sh4_ref,
    g5_ref, w5_ref, b5_ref,
    g6_ref, w6_ref, b6_ref,
    hw_ref, hb_ref,
    out_ref,
    *, taps2, taps3, taps4, taps5, taps6, n_classes):
    f32 = jnp.float32
    bf16 = jnp.bfloat16

    def leaky(v):
        return jnp.where(v > 0, v, 0.2 * v)

    def recip(x):
        # EUP approximate reciprocal + one Newton step (|err| ~1e-7, <= 1/x).
        r = pl.reciprocal(x, approx=True)
        return r * (2.0 - x * r)

    def conv_taps(a, g_ref, w_ref, modes):
        # y = sum_t (G_t @ a) @ W_t ; gather matmul skipped for identity taps.
        a_bf = a.astype(bf16)
        acc = None
        for i, mode in enumerate(modes):
            if mode == "identity":
                p = a_bf
            else:
                p = jnp.dot(g_ref[i], a_bf,
                            preferred_element_type=f32).astype(bf16)
            y = jnp.dot(p, w_ref[i], preferred_element_type=f32)
            acc = y if acc is None else acc + y
        return acc

    # --- block 1: conv(s2) + bias -> LeakyReLU(0.2)
    # TODO(synk): Dropout2d(0.25) is eval-mode identity; training-mode RNG
    #             channel dropout is not implemented.
    a = jnp.dot(patches_ref[...], w1_ref[...],
                preferred_element_type=f32) + b1_ref[...]
    a = leaky(a)

    # --- blocks 2-4: conv(s2)+bias -> LeakyReLU -> BatchNorm affine (eps=0.8)
    for g_ref, w_ref, b_ref, sc_ref, sh_ref, modes in (
            (g2_ref, w2_ref, b2_ref, sc2_ref, sh2_ref, taps2),
            (g3_ref, w3_ref, b3_ref, sc3_ref, sh3_ref, taps3),
            (g4_ref, w4_ref, b4_ref, sc4_ref, sh4_ref, taps4)):
        a = conv_taps(a, g_ref, w_ref, modes) + b_ref[...]
        a = leaky(a) * sc_ref[...] + sh_ref[...]

    # --- ResidualBlock (InstanceNorm affines folded into weights / bias)
    h = jnp.maximum(conv_taps(a, g5_ref, w5_ref, taps5) + b5_ref[...], 0.0)
    a = a + conv_taps(h, g6_ref, w6_ref, taps6) + b6_ref[...]   # residual add in VMEM

    # --- fused heads: (adv | aux | zero-pad) packed into 128 output lanes
    acc = None
    for j in range(a.shape[0]):                 # ds*ds spatial rows (static)
        y = jnp.dot(a[j:j + 1, :].astype(bf16), hw_ref[j],
                    preferred_element_type=f32)
        acc = y if acc is None else acc + y
    logits = acc + hb_ref[...]                  # (1, 128)

    col = jax.lax.broadcasted_iota(jnp.int32, logits.shape, 1)
    validity = recip(1.0 + jnp.exp(-logits))                   # sigmoid
    is_aux = (col >= 1) & (col <= n_classes)
    masked = jnp.where(is_aux, logits, -1e30)
    m = jnp.max(masked, axis=-1, keepdims=True)
    e = jnp.where(is_aux, jnp.exp(logits - m), 0.0)
    probs = e * recip(jnp.sum(e, axis=-1, keepdims=True))      # softmax (aux)
    row = jnp.where(col == 0, validity, probs)

    out_ref[...] = jnp.broadcast_to(row, out_ref.shape).astype(out_ref.dtype)


# ---------------------------------------------------------------------------
# Host-side operand construction
# ---------------------------------------------------------------------------
def _norm_affine(gamma, beta, mean, var, eps):
    scale = gamma / jnp.sqrt(var + eps)
    return scale, beta - mean * scale


def _build_gather(hin, win, stride):
    """0/1 spatial gather matrices for a 3x3, pad=1 conv: (9, Ho*Wo, hin*win)."""
    ho = (hin + 2 - 3) // stride + 1
    wo = (win + 2 - 3) // stride + 1
    g = np.zeros((9, ho * wo, hin * win), np.float32)
    for kh in range(3):
        for kw in range(3):
            t = kh * 3 + kw
            for oh in range(ho):
                for ow in range(wo):
                    ih, iw = stride * oh + kh - 1, stride * ow + kw - 1
                    if 0 <= ih < hin and 0 <= iw < win:
                        g[t, oh * wo + ow, ih * win + iw] = 1.0
    return g, ho


def _conv_tap_operands(weight, hin, stride, col_scale=None):
    """Gather mats + per-tap (Cin, Cout) weights in bf16, pruning unused taps."""
    cout, cin = weight.shape[0], weight.shape[1]
    g9, ho = _build_gather(hin, hin, stride)
    w9 = jnp.transpose(weight, (2, 3, 1, 0)).reshape(9, cin, cout)
    if col_scale is not None:              # fold per-output-channel norm scale
        w9 = w9 * col_scale.reshape(1, 1, cout)
    ro, ri = g9.shape[1], g9.shape[2]
    eye = np.eye(ro, dtype=np.float32) if ro == ri else None
    modes, keep = [], []
    for t in range(9):
        if not g9[t].any():
            continue                       # tap lies entirely in zero padding
        keep.append(t)
        modes.append("identity" if (eye is not None and
                                    np.array_equal(g9[t], eye)) else "general")
    g = jnp.asarray(g9[np.array(keep)], dtype=jnp.bfloat16)
    w = w9[np.array(keep)].astype(jnp.bfloat16)
    return g, w, tuple(modes), ho


def _im2col_s2(x):
    """im2col for the first (stride-2) conv only; its input comes from HBM."""
    b, c, h, w = x.shape
    ho, wo = h // 2, w // 2
    xp = jnp.pad(x, ((0, 0), (0, 0), (1, 1), (1, 1)))
    cols = []
    for kh in range(3):
        for kw in range(3):
            cols.append(xp[:, :, kh:kh + 2 * (ho - 1) + 1:2,
                           kw:kw + 2 * (wo - 1) + 1:2])
    pat = jnp.stack(cols, axis=2).transpose(0, 3, 4, 1, 2)
    return pat.reshape(b * ho * wo, c * 9)        # features: (Cin major, tap)


def _const_spec(arr):
    idx = (0,) * arr.ndim
    return pl.BlockSpec(arr.shape, lambda b, _i=idx: _i)


# ---------------------------------------------------------------------------
# Forward pass (single fused pallas_call, grid over batch)
# ---------------------------------------------------------------------------
def discriminator_forward(img, p, n_classes=4):
    B, C, H, W = img.shape
    assert H == W and H % 16 == 0
    ds = H // 16
    ds2 = ds * ds

    # ---- layer 1 operands
    r1 = (H // 2) ** 2
    patches1 = _im2col_s2(img).astype(jnp.bfloat16)              # (B*r1, C*9)
    w1 = p["c1_w"].reshape(16, C * 9).T.astype(jnp.bfloat16)
    b1 = p["c1_b"].reshape(1, 16).astype(jnp.float32)

    ops = [patches1, w1, b1]
    specs = [pl.BlockSpec((r1, C * 9), lambda b: (b, 0)),
             _const_spec(w1), _const_spec(b1)]

    # ---- blocks 2-4: conv + bias + LeakyReLU + BatchNorm(eps=0.8) affine
    taps = {}
    hin = H // 2
    for i, cout in ((2, 32), (3, 64), (4, 128)):
        g, wt, modes, hin = _conv_tap_operands(p[f"c{i}_w"], hin, 2)
        sc, sh = _norm_affine(p[f"bn{i}_g"], p[f"bn{i}_b"],
                              p[f"bn{i}_rm"], p[f"bn{i}_rv"], 0.8)
        layer_ops = [g, wt,
                     p[f"c{i}_b"].reshape(1, cout).astype(jnp.float32),
                     sc.reshape(1, cout).astype(jnp.float32),
                     sh.reshape(1, cout).astype(jnp.float32)]
        ops += layer_ops
        specs += [_const_spec(a) for a in layer_ops]
        taps[i] = modes

    # ---- ResidualBlock: fold InstanceNorm affine into the bias-free convs
    for li, name in ((5, "1"), (6, "2")):
        s, t = _norm_affine(p[f"in{name}_g"], p[f"in{name}_b"],
                            p[f"in{name}_rm"], p[f"in{name}_rv"], 1e-5)
        g, wt, modes, _ = _conv_tap_operands(p[f"r{name}_w"], ds, 1,
                                             col_scale=s)
        layer_ops = [g, wt, t.reshape(1, 128).astype(jnp.float32)]
        ops += layer_ops
        specs += [_const_spec(a) for a in layer_ops]
        taps[li] = modes

    # ---- fused heads, packed / zero-padded to 128 output lanes
    wcat = jnp.concatenate([p["adv_w"], p["aux_w"]], axis=0)        # (1+n, F)
    wcat = jnp.pad(wcat, ((0, 128 - (1 + n_classes)), (0, 0)))      # (128, F)
    # PyTorch .view flattens NCHW channel-major: F index = c*ds2 + hw
    hw = wcat.reshape(128, 128, ds2).transpose(2, 1, 0).astype(jnp.bfloat16)
    bcat = jnp.concatenate([p["adv_b"], p["aux_b"]])
    hb = jnp.pad(bcat, (0, 128 - (1 + n_classes))).reshape(1, 128)
    hb = hb.astype(jnp.float32)
    ops += [hw, hb]
    specs += [_const_spec(hw), _const_spec(hb)]

    kernel = functools.partial(
        _disc_kernel, taps2=taps[2], taps3=taps[3], taps4=taps[4],
        taps5=taps[5], taps6=taps[6], n_classes=n_classes)

    out = pl.pallas_call(
        kernel,
        out_shape=jax.ShapeDtypeStruct((B * 8, 128), jnp.float32),
        grid=(B,),
        in_specs=specs,
        out_specs=pl.BlockSpec((8, 128), lambda b: (b, 0)),
        compiler_params=pltpu.CompilerParams(
            dimension_semantics=("parallel",)),   # v7x: split batch over 2 TCs
    )(*ops)

    out = out.reshape(B, 8, 128)[:, 0, :]
    return out[:, 0:1], out[:, 1:1 + n_classes]


# ---------------------------------------------------------------------------
# Pure-JAX reference (same eval-mode semantics) for correctness checking
# ---------------------------------------------------------------------------
def _reference_forward(img, p):
    def conv(x, w, b, stride):
        y = jax.lax.conv_general_dilated(
            x, w, (stride, stride), ((1, 1), (1, 1)),
            dimension_numbers=("NCHW", "OIHW", "NCHW"))
        return y if b is None else y + b.reshape(1, -1, 1, 1)

    leaky = lambda v: jnp.where(v > 0, v, 0.2 * v)
    x = leaky(conv(img, p["c1_w"], p["c1_b"], 2))
    for i in (2, 3, 4):
        sc, sh = _norm_affine(p[f"bn{i}_g"], p[f"bn{i}_b"],
                              p[f"bn{i}_rm"], p[f"bn{i}_rv"], 0.8)
        x = leaky(conv(x, p[f"c{i}_w"], p[f"c{i}_b"], 2))
        x = x * sc.reshape(1, -1, 1, 1) + sh.reshape(1, -1, 1, 1)
    s1, t1 = _norm_affine(p["in1_g"], p["in1_b"], p["in1_rm"], p["in1_rv"], 1e-5)
    s2, t2 = _norm_affine(p["in2_g"], p["in2_b"], p["in2_rm"], p["in2_rv"], 1e-5)
    h = jnp.maximum(conv(x, p["r1_w"], None, 1) * s1.reshape(1, -1, 1, 1)
                    + t1.reshape(1, -1, 1, 1), 0.0)
    r = conv(h, p["r2_w"], None, 1) * s2.reshape(1, -1, 1, 1) \
        + t2.reshape(1, -1, 1, 1)
    x = x + r
    flat = x.reshape(x.shape[0], -1)
    validity = jax.nn.sigmoid(flat @ p["adv_w"].T + p["adv_b"])
    label = jax.nn.softmax(flat @ p["aux_w"].T + p["aux_b"], axis=1)
    return validity, label


# ---------------------------------------------------------------------------
# Deterministic synthetic parameters
# ---------------------------------------------------------------------------
def init_params(key, n_classes=4, img_size=16, channels=3):
    ds = img_size // 16
    flatten_dim = 128 * ds * ds
    ks = iter(jax.random.split(key, 48))
    p = {}

    def conv_w(cout, cin):
        return jax.random.normal(next(ks), (cout, cin, 3, 3),
                                 jnp.float32) / float(np.sqrt(cin * 9))

    p["c1_w"] = conv_w(16, channels)
    p["c1_b"] = 0.01 * jax.random.normal(next(ks), (16,))
    for i, (cin, cout) in enumerate([(16, 32), (32, 64), (64, 128)], start=2):
        p[f"c{i}_w"] = conv_w(cout, cin)
        p[f"c{i}_b"] = 0.01 * jax.random.normal(next(ks), (cout,))
        p[f"bn{i}_g"] = 1.0 + 0.1 * jax.random.normal(next(ks), (cout,))
        p[f"bn{i}_b"] = 0.1 * jax.random.normal(next(ks), (cout,))
        p[f"bn{i}_rm"] = 0.1 * jax.random.normal(next(ks), (cout,))
        p[f"bn{i}_rv"] = 1.0 + 0.1 * jnp.abs(jax.random.normal(next(ks), (cout,)))
    for j in (1, 2):
        p[f"r{j}_w"] = conv_w(128, 128)
        p[f"in{j}_g"] = 1.0 + 0.1 * jax.random.normal(next(ks), (128,))
        p[f"in{j}_b"] = 0.1 * jax.random.normal(next(ks), (128,))
        p[f"in{j}_rm"] = 0.1 * jax.random.normal(next(ks), (128,))
        p[f"in{j}_rv"] = 1.0 + 0.1 * jnp.abs(jax.random.normal(next(ks), (128,)))
    p["adv_w"] = jax.random.normal(next(ks), (1, flatten_dim)) / float(np.sqrt(flatten_dim))
    p["adv_b"] = 0.01 * jax.random.normal(next(ks), (1,))
    p["aux_w"] = jax.random.normal(next(ks), (n_classes, flatten_dim)) / float(np.sqrt(flatten_dim))
    p["aux_b"] = 0.01 * jax.random.normal(next(ks), (n_classes,))
    return p


# ---------------------------------------------------------------------------
if __name__ == "__main__":
    key = jax.random.PRNGKey(0)
    k_img, k_par = jax.random.split(key)

    B, C, IMG, NCLS = 2, 3, 16, 4               # img_size=16 -> ds_size = 1
    img = jax.random.normal(k_img, (B, C, IMG, IMG), jnp.float32)
    params = init_params(k_par, n_classes=NCLS, img_size=IMG, channels=C)

    fwd = jax.jit(functools.partial(discriminator_forward, n_classes=NCLS))
    validity, label = fwd(img, params)
    jax.block_until_ready((validity, label))

    assert validity.shape == (B, 1) and label.shape == (B, NCLS)
    assert bool(jnp.all((validity >= 0.0) & (validity <= 1.0)))
    assert bool(jnp.all(jnp.abs(jnp.sum(label, axis=1) - 1.0) < 1e-3))

    ref_v, ref_l = _reference_forward(img, params)
    assert bool(jnp.all(jnp.abs(validity - ref_v) < 5e-2))
    assert bool(jnp.all(jnp.abs(label - ref_l) < 5e-2))
    print("KERNEL_OK")
</pallas_src>

<mosaic_0001>
module attributes {stable_mosaic.version = 11 : i64} {
  func.func @_disc_kernel(%arg0: i32, %arg1: memref<64x27xbf16, #tpu.memory_space<vmem>>, %arg2: memref<27x16xbf16, #tpu.memory_space<vmem>>, %arg3: memref<1x16xf32, #tpu.memory_space<vmem>>, %arg4: memref<9x16x64xbf16, #tpu.memory_space<vmem>>, %arg5: memref<9x16x32xbf16, #tpu.memory_space<vmem>>, %arg6: memref<1x32xf32, #tpu.memory_space<vmem>>, %arg7: memref<1x32xf32, #tpu.memory_space<vmem>>, %arg8: memref<1x32xf32, #tpu.memory_space<vmem>>, %arg9: memref<9x4x16xbf16, #tpu.memory_space<vmem>>, %arg10: memref<9x32x64xbf16, #tpu.memory_space<vmem>>, %arg11: memref<1x64xf32, #tpu.memory_space<vmem>>, %arg12: memref<1x64xf32, #tpu.memory_space<vmem>>, %arg13: memref<1x64xf32, #tpu.memory_space<vmem>>, %arg14: memref<4x1x4xbf16, #tpu.memory_space<vmem>>, %arg15: memref<4x64x128xbf16, #tpu.memory_space<vmem>>, %arg16: memref<1x128xf32, #tpu.memory_space<vmem>>, %arg17: memref<1x128xf32, #tpu.memory_space<vmem>>, %arg18: memref<1x128xf32, #tpu.memory_space<vmem>>, %arg19: memref<1x1x1xbf16, #tpu.memory_space<vmem>>, %arg20: memref<1x128x128xbf16, #tpu.memory_space<vmem>>, %arg21: memref<1x128xf32, #tpu.memory_space<vmem>>, %arg22: memref<1x1x1xbf16, #tpu.memory_space<vmem>>, %arg23: memref<1x128x128xbf16, #tpu.memory_space<vmem>>, %arg24: memref<1x128xf32, #tpu.memory_space<vmem>>, %arg25: memref<1x128x128xbf16, #tpu.memory_space<vmem>>, %arg26: memref<1x128xf32, #tpu.memory_space<vmem>>, %arg27: memref<8x128xf32, #tpu.memory_space<vmem>>) attributes {dimension_semantics = [#tpu.dimension_semantics<parallel>], iteration_bounds = array<i64: 2>, scalar_prefetch = 0 : i64, scratch_operands = 0 : i64, tpu.core_type = #tpu.core_type<tc>, window_params = [{transform_indices = @transform_0, window_bounds = array<i64: 64, 27>}, {pipeline_mode = #tpu.pipeline_mode<synchronous>, transform_indices = @transform_1, window_bounds = array<i64: 27, 16>}, {pipeline_mode = #tpu.pipeline_mode<synchronous>, transform_indices = @transform_2, window_bounds = array<i64: 1, 16>}, {pipeline_mode = #tpu.pipeline_mode<synchronous>, transform_indices = @transform_3, window_bounds = array<i64: 9, 16, 64>}, {pipeline_mode = #tpu.pipeline_mode<synchronous>, transform_indices = @transform_4, window_bounds = array<i64: 9, 16, 32>}, {pipeline_mode = #tpu.pipeline_mode<synchronous>, transform_indices = @transform_5, window_bounds = array<i64: 1, 32>}, {pipeline_mode = #tpu.pipeline_mode<synchronous>, transform_indices = @transform_6, window_bounds = array<i64: 1, 32>}, {pipeline_mode = #tpu.pipeline_mode<synchronous>, transform_indices = @transform_7, window_bounds = array<i64: 1, 32>}, {pipeline_mode = #tpu.pipeline_mode<synchronous>, transform_indices = @transform_8, window_bounds = array<i64: 9, 4, 16>}, {pipeline_mode = #tpu.pipeline_mode<synchronous>, transform_indices = @transform_9, window_bounds = array<i64: 9, 32, 64>}, {pipeline_mode = #tpu.pipeline_mode<synchronous>, transform_indices = @transform_10, window_bounds = array<i64: 1, 64>}, {pipeline_mode = #tpu.pipeline_mode<synchronous>, transform_indices = @transform_11, window_bounds = array<i64: 1, 64>}, {pipeline_mode = #tpu.pipeline_mode<synchronous>, transform_indices = @transform_12, window_bounds = array<i64: 1, 64>}, {pipeline_mode = #tpu.pipeline_mode<synchronous>, transform_indices = @transform_13, window_bounds = array<i64: 4, 1, 4>}, {pipeline_mode = #tpu.pipeline_mode<synchronous>, transform_indices = @transform_14, window_bounds = array<i64: 4, 64, 128>}, {pipeline_mode = #tpu.pipeline_mode<synchronous>, transform_indices = @transform_15, window_bounds = array<i64: 1, 128>}, {pipeline_mode = #tpu.pipeline_mode<synchronous>, transform_indices = @transform_16, window_bounds = array<i64: 1, 128>}, {pipeline_mode = #tpu.pipeline_mode<synchronous>, transform_indices = @transform_17, window_bounds = array<i64: 1, 128>}, {pipeline_mode = #tpu.pipeline_mode<synchronous>, transform_indices = @transform_18, window_bounds = array<i64: 1, 1, 1>}, {pipeline_mode = #tpu.pipeline_mode<synchronous>, transform_indices = @transform_19, window_bounds = array<i64: 1, 128, 128>}, {pipeline_mode = #tpu.pipeline_mode<synchronous>, transform_indices = @transform_20, window_bounds = array<i64: 1, 128>}, {pipeline_mode = #tpu.pipeline_mode<synchronous>, transform_indices = @transform_21, window_bounds = array<i64: 1, 1, 1>}, {pipeline_mode = #tpu.pipeline_mode<synchronous>, transform_indices = @transform_22, window_bounds = array<i64: 1, 128, 128>}, {pipeline_mode = #tpu.pipeline_mode<synchronous>, transform_indices = @transform_23, window_bounds = array<i64: 1, 128>}, {pipeline_mode = #tpu.pipeline_mode<synchronous>, transform_indices = @transform_24, window_bounds = array<i64: 1, 128, 128>}, {pipeline_mode = #tpu.pipeline_mode<synchronous>, transform_indices = @transform_25, window_bounds = array<i64: 1, 128>}, {transform_indices = @transform_26, window_bounds = array<i64: 8, 128>}]} {
    %c0 = arith.constant 0 : index
    %c0_0 = arith.constant 0 : index
    %0 = vector.load %arg1[%c0, %c0_0] : memref<64x27xbf16, #tpu.memory_space<vmem>>, vector<64x27xbf16>
    %c0_1 = arith.constant 0 : index
    %c0_2 = arith.constant 0 : index
    %1 = vector.load %arg2[%c0_1, %c0_2] : memref<27x16xbf16, #tpu.memory_space<vmem>>, vector<27x16xbf16>
    %cst = arith.constant dense<0.000000e+00> : vector<64x16xf32>
    %2 = tpu.matmul %0, %1, %cst {dimension_numbers = #tpu.dot_dimension_numbers<[1], [0], [0], [1], [0, 0, 1, 1], [], []>} : vector<64x27xbf16>, vector<27x16xbf16>, vector<64x16xf32> -> vector<64x16xf32>
    %c0_3 = arith.constant 0 : index
    %c0_4 = arith.constant 0 : index
    %3 = vector.load %arg3[%c0_3, %c0_4] : memref<1x16xf32, #tpu.memory_space<vmem>>, vector<1x16xf32>
    %4 = vector.broadcast %3 : vector<1x16xf32> to vector<64x16xf32>
    %5 = arith.addf %2, %4 : vector<64x16xf32>
    %cst_5 = arith.constant 0.000000e+00 : f32
    %6 = vector.broadcast %cst_5 : f32 to vector<64x16xf32>
    %7 = arith.cmpf ogt, %5, %6 : vector<64x16xf32>
    %cst_6 = arith.constant 2.000000e-01 : f32
    %8 = vector.broadcast %cst_6 : f32 to vector<64x16xf32>
    %9 = arith.mulf %8, %5 : vector<64x16xf32>
    %10 = arith.select %7, %5, %9 : vector<64x16xi1>, vector<64x16xf32>
    %11 = arith.truncf %10 : vector<64x16xf32> to vector<64x16xbf16>
    %c0_7 = arith.constant 0 : index
    %c0_8 = arith.constant 0 : index
    %c0_9 = arith.constant 0 : index
    %12 = vector.load %arg4[%c0_7, %c0_8, %c0_9] : memref<9x16x64xbf16, #tpu.memory_space<vmem>>, vector<1x16x64xbf16>
    %13 = vector.shape_cast %12 : vector<1x16x64xbf16> to vector<16x64xbf16>
    %cst_10 = arith.constant dense<0.000000e+00> : vector<16x16xf32>
    %14 = tpu.matmul %13, %11, %cst_10 {dimension_numbers = #tpu.dot_dimension_numbers<[1], [0], [0], [1], [0, 0, 1, 1], [], []>} : vector<16x64xbf16>, vector<64x16xbf16>, vector<16x16xf32> -> vector<16x16xf32>
    %15 = arith.truncf %14 : vector<16x16xf32> to vector<16x16xbf16>
    %c0_11 = arith.constant 0 : index
    %c0_12 = arith.constant 0 : index
    %c0_13 = arith.constant 0 : index
    %16 = vector.load %arg5[%c0_11, %c0_12, %c0_13] : memref<9x16x32xbf16, #tpu.memory_space<vmem>>, vector<1x16x32xbf16>
    %17 = vector.shape_cast %16 : vector<1x16x32xbf16> to vector<16x32xbf16>
    %cst_14 = arith.constant dense<0.000000e+00> : vector<16x32xf32>
    %18 = tpu.matmul %15, %17, %cst_14 {dimension_numbers = #tpu.dot_dimension_numbers<[1], [0], [0], [1], [0, 0, 1, 1], [], []>} : vector<16x16xbf16>, vector<16x32xbf16>, vector<16x32xf32> -> vector<16x32xf32>
    %c1 = arith.constant 1 : index
    %c0_15 = arith.constant 0 : index
    %c0_16 = arith.constant 0 : index
    %19 = vector.load %arg4[%c1, %c0_15, %c0_16] : memref<9x16x64xbf16, #tpu.memory_space<vmem>>, vector<1x16x64xbf16>
    %20 = vector.shape_cast %19 : vector<1x16x64xbf16> to vector<16x64xbf16>
    %cst_17 = arith.constant dense<0.000000e+00> : vector<16x16xf32>
    %21 = tpu.matmul %20, %11, %cst_17 {dimension_numbers = #tpu.dot_dimension_numbers<[1], [0], [0], [1], [0, 0, 1, 1], [], []>} : vector<16x64xbf16>, vector<64x16xbf16>, vector<16x16xf32> -> vector<16x16xf32>
    %22 = arith.truncf %21 : vector<16x16xf32> to vector<16x16xbf16>
    %c1_18 = arith.constant 1 : index
    %c0_19 = arith.constant 0 : index
    %c0_20 = arith.constant 0 : index
    %23 = vector.load %arg5[%c1_18, %c0_19, %c0_20] : memref<9x16x32xbf16, #tpu.memory_space<vmem>>, vector<1x16x32xbf16>
    %24 = vector.shape_cast %23 : vector<1x16x32xbf16> to vector<16x32xbf16>
    %cst_21 = arith.constant dense<0.000000e+00> : vector<16x32xf32>
    %25 = tpu.matmul %22, %24, %cst_21 {dimension_numbers = #tpu.dot_dimension_numbers<[1], [0], [0], [1], [0, 0, 1, 1], [], []>} : vector<16x16xbf16>, vector<16x32xbf16>, vector<16x32xf32> -> vector<16x32xf32>
    %26 = arith.addf %18, %25 : vector<16x32xf32>
    %c2 = arith.constant 2 : index
    %c0_22 = arith.constant 0 : index
    %c0_23 = arith.constant 0 : index
    %27 = vector.load %arg4[%c2, %c0_22, %c0_23] : memref<9x16x64xbf16, #tpu.memory_space<vmem>>, vector<1x16x64xbf16>
    %28 = vector.shape_cast %27 : vector<1x16x64xbf16> to vector<16x64xbf16>
    %cst_24 = arith.constant dense<0.000000e+00> : vector<16x16xf32>
    %29 = tpu.matmul %28, %11, %cst_24 {dimension_numbers = #tpu.dot_dimension_numbers<[1], [0], [0], [1], [0, 0, 1, 1], [], []>} : vector<16x64xbf16>, vector<64x16xbf16>, vector<16x16xf32> -> vector<16x16xf32>
    %30 = arith.truncf %29 : vector<16x16xf32> to vector<16x16xbf16>
    %c2_25 = arith.constant 2 : index
    %c0_26 = arith.constant 0 : index
    %c0_27 = arith.constant 0 : index
    %31 = vector.load %arg5[%c2_25, %c0_26, %c0_27] : memref<9x16x32xbf16, #tpu.memory_space<vmem>>, vector<1x16x32xbf16>
    %32 = vector.shape_cast %31 : vector<1x16x32xbf16> to vector<16x32xbf16>
    %cst_28 = arith.constant dense<0.000000e+00> : vector<16x32xf32>
    %33 = tpu.matmul %30, %32, %cst_28 {dimension_numbers = #tpu.dot_dimension_numbers<[1], [0], [0], [1], [0, 0, 1, 1], [], []>} : vector<16x16xbf16>, vector<16x32xbf16>, vector<16x32xf32> -> vector<16x32xf32>
    %34 = arith.addf %26, %33 : vector<16x32xf32>
    %c3 = arith.constant 3 : index
    %c0_29 = arith.constant 0 : index
    %c0_30 = arith.constant 0 : index
    %35 = vector.load %arg4[%c3, %c0_29, %c0_30] : memref<9x16x64xbf16, #tpu.memory_space<vmem>>, vector<1x16x64xbf16>
    %36 = vector.shape_cast %35 : vector<1x16x64xbf16> to vector<16x64xbf16>
    %cst_31 = arith.constant dense<0.000000e+00> : vector<16x16xf32>
    %37 = tpu.matmul %36, %11, %cst_31 {dimension_numbers = #tpu.dot_dimension_numbers<[1], [0], [0], [1], [0, 0, 1, 1], [], []>} : vector<16x64xbf16>, vector<64x16xbf16>, vector<16x16xf32> -> vector<16x16xf32>
    %38 = arith.truncf %37 : vector<16x16xf32> to vector<16x16xbf16>
    %c3_32 = arith.constant 3 : index
    %c0_33 = arith.constant 0 : index
    %c0_34 = arith.constant 0 : index
    %39 = vector.load %arg5[%c3_32, %c0_33, %c0_34] : memref<9x16x32xbf16, #tpu.memory_space<vmem>>, vector<1x16x32xbf16>
    %40 = vector.shape_cast %39 : vector<1x16x32xbf16> to vector<16x32xbf16>
    %cst_35 = arith.constant dense<0.000000e+00> : vector<16x32xf32>
    %41 = tpu.matmul %38, %40, %cst_35 {dimension_numbers = #tpu.dot_dimension_numbers<[1], [0], [0], [1], [0, 0, 1, 1], [], []>} : vector<16x16xbf16>, vector<16x32xbf16>, vector<16x32xf32> -> vector<16x32xf32>
    %42 = arith.addf %34, %41 : vector<16x32xf32>
    %c4 = arith.constant 4 : index
    %c0_36 = arith.constant 0 : index
    %c0_37 = arith.constant 0 : index
    %43 = vector.load %arg4[%c4, %c0_36, %c0_37] : memref<9x16x64xbf16, #tpu.memory_space<vmem>>, vector<1x16x64xbf16>
    %44 = vector.shape_cast %43 : vector<1x16x64xbf16> to vector<16x64xbf16>
    %cst_38 = arith.constant dense<0.000000e+00> : vector<16x16xf32>
    %45 = tpu.matmul %44, %11, %cst_38 {dimension_numbers = #tpu.dot_dimension_numbers<[1], [0], [0], [1], [0, 0, 1, 1], [], []>} : vector<16x64xbf16>, vector<64x16xbf16>, vector<16x16xf32> -> vector<16x16xf32>
    %46 = arith.truncf %45 : vector<16x16xf32> to vector<16x16xbf16>
    %c4_39 = arith.constant 4 : index
    %c0_40 = arith.constant 0 : index
    %c0_41 = arith.constant 0 : index
    %47 = vector.load %arg5[%c4_39, %c0_40, %c0_41] : memref<9x16x32xbf16, #tpu.memory_space<vmem>>, vector<1x16x32xbf16>
    %48 = vector.shape_cast %47 : vector<1x16x32xbf16> to vector<16x32xbf16>
    %cst_42 = arith.constant dense<0.000000e+00> : vector<16x32xf32>
    %49 = tpu.matmul %46, %48, %cst_42 {dimension_numbers = #tpu.dot_dimension_numbers<[1], [0], [0], [1], [0, 0, 1, 1], [], []>} : vector<16x16xbf16>, vector<16x32xbf16>, vector<16x32xf32> -> vector<16x32xf32>
    %50 = arith.addf %42, %49 : vector<16x32xf32>
    %c5 = arith.constant 5 : index
    %c0_43 = arith.constant 0 : index
    %c0_44 = arith.constant 0 : index
    %51 = vector.load %arg4[%c5, %c0_43, %c0_44] : memref<9x16x64xbf16, #tpu.memory_space<vmem>>, vector<1x16x64xbf16>
    %52 = vector.shape_cast %51 : vector<1x16x64xbf16> to vector<16x64xbf16>
    %cst_45 = arith.constant dense<0.000000e+00> : vector<16x16xf32>
    %53 = tpu.matmul %52, %11, %cst_45 {dimension_numbers = #tpu.dot_dimension_numbers<[1], [0], [0], [1], [0, 0, 1, 1], [], []>} : vector<16x64xbf16>, vector<64x16xbf16>, vector<16x16xf32> -> vector<16x16xf32>
    %54 = arith.truncf %53 : vector<16x16xf32> to vector<16x16xbf16>
    %c5_46 = arith.constant 5 : index
    %c0_47 = arith.constant 0 : index
    %c0_48 = arith.constant 0 : index
    %55 = vector.load %arg5[%c5_46, %c0_47, %c0_48] : memref<9x16x32xbf16, #tpu.memory_space<vmem>>, vector<1x16x32xbf16>
    %56 = vector.shape_cast %55 : vector<1x16x32xbf16> to vector<16x32xbf16>
    %cst_49 = arith.constant dense<0.000000e+00> : vector<16x32xf32>
    %57 = tpu.matmul %54, %56, %cst_49 {dimension_numbers = #tpu.dot_dimension_numbers<[1], [0], [0], [1], [0, 0, 1, 1], [], []>} : vector<16x16xbf16>, vector<16x32xbf16>, vector<16x32xf32> -> vector<16x32xf32>
    %58 = arith.addf %50, %57 : vector<16x32xf32>
    %c6 = arith.constant 6 : index
    %c0_50 = arith.constant 0 : index
    %c0_51 = arith.constant 0 : index
    %59 = vector.load %arg4[%c6, %c0_50, %c0_51] : memref<9x16x64xbf16, #tpu.memory_space<vmem>>, vector<1x16x64xbf16>
    %60 = vector.shape_cast %59 : vector<1x16x64xbf16> to vector<16x64xbf16>
    %cst_52 = arith.constant dense<0.000000e+00> : vector<16x16xf32>
    %61 = tpu.matmul %60, %11, %cst_52 {dimension_numbers = #tpu.dot_dimension_numbers<[1], [0], [0], [1], [0, 0, 1, 1], [], []>} : vector<16x64xbf16>, vector<64x16xbf16>, vector<16x16xf32> -> vector<16x16xf32>
    %62 = arith.truncf %61 : vector<16x16xf32> to vector<16x16xbf16>
    %c6_53 = arith.constant 6 : index
    %c0_54 = arith.constant 0 : index
    %c0_55 = arith.constant 0 : index
    %63 = vector.load %arg5[%c6_53, %c0_54, %c0_55] : memref<9x16x32xbf16, #tpu.memory_space<vmem>>, vector<1x16x32xbf16>
    %64 = vector.shape_cast %63 : vector<1x16x32xbf16> to vector<16x32xbf16>
    %cst_56 = arith.constant dense<0.000000e+00> : vector<16x32xf32>
    %65 = tpu.matmul %62, %64, %cst_56 {dimension_numbers = #tpu.dot_dimension_numbers<[1], [0], [0], [1], [0, 0, 1, 1], [], []>} : vector<16x16xbf16>, vector<16x32xbf16>, vector<16x32xf32> -> vector<16x32xf32>
    %66 = arith.addf %58, %65 : vector<16x32xf32>
    %c7 = arith.constant 7 : index
    %c0_57 = arith.constant 0 : index
    %c0_58 = arith.constant 0 : index
    %67 = vector.load %arg4[%c7, %c0_57, %c0_58] : memref<9x16x64xbf16, #tpu.memory_space<vmem>>, vector<1x16x64xbf16>
    %68 = vector.shape_cast %67 : vector<1x16x64xbf16> to vector<16x64xbf16>
    %cst_59 = arith.constant dense<0.000000e+00> : vector<16x16xf32>
    %69 = tpu.matmul %68, %11, %cst_59 {dimension_numbers = #tpu.dot_dimension_numbers<[1], [0], [0], [1], [0, 0, 1, 1], [], []>} : vector<16x64xbf16>, vector<64x16xbf16>, vector<16x16xf32> -> vector<16x16xf32>
    %70 = arith.truncf %69 : vector<16x16xf32> to vector<16x16xbf16>
    %c7_60 = arith.constant 7 : index
    %c0_61 = arith.constant 0 : index
    %c0_62 = arith.constant 0 : index
    %71 = vector.load %arg5[%c7_60, %c0_61, %c0_62] : memref<9x16x32xbf16, #tpu.memory_space<vmem>>, vector<1x16x32xbf16>
    %72 = vector.shape_cast %71 : vector<1x16x32xbf16> to vector<16x32xbf16>
    %cst_63 = arith.constant dense<0.000000e+00> : vector<16x32xf32>
    %73 = tpu.matmul %70, %72, %cst_63 {dimension_numbers = #tpu.dot_dimension_numbers<[1], [0], [0], [1], [0, 0, 1, 1], [], []>} : vector<16x16xbf16>, vector<16x32xbf16>, vector<16x32xf32> -> vector<16x32xf32>
    %74 = arith.addf %66, %73 : vector<16x32xf32>
    %c8 = arith.constant 8 : index
    %c0_64 = arith.constant 0 : index
    %c0_65 = arith.constant 0 : index
    %75 = vector.load %arg4[%c8, %c0_64, %c0_65] : memref<9x16x64xbf16, #tpu.memory_space<vmem>>, vector<1x16x64xbf16>
    %76 = vector.shape_cast %75 : vector<1x16x64xbf16> to vector<16x64xbf16>
    %cst_66 = arith.constant dense<0.000000e+00> : vector<16x16xf32>
    %77 = tpu.matmul %76, %11, %cst_66 {dimension_numbers = #tpu.dot_dimension_numbers<[1], [0], [0], [1], [0, 0, 1, 1], [], []>} : vector<16x64xbf16>, vector<64x16xbf16>, vector<16x16xf32> -> vector<16x16xf32>
    %78 = arith.truncf %77 : vector<16x16xf32> to vector<16x16xbf16>
    %c8_67 = arith.constant 8 : index
    %c0_68 = arith.constant 0 : index
    %c0_69 = arith.constant 0 : index
    %79 = vector.load %arg5[%c8_67, %c0_68, %c0_69] : memref<9x16x32xbf16, #tpu.memory_space<vmem>>, vector<1x16x32xbf16>
    %80 = vector.shape_cast %79 : vector<1x16x32xbf16> to vector<16x32xbf16>
    %cst_70 = arith.constant dense<0.000000e+00> : vector<16x32xf32>
    %81 = tpu.matmul %78, %80, %cst_70 {dimension_numbers = #tpu.dot_dimension_numbers<[1], [0], [0], [1], [0, 0, 1, 1], [], []>} : vector<16x16xbf16>, vector<16x32xbf16>, vector<16x32xf32> -> vector<16x32xf32>
    %82 = arith.addf %74, %81 : vector<16x32xf32>
    %c0_71 = arith.constant 0 : index
    %c0_72 = arith.constant 0 : index
    %83 = vector.load %arg6[%c0_71, %c0_72] : memref<1x32xf32, #tpu.memory_space<vmem>>, vector<1x32xf32>
    %84 = vector.broadcast %83 : vector<1x32xf32> to vector<16x32xf32>
    %85 = arith.addf %82, %84 : vector<16x32xf32>
    %cst_73 = arith.constant 0.000000e+00 : f32
    %86 = vector.broadcast %cst_73 : f32 to vector<16x32xf32>
    %87 = arith.cmpf ogt, %85, %86 : vector<16x32xf32>
    %cst_74 = arith.constant 2.000000e-01 : f32
    %88 = vector.broadcast %cst_74 : f32 to vector<16x32xf32>
    %89 = arith.mulf %88, %85 : vector<16x32xf32>
    %90 = arith.select %87, %85, %89 : vector<16x32xi1>, vector<16x32xf32>
    %c0_75 = arith.constant 0 : index
    %c0_76 = arith.constant 0 : index
    %91 = vector.load %arg7[%c0_75, %c0_76] : memref<1x32xf32, #tpu.memory_space<vmem>>, vector<1x32xf32>
    %92 = vector.broadcast %91 : vector<1x32xf32> to vector<16x32xf32>
    %93 = arith.mulf %90, %92 : vector<16x32xf32>
    %c0_77 = arith.constant 0 : index
    %c0_78 = arith.constant 0 : index
    %94 = vector.load %arg8[%c0_77, %c0_78] : memref<1x32xf32, #tpu.memory_space<vmem>>, vector<1x32xf32>
    %95 = vector.broadcast %94 : vector<1x32xf32> to vector<16x32xf32>
    %96 = arith.addf %93, %95 : vector<16x32xf32>
    %97 = arith.truncf %96 : vector<16x32xf32> to vector<16x32xbf16>
    %c0_79 = arith.constant 0 : index
    %c0_80 = arith.constant 0 : index
    %c0_81 = arith.constant 0 : index
    %98 = vector.load %arg9[%c0_79, %c0_80, %c0_81] : memref<9x4x16xbf16, #tpu.memory_space<vmem>>, vector<1x4x16xbf16>
    %99 = vector.shape_cast %98 : vector<1x4x16xbf16> to vector<4x16xbf16>
    %cst_82 = arith.constant dense<0.000000e+00> : vector<4x32xf32>
    %100 = tpu.matmul %99, %97, %cst_82 {dimension_numbers = #tpu.dot_dimension_numbers<[1], [0], [0], [1], [0, 0, 1, 1], [], []>} : vector<4x16xbf16>, vector<16x32xbf16>, vector<4x32xf32> -> vector<4x32xf32>
    %101 = arith.truncf %100 : vector<4x32xf32> to vector<4x32xbf16>
    %c0_83 = arith.constant 0 : index
    %c0_84 = arith.constant 0 : index
    %c0_85 = arith.constant 0 : index
    %102 = vector.load %arg10[%c0_83, %c0_84, %c0_85] : memref<9x32x64xbf16, #tpu.memory_space<vmem>>, vector<1x32x64xbf16>
    %103 = vector.shape_cast %102 : vector<1x32x64xbf16> to vector<32x64xbf16>
    %cst_86 = arith.constant dense<0.000000e+00> : vector<4x64xf32>
    %104 = tpu.matmul %101, %103, %cst_86 {dimension_numbers = #tpu.dot_dimension_numbers<[1], [0], [0], [1], [0, 0, 1, 1], [], []>} : vector<4x32xbf16>, vector<32x64xbf16>, vector<4x64xf32> -> vector<4x64xf32>
    %c1_87 = arith.constant 1 : index
    %c0_88 = arith.constant 0 : index
    %c0_89 = arith.constant 0 : index
    %105 = vector.load %arg9[%c1_87, %c0_88, %c0_89] : memref<9x4x16xbf16, #tpu.memory_space<vmem>>, vector<1x4x16xbf16>
    %106 = vector.shape_cast %105 : vector<1x4x16xbf16> to vector<4x16xbf16>
    %cst_90 = arith.constant dense<0.000000e+00> : vector<4x32xf32>
    %107 = tpu.matmul %106, %97, %cst_90 {dimension_numbers = #tpu.dot_dimension_numbers<[1], [0], [0], [1], [0, 0, 1, 1], [], []>} : vector<4x16xbf16>, vector<16x32xbf16>, vector<4x32xf32> -> vector<4x32xf32>
    %108 = arith.truncf %107 : vector<4x32xf32> to vector<4x32xbf16>
    %c1_91 = arith.constant 1 : index
    %c0_92 = arith.constant 0 : index
    %c0_93 = arith.constant 0 : index
    %109 = vector.load %arg10[%c1_91, %c0_92, %c0_93] : memref<9x32x64xbf16, #tpu.memory_space<vmem>>, vector<1x32x64xbf16>
    %110 = vector.shape_cast %109 : vector<1x32x64xbf16> to vector<32x64xbf16>
    %cst_94 = arith.constant dense<0.000000e+00> : vector<4x64xf32>
    %111 = tpu.matmul %108, %110, %cst_94 {dimension_numbers = #tpu.dot_dimension_numbers<[1], [0], [0], [1], [0, 0, 1, 1], [], []>} : vector<4x32xbf16>, vector<32x64xbf16>, vector<4x64xf32> -> vector<4x64xf32>
    %112 = arith.addf %104, %111 : vector<4x64xf32>
    %c2_95 = arith.constant 2 : index
    %c0_96 = arith.constant 0 : index
    %c0_97 = arith.constant 0 : index
    %113 = vector.load %arg9[%c2_95, %c0_96, %c0_97] : memref<9x4x16xbf16, #tpu.memory_space<vmem>>, vector<1x4x16xbf16>
    %114 = vector.shape_cast %113 : vector<1x4x16xbf16> to vector<4x16xbf16>
    %cst_98 = arith.constant dense<0.000000e+00> : vector<4x32xf32>
    %115 = tpu.matmul %114, %97, %cst_98 {dimension_numbers = #tpu.dot_dimension_numbers<[1], [0], [0], [1], [0, 0, 1, 1], [], []>} : vector<4x16xbf16>, vector<16x32xbf16>, vector<4x32xf32> -> vector<4x32xf32>
    %116 = arith.truncf %115 : vector<4x32xf32> to vector<4x32xbf16>
    %c2_99 = arith.constant 2 : index
    %c0_100 = arith.constant 0 : index
    %c0_101 = arith.constant 0 : index
    %117 = vector.load %arg10[%c2_99, %c0_100, %c0_101] : memref<9x32x64xbf16, #tpu.memory_space<vmem>>, vector<1x32x64xbf16>
    %118 = vector.shape_cast %117 : vector<1x32x64xbf16> to vector<32x64xbf16>
    %cst_102 = arith.constant dense<0.000000e+00> : vector<4x64xf32>
    %119 = tpu.matmul %116, %118, %cst_102 {dimension_numbers = #tpu.dot_dimension_numbers<[1], [0], [0], [1], [0, 0, 1, 1], [], []>} : vector<4x32xbf16>, vector<32x64xbf16>, vector<4x64xf32> -> vector<4x64xf32>
    %120 = arith.addf %112, %119 : vector<4x64xf32>
    %c3_103 = arith.constant 3 : index
    %c0_104 = arith.constant 0 : index
    %c0_105 = arith.constant 0 : index
    %121 = vector.load %arg9[%c3_103, %c0_104, %c0_105] : memref<9x4x16xbf16, #tpu.memory_space<vmem>>, vector<1x4x16xbf16>
    %122 = vector.shape_cast %121 : vector<1x4x16xbf16> to vector<4x16xbf16>
    %cst_106 = arith.constant dense<0.000000e+00> : vector<4x32xf32>
    %123 = tpu.matmul %122, %97, %cst_106 {dimension_numbers = #tpu.dot_dimension_numbers<[1], [0], [0], [1], [0, 0, 1, 1], [], []>} : vector<4x16xbf16>, vector<16x32xbf16>, vector<4x32xf32> -> vector<4x32xf32>
    %124 = arith.truncf %123 : vector<4x32xf32> to vector<4x32xbf16>
    %c3_107 = arith.constant 3 : index
    %c0_108 = arith.constant 0 : index
    %c0_109 = arith.constant 0 : index
    %125 = vector.load %arg10[%c3_107, %c0_108, %c0_109] : memref<9x32x64xbf16, #tpu.memory_space<vmem>>, vector<1x32x64xbf16>
    %126 = vector.shape_cast %125 : vector<1x32x64xbf16> to vector<32x64xbf16>
    %cst_110 = arith.constant dense<0.000000e+00> : vector<4x64xf32>
    %127 = tpu.matmul %124, %126, %cst_110 {dimension_numbers = #tpu.dot_dimension_numbers<[1], [0], [0], [1], [0, 0, 1, 1], [], []>} : vector<4x32xbf16>, vector<32x64xbf16>, vector<4x64xf32> -> vector<4x64xf32>
    %128 = arith.addf %120, %127 : vector<4x64xf32>
    %c4_111 = arith.constant 4 : index
    %c0_112 = arith.constant 0 : index
    %c0_113 = arith.constant 0 : index
    %129 = vector.load %arg9[%c4_111, %c0_112, %c0_113] : memref<9x4x16xbf16, #tpu.memory_space<vmem>>, vector<1x4x16xbf16>
    %130 = vector.shape_cast %129 : vector<1x4x16xbf16> to vector<4x16xbf16>
    %cst_114 = arith.constant dense<0.000000e+00> : vector<4x32xf32>
    %131 = tpu.matmul %130, %97, %cst_114 {dimension_numbers = #tpu.dot_dimension_numbers<[1], [0], [0], [1], [0, 0, 1, 1], [], []>} : vector<4x16xbf16>, vector<16x32xbf16>, vector<4x32xf32> -> vector<4x32xf32>
    %132 = arith.truncf %131 : vector<4x32xf32> to vector<4x32xbf16>
    %c4_115 = arith.constant 4 : index
    %c0_116 = arith.constant 0 : index
    %c0_117 = arith.constant 0 : index
    %133 = vector.load %arg10[%c4_115, %c0_116, %c0_117] : memref<9x32x64xbf16, #tpu.memory_space<vmem>>, vector<1x32x64xbf16>
    %134 = vector.shape_cast %133 : vector<1x32x64xbf16> to vector<32x64xbf16>
    %cst_118 = arith.constant dense<0.000000e+00> : vector<4x64xf32>
    %135 = tpu.matmul %132, %134, %cst_118 {dimension_numbers = #tpu.dot_dimension_numbers<[1], [0], [0], [1], [0, 0, 1, 1], [], []>} : vector<4x32xbf16>, vector<32x64xbf16>, vector<4x64xf32> -> vector<4x64xf32>
    %136 = arith.addf %128, %135 : vector<4x64xf32>
    %c5_119 = arith.constant 5 : index
    %c0_120 = arith.constant 0 : index
    %c0_121 = arith.constant 0 : index
    %137 = vector.load %arg9[%c5_119, %c0_120, %c0_121] : memref<9x4x16xbf16, #tpu.memory_space<vmem>>, vector<1x4x16xbf16>
    %138 = vector.shape_cast %137 : vector<1x4x16xbf16> to vector<4x16xbf16>
    %cst_122 = arith.constant dense<0.000000e+00> : vector<4x32xf32>
    %139 = tpu.matmul %138, %97, %cst_122 {dimension_numbers = #tpu.dot_dimension_numbers<[1], [0], [0], [1], [0, 0, 1, 1], [], []>} : vector<4x16xbf16>, vector<16x32xbf16>, vector<4x32xf32> -> vector<4x32xf32>
    %140 = arith.truncf %139 : vector<4x32xf32> to vector<4x32xbf16>
    %c5_123 = arith.constant 5 : index
    %c0_124 = arith.constant 0 : index
    %c0_125 = arith.constant 0 : index
    %141 = vector.load %arg10[%c5_123, %c0_124, %c0_125] : memref<9x32x64xbf16, #tpu.memory_space<vmem>>, vector<1x32x64xbf16>
    %142 = vector.shape_cast %141 : vector<1x32x64xbf16> to vector<32x64xbf16>
    %cst_126 = arith.constant dense<0.000000e+00> : vector<4x64xf32>
    %143 = tpu.matmul %140, %142, %cst_126 {dimension_numbers = #tpu.dot_dimension_numbers<[1], [0], [0], [1], [0, 0, 1, 1], [], []>} : vector<4x32xbf16>, vector<32x64xbf16>, vector<4x64xf32> -> vector<4x64xf32>
    %144 = arith.addf %136, %143 : vector<4x64xf32>
    %c6_127 = arith.constant 6 : index
    %c0_128 = arith.constant 0 : index
    %c0_129 = arith.constant 0 : index
    %145 = vector.load %arg9[%c6_127, %c0_128, %c0_129] : memref<9x4x16xbf16, #tpu.memory_space<vmem>>, vector<1x4x16xbf16>
    %146 = vector.shape_cast %145 : vector<1x4x16xbf16> to vector<4x16xbf16>
    %cst_130 = arith.constant dense<0.000000e+00> : vector<4x32xf32>
    %147 = tpu.matmul %146, %97, %cst_130 {dimension_numbers = #tpu.dot_dimension_numbers<[1], [0], [0], [1], [0, 0, 1, 1], [], []>} : vector<4x16xbf16>, vector<16x32xbf16>, vector<4x32xf32> -> vector<4x32xf32>
    %148 = arith.truncf %147 : vector<4x32xf32> to vector<4x32xbf16>
    %c6_131 = arith.constant 6 : index
    %c0_132 = arith.constant 0 : index
    %c0_133 = arith.constant 0 : index
    %149 = vector.load %arg10[%c6_131, %c0_132, %c0_133] : memref<9x32x64xbf16, #tpu.memory_space<vmem>>, vector<1x32x64xbf16>
    %150 = vector.shape_cast %149 : vector<1x32x64xbf16> to vector<32x64xbf16>
    %cst_134 = arith.constant dense<0.000000e+00> : vector<4x64xf32>
    %151 = tpu.matmul %148, %150, %cst_134 {dimension_numbers = #tpu.dot_dimension_numbers<[1], [0], [0], [1], [0, 0, 1, 1], [], []>} : vector<4x32xbf16>, vector<32x64xbf16>, vector<4x64xf32> -> vector<4x64xf32>
    %152 = arith.addf %144, %151 : vector<4x64xf32>
    %c7_135 = arith.constant 7 : index
    %c0_136 = arith.constant 0 : index
    %c0_137 = arith.constant 0 : index
    %153 = vector.load %arg9[%c7_135, %c0_136, %c0_137] : memref<9x4x16xbf16, #tpu.memory_space<vmem>>, vector<1x4x16xbf16>
    %154 = vector.shape_cast %153 : vector<1x4x16xbf16> to vector<4x16xbf16>
    %cst_138 = arith.constant dense<0.000000e+00> : vector<4x32xf32>
    %155 = tpu.matmul %154, %97, %cst_138 {dimension_numbers = #tpu.dot_dimension_numbers<[1], [0], [0], [1], [0, 0, 1, 1], [], []>} : vector<4x16xbf16>, vector<16x32xbf16>, vector<4x32xf32> -> vector<4x32xf32>
    %156 = arith.truncf %155 : vector<4x32xf32> to vector<4x32xbf16>
    %c7_139 = arith.constant 7 : index
    %c0_140 = arith.constant 0 : index
    %c0_141 = arith.constant 0 : index
    %157 = vector.load %arg10[%c7_139, %c0_140, %c0_141] : memref<9x32x64xbf16, #tpu.memory_space<vmem>>, vector<1x32x64xbf16>
    %158 = vector.shape_cast %157 : vector<1x32x64xbf16> to vector<32x64xbf16>
    %cst_142 = arith.constant dense<0.000000e+00> : vector<4x64xf32>
    %159 = tpu.matmul %156, %158, %cst_142 {dimension_numbers = #tpu.dot_dimension_numbers<[1], [0], [0], [1], [0, 0, 1, 1], [], []>} : vector<4x32xbf16>, vector<32x64xbf16>, vector<4x64xf32> -> vector<4x64xf32>
    %160 = arith.addf %152, %159 : vector<4x64xf32>
    %c8_143 = arith.constant 8 : index
    %c0_144 = arith.constant 0 : index
    %c0_145 = arith.constant 0 : index
    %161 = vector.load %arg9[%c8_143, %c0_144, %c0_145] : memref<9x4x16xbf16, #tpu.memory_space<vmem>>, vector<1x4x16xbf16>
    %162 = vector.shape_cast %161 : vector<1x4x16xbf16> to vector<4x16xbf16>
    %cst_146 = arith.constant dense<0.000000e+00> : vector<4x32xf32>
    %163 = tpu.matmul %162, %97, %cst_146 {dimension_numbers = #tpu.dot_dimension_numbers<[1], [0], [0], [1], [0, 0, 1, 1], [], []>} : vector<4x16xbf16>, vector<16x32xbf16>, vector<4x32xf32> -> vector<4x32xf32>
    %164 = arith.truncf %163 : vector<4x32xf32> to vector<4x32xbf16>
    %c8_147 = arith.constant 8 : index
    %c0_148 = arith.constant 0 : index
    %c0_149 = arith.constant 0 : index
    %165 = vector.load %arg10[%c8_147, %c0_148, %c0_149] : memref<9x32x64xbf16, #tpu.memory_space<vmem>>, vector<1x32x64xbf16>
    %166 = vector.shape_cast %165 : vector<1x32x64xbf16> to vector<32x64xbf16>
    %cst_150 = arith.constant dense<0.000000e+00> : vector<4x64xf32>
    %167 = tpu.matmul %164, %166, %cst_150 {dimension_numbers = #tpu.dot_dimension_numbers<[1], [0], [0], [1], [0, 0, 1, 1], [], []>} : vector<4x32xbf16>, vector<32x64xbf16>, vector<4x64xf32> -> vector<4x64xf32>
    %168 = arith.addf %160, %167 : vector<4x64xf32>
    %c0_151 = arith.constant 0 : index
    %c0_152 = arith.constant 0 : index
    %169 = vector.load %arg11[%c0_151, %c0_152] : memref<1x64xf32, #tpu.memory_space<vmem>>, vector<1x64xf32>
    %170 = vector.broadcast %169 : vector<1x64xf32> to vector<4x64xf32>
    %171 = arith.addf %168, %170 : vector<4x64xf32>
    %cst_153 = arith.constant 0.000000e+00 : f32
    %172 = vector.broadcast %cst_153 : f32 to vector<4x64xf32>
    %173 = arith.cmpf ogt, %171, %172 : vector<4x64xf32>
    %cst_154 = arith.constant 2.000000e-01 : f32
    %174 = vector.broadcast %cst_154 : f32 to vector<4x64xf32>
    %175 = arith.mulf %174, %171 : vector<4x64xf32>
    %176 = arith.select %173, %171, %175 : vector<4x64xi1>, vector<4x64xf32>
    %c0_155 = arith.constant 0 : index
    %c0_156 = arith.constant 0 : index
    %177 = vector.load %arg12[%c0_155, %c0_156] : memref<1x64xf32, #tpu.memory_space<vmem>>, vector<1x64xf32>
    %178 = vector.broadcast %177 : vector<1x64xf32> to vector<4x64xf32>
    %179 = arith.mulf %176, %178 : vector<4x64xf32>
    %c0_157 = arith.constant 0 : index
    %c0_158 = arith.constant 0 : index
    %180 = vector.load %arg13[%c0_157, %c0_158] : memref<1x64xf32, #tpu.memory_space<vmem>>, vector<1x64xf32>
    %181 = vector.broadcast %180 : vector<1x64xf32> to vector<4x64xf32>
    %182 = arith.addf %179, %181 : vector<4x64xf32>
    %183 = arith.truncf %182 : vector<4x64xf32> to vector<4x64xbf16>
    %c0_159 = arith.constant 0 : index
    %c0_160 = arith.constant 0 : index
    %c0_161 = arith.constant 0 : index
    %184 = vector.load %arg14[%c0_159, %c0_160, %c0_161] : memref<4x1x4xbf16, #tpu.memory_space<vmem>>, vector<1x1x4xbf16>
    %185 = vector.shape_cast %184 : vector<1x1x4xbf16> to vector<1x4xbf16>
    %cst_162 = arith.constant dense<0.000000e+00> : vector<1x64xf32>
    %186 = tpu.matmul %185, %183, %cst_162 {dimension_numbers = #tpu.dot_dimension_numbers<[1], [0], [0], [1], [0, 0, 1, 1], [], []>} : vector<1x4xbf16>, vector<4x64xbf16>, vector<1x64xf32> -> vector<1x64xf32>
    %187 = arith.truncf %186 : vector<1x64xf32> to vector<1x64xbf16>
    %c0_163 = arith.constant 0 : index
    %c0_164 = arith.constant 0 : index
    %c0_165 = arith.constant 0 : index
    %188 = vector.load %arg15[%c0_163, %c0_164, %c0_165] : memref<4x64x128xbf16, #tpu.memory_space<vmem>>, vector<1x64x128xbf16>
    %189 = vector.shape_cast %188 : vector<1x64x128xbf16> to vector<64x128xbf16>
    %cst_166 = arith.constant dense<0.000000e+00> : vector<1x128xf32>
    %190 = tpu.matmul %187, %189, %cst_166 {dimension_numbers = #tpu.dot_dimension_numbers<[1], [0], [0], [1], [0, 0, 1, 1], [], []>} : vector<1x64xbf16>, vector<64x128xbf16>, vector<1x128xf32> -> vector<1x128xf32>
    %c1_167 = arith.constant 1 : index
    %c0_168 = arith.constant 0 : index
    %c0_169 = arith.constant 0 : index
    %191 = vector.load %arg14[%c1_167, %c0_168, %c0_169] : memref<4x1x4xbf16, #tpu.memory_space<vmem>>, vector<1x1x4xbf16>
    %192 = vector.shape_cast %191 : vector<1x1x4xbf16> to vector<1x4xbf16>
    %cst_170 = arith.constant dense<0.000000e+00> : vector<1x64xf32>
    %193 = tpu.matmul %192, %183, %cst_170 {dimension_numbers = #tpu.dot_dimension_numbers<[1], [0], [0], [1], [0, 0, 1, 1], [], []>} : vector<1x4xbf16>, vector<4x64xbf16>, vector<1x64xf32> -> vector<1x64xf32>
    %194 = arith.truncf %193 : vector<1x64xf32> to vector<1x64xbf16>
    %c1_171 = arith.constant 1 : index
    %c0_172 = arith.constant 0 : index
    %c0_173 = arith.constant 0 : index
    %195 = vector.load %arg15[%c1_171, %c0_172, %c0_173] : memref<4x64x128xbf16, #tpu.memory_space<vmem>>, vector<1x64x128xbf16>
    %196 = vector.shape_cast %195 : vector<1x64x128xbf16> to vector<64x128xbf16>
    %cst_174 = arith.constant dense<0.000000e+00> : vector<1x128xf32>
    %197 = tpu.matmul %194, %196, %cst_174 {dimension_numbers = #tpu.dot_dimension_numbers<[1], [0], [0], [1], [0, 0, 1, 1], [], []>} : vector<1x64xbf16>, vector<64x128xbf16>, vector<1x128xf32> -> vector<1x128xf32>
    %198 = arith.addf %190, %197 : vector<1x128xf32>
    %c2_175 = arith.constant 2 : index
    %c0_176 = arith.constant 0 : index
    %c0_177 = arith.constant 0 : index
    %199 = vector.load %arg14[%c2_175, %c0_176, %c0_177] : memref<4x1x4xbf16, #tpu.memory_space<vmem>>, vector<1x1x4xbf16>
    %200 = vector.shape_cast %199 : vector<1x1x4xbf16> to vector<1x4xbf16>
    %cst_178 = arith.constant dense<0.000000e+00> : vector<1x64xf32>
    %201 = tpu.matmul %200, %183, %cst_178 {dimension_numbers = #tpu.dot_dimension_numbers<[1], [0], [0], [1], [0, 0, 1, 1], [], []>} : vector<1x4xbf16>, vector<4x64xbf16>, vector<1x64xf32> -> vector<1x64xf32>
    %202 = arith.truncf %201 : vector<1x64xf32> to vector<1x64xbf16>
    %c2_179 = arith.constant 2 : index
    %c0_180 = arith.constant 0 : index
    %c0_181 = arith.constant 0 : index
    %203 = vector.load %arg15[%c2_179, %c0_180, %c0_181] : memref<4x64x128xbf16, #tpu.memory_space<vmem>>, vector<1x64x128xbf16>
    %204 = vector.shape_cast %203 : vector<1x64x128xbf16> to vector<64x128xbf16>
    %cst_182 = arith.constant dense<0.000000e+00> : vector<1x128xf32>
    %205 = tpu.matmul %202, %204, %cst_182 {dimension_numbers = #tpu.dot_dimension_numbers<[1], [0], [0], [1], [0, 0, 1, 1], [], []>} : vector<1x64xbf16>, vector<64x128xbf16>, vector<1x128xf32> -> vector<1x128xf32>
    %206 = arith.addf %198, %205 : vector<1x128xf32>
    %c3_183 = arith.constant 3 : index
    %c0_184 = arith.constant 0 : index
    %c0_185 = arith.constant 0 : index
    %207 = vector.load %arg14[%c3_183, %c0_184, %c0_185] : memref<4x1x4xbf16, #tpu.memory_space<vmem>>, vector<1x1x4xbf16>
    %208 = vector.shape_cast %207 : vector<1x1x4xbf16> to vector<1x4xbf16>
    %cst_186 = arith.constant dense<0.000000e+00> : vector<1x64xf32>
    %209 = tpu.matmul %208, %183, %cst_186 {dimension_numbers = #tpu.dot_dimension_numbers<[1], [0], [0], [1], [0, 0, 1, 1], [], []>} : vector<1x4xbf16>, vector<4x64xbf16>, vector<1x64xf32> -> vector<1x64xf32>
    %210 = arith.truncf %209 : vector<1x64xf32> to vector<1x64xbf16>
    %c3_187 = arith.constant 3 : index
    %c0_188 = arith.constant 0 : index
    %c0_189 = arith.constant 0 : index
    %211 = vector.load %arg15[%c3_187, %c0_188, %c0_189] : memref<4x64x128xbf16, #tpu.memory_space<vmem>>, vector<1x64x128xbf16>
    %212 = vector.shape_cast %211 : vector<1x64x128xbf16> to vector<64x128xbf16>
    %cst_190 = arith.constant dense<0.000000e+00> : vector<1x128xf32>
    %213 = tpu.matmul %210, %212, %cst_190 {dimension_numbers = #tpu.dot_dimension_numbers<[1], [0], [0], [1], [0, 0, 1, 1], [], []>} : vector<1x64xbf16>, vector<64x128xbf16>, vector<1x128xf32> -> vector<1x128xf32>
    %214 = arith.addf %206, %213 : vector<1x128xf32>
    %c0_191 = arith.constant 0 : index
    %c0_192 = arith.constant 0 : index
    %215 = vector.load %arg16[%c0_191, %c0_192] : memref<1x128xf32, #tpu.memory_space<vmem>>, vector<1x128xf32>
    %216 = arith.addf %214, %215 : vector<1x128xf32>
    %cst_193 = arith.constant 0.000000e+00 : f32
    %217 = vector.broadcast %cst_193 : f32 to vector<1x128xf32>
    %218 = arith.cmpf ogt, %216, %217 : vector<1x128xf32>
    %cst_194 = arith.constant 2.000000e-01 : f32
    %219 = vector.broadcast %cst_194 : f32 to vector<1x128xf32>
    %220 = arith.mulf %219, %216 : vector<1x128xf32>
    %221 = arith.select %218, %216, %220 : vector<1x128xi1>, vector<1x128xf32>
    %c0_195 = arith.constant 0 : index
    %c0_196 = arith.constant 0 : index
    %222 = vector.load %arg17[%c0_195, %c0_196] : memref<1x128xf32, #tpu.memory_space<vmem>>, vector<1x128xf32>
    %223 = arith.mulf %221, %222 : vector<1x128xf32>
    %c0_197 = arith.constant 0 : index
    %c0_198 = arith.constant 0 : index
    %224 = vector.load %arg18[%c0_197, %c0_198] : memref<1x128xf32, #tpu.memory_space<vmem>>, vector<1x128xf32>
    %225 = arith.addf %223, %224 : vector<1x128xf32>
    %226 = arith.truncf %225 : vector<1x128xf32> to vector<1x128xbf16>
    %c0_199 = arith.constant 0 : index
    %c0_200 = arith.constant 0 : index
    %c0_201 = arith.constant 0 : index
    %227 = vector.load %arg20[%c0_199, %c0_200, %c0_201] : memref<1x128x128xbf16, #tpu.memory_space<vmem>>, vector<1x128x128xbf16>
    %228 = vector.shape_cast %227 : vector<1x128x128xbf16> to vector<128x128xbf16>
    %cst_202 = arith.constant dense<0.000000e+00> : vector<1x128xf32>
    %229 = tpu.matmul %226, %228, %cst_202 {dimension_numbers = #tpu.dot_dimension_numbers<[1], [0], [0], [1], [0, 0, 1, 1], [], []>} : vector<1x128xbf16>, vector<128x128xbf16>, vector<1x128xf32> -> vector<1x128xf32>
    %c0_203 = arith.constant 0 : index
    %c0_204 = arith.constant 0 : index
    %230 = vector.load %arg21[%c0_203, %c0_204] : memref<1x128xf32, #tpu.memory_space<vmem>>, vector<1x128xf32>
    %231 = arith.addf %229, %230 : vector<1x128xf32>
    %cst_205 = arith.constant 0.000000e+00 : f32
    %232 = vector.broadcast %cst_205 : f32 to vector<1x128xf32>
    %233 = arith.maximumf %231, %232 : vector<1x128xf32>
    %234 = arith.truncf %233 : vector<1x128xf32> to vector<1x128xbf16>
    %c0_206 = arith.constant 0 : index
    %c0_207 = arith.constant 0 : index
    %c0_208 = arith.constant 0 : index
    %235 = vector.load %arg23[%c0_206, %c0_207, %c0_208] : memref<1x128x128xbf16, #tpu.memory_space<vmem>>, vector<1x128x128xbf16>
    %236 = vector.shape_cast %235 : vector<1x128x128xbf16> to vector<128x128xbf16>
    %cst_209 = arith.constant dense<0.000000e+00> : vector<1x128xf32>
    %237 = tpu.matmul %234, %236, %cst_209 {dimension_numbers = #tpu.dot_dimension_numbers<[1], [0], [0], [1], [0, 0, 1, 1], [], []>} : vector<1x128xbf16>, vector<128x128xbf16>, vector<1x128xf32> -> vector<1x128xf32>
    %238 = arith.addf %225, %237 : vector<1x128xf32>
    %c0_210 = arith.constant 0 : index
    %c0_211 = arith.constant 0 : index
    %239 = vector.load %arg24[%c0_210, %c0_211] : memref<1x128xf32, #tpu.memory_space<vmem>>, vector<1x128xf32>
    %240 = arith.addf %238, %239 : vector<1x128xf32>
    %241 = arith.truncf %240 : vector<1x128xf32> to vector<1x128xbf16>
    %c0_212 = arith.constant 0 : index
    %c0_213 = arith.constant 0 : index
    %c0_214 = arith.constant 0 : index
    %242 = vector.load %arg25[%c0_212, %c0_213, %c0_214] : memref<1x128x128xbf16, #tpu.memory_space<vmem>>, vector<1x128x128xbf16>
    %243 = vector.shape_cast %242 : vector<1x128x128xbf16> to vector<128x128xbf16>
    %cst_215 = arith.constant dense<0.000000e+00> : vector<1x128xf32>
    %244 = tpu.matmul %241, %243, %cst_215 {dimension_numbers = #tpu.dot_dimension_numbers<[1], [0], [0], [1], [0, 0, 1, 1], [], []>} : vector<1x128xbf16>, vector<128x128xbf16>, vector<1x128xf32> -> vector<1x128xf32>
    %c0_216 = arith.constant 0 : index
    %c0_217 = arith.constant 0 : index
    %245 = vector.load %arg26[%c0_216, %c0_217] : memref<1x128xf32, #tpu.memory_space<vmem>>, vector<1x128xf32>
    %246 = arith.addf %244, %245 : vector<1x128xf32>
    %247 = tpu.iota {dimensions = array<i32: 1>} : vector<1x128xi32>
    %cst_218 = arith.constant 0.000000e+00 : f32
    %248 = vector.broadcast %cst_218 : f32 to vector<1x128xf32>
    %249 = arith.subf %248, %246 : vector<1x128xf32>
    %250 = math.exp %249 : vector<1x128xf32>
    %cst_219 = arith.constant 1.000000e+00 : f32
    %251 = vector.broadcast %cst_219 : f32 to vector<1x128xf32>
    %252 = arith.addf %251, %250 : vector<1x128xf32>
    %253 = tpu.reciprocal %252 {approx = true} : vector<1x128xf32> -> vector<1x128xf32>
    %254 = arith.mulf %252, %253 : vector<1x128xf32>
    %cst_220 = arith.constant 2.000000e+00 : f32
    %255 = vector.broadcast %cst_220 : f32 to vector<1x128xf32>
    %256 = arith.subf %255, %254 : vector<1x128xf32>
    %257 = arith.mulf %253, %256 : vector<1x128xf32>
    %c1_i32 = arith.constant 1 : i32
    %258 = vector.broadcast %c1_i32 : i32 to vector<1x128xi32>
    %259 = arith.cmpi sge, %247, %258 : vector<1x128xi32>
    %c4_i32 = arith.constant 4 : i32
    %260 = vector.broadcast %c4_i32 : i32 to vector<1x128xi32>
    %261 = arith.cmpi sle, %247, %260 : vector<1x128xi32>
    %262 = arith.andi %259, %261 : vector<1x128xi1>
    %cst_221 = arith.constant -1.000000e+30 : f32
    %263 = vector.broadcast %cst_221 : f32 to vector<1x128xf32>
    %264 = arith.select %262, %246, %263 : vector<1x128xi1>, vector<1x128xf32>
    %cst_222 = arith.constant dense<0xFF800000> : vector<1xf32>
    %265 = vector.multi_reduction <maximumf>, %264, %cst_222 [1] : vector<1x128xf32> to vector<1xf32>
    %266 = vector.shape_cast %265 : vector<1xf32> to vector<1x1xf32>
    %267 = vector.broadcast %266 : vector<1x1xf32> to vector<1x128xf32>
    %268 = arith.subf %246, %267 : vector<1x128xf32>
    %269 = math.exp %268 : vector<1x128xf32>
    %cst_223 = arith.constant 0.000000e+00 : f32
    %270 = vector.broadcast %cst_223 : f32 to vector<1x128xf32>
    %271 = arith.select %262, %269, %270 : vector<1x128xi1>, vector<1x128xf32>
    %cst_224 = arith.constant dense<0.000000e+00> : vector<1xf32>
    %272 = vector.multi_reduction <add>, %271, %cst_224 [1] : vector<1x128xf32> to vector<1xf32>
    %273 = vector.shape_cast %272 : vector<1xf32> to vector<1x1xf32>
    %274 = tpu.reciprocal %273 {approx = true} : vector<1x1xf32> -> vector<1x1xf32>
    %275 = arith.mulf %273, %274 : vector<1x1xf32>
    %cst_225 = arith.constant 2.000000e+00 : f32
    %276 = vector.broadcast %cst_225 : f32 to vector<1x1xf32>
    %277 = arith.subf %276, %275 : vector<1x1xf32>
    %278 = arith.mulf %274, %277 : vector<1x1xf32>
    %279 = vector.broadcast %278 : vector<1x1xf32> to vector<1x128xf32>
    %280 = arith.mulf %271, %279 : vector<1x128xf32>
    %c0_i32 = arith.constant 0 : i32
    %281 = vector.broadcast %c0_i32 : i32 to vector<1x128xi32>
    %282 = arith.cmpi eq, %247, %281 : vector<1x128xi32>
    %283 = arith.select %282, %257, %280 : vector<1x128xi1>, vector<1x128xf32>
    %284 = vector.shape_cast %283 : vector<1x128xf32> to vector<1x128xf32>
    %285 = vector.broadcast %284 : vector<1x128xf32> to vector<8x128xf32>
    %c0_226 = arith.constant 0 : index
    %c0_227 = arith.constant 0 : index
    %286 = vector.load %arg27[%c0_226, %c0_227] : memref<8x128xf32, #tpu.memory_space<vmem>>, vector<8x128xf32>
    tpu.vector_store %arg27[%c0_226, %c0_227], %285 {strides = array<i32>} : memref<8x128xf32, #tpu.memory_space<vmem>>, vector<8x128xf32>,
    return
  }
  func.func @transform_0(%arg0: i32) -> (i32, i32) {
    %c0_i32 = arith.constant 0 : i32
    %c0_i32_0 = arith.constant 0 : i32
    return %arg0, %c0_i32 : i32, i32
  }
  func.func @transform_1(%arg0: i32) -> (i32, i32) {
    %c0_i32 = arith.constant 0 : i32
    %c0_i32_0 = arith.constant 0 : i32
    %c0_i32_1 = arith.constant 0 : i32
    return %c0_i32, %c0_i32_0 : i32, i32
  }
  func.func @transform_2(%arg0: i32) -> (i32, i32) {
    %c0_i32 = arith.constant 0 : i32
    %c0_i32_0 = arith.constant 0 : i32
    %c0_i32_1 = arith.constant 0 : i32
    return %c0_i32, %c0_i32_0 : i32, i32
  }
  func.func @transform_3(%arg0: i32) -> (i32, i32, i32) {
    %c0_i32 = arith.constant 0 : i32
    %c0_i32_0 = arith.constant 0 : i32
    %c0_i32_1 = arith.constant 0 : i32
    %c0_i32_2 = arith.constant 0 : i32
    return %c0_i32, %c0_i32_0, %c0_i32_1 : i32, i32, i32
  }
  func.func @transform_4(%arg0: i32) -> (i32, i32, i32) {
    %c0_i32 = arith.constant 0 : i32
    %c0_i32_0 = arith.constant 0 : i32
    %c0_i32_1 = arith.constant 0 : i32
    %c0_i32_2 = arith.constant 0 : i32
    return %c0_i32, %c0_i32_0, %c0_i32_1 : i32, i32, i32
  }
  func.func @transform_5(%arg0: i32) -> (i32, i32) {
    %c0_i32 = arith.constant 0 : i32
    %c0_i32_0 = arith.constant 0 : i32
    %c0_i32_1 = arith.constant 0 : i32
    return %c0_i32, %c0_i32_0 : i32, i32
  }
  func.func @transform_6(%arg0: i32) -> (i32, i32) {
    %c0_i32 = arith.constant 0 : i32
    %c0_i32_0 = arith.constant 0 : i32
    %c0_i32_1 = arith.constant 0 : i32
    return %c0_i32, %c0_i32_0 : i32, i32
  }
  func.func @transform_7(%arg0: i32) -> (i32, i32) {
    %c0_i32 = arith.constant 0 : i32
    %c0_i32_0 = arith.constant 0 : i32
    %c0_i32_1 = arith.constant 0 : i32
    return %c0_i32, %c0_i32_0 : i32, i32
  }
  func.func @transform_8(%arg0: i32) -> (i32, i32, i32) {
    %c0_i32 = arith.constant 0 : i32
    %c0_i32_0 = arith.constant 0 : i32
    %c0_i32_1 = arith.constant 0 : i32
    %c0_i32_2 = arith.constant 0 : i32
    return %c0_i32, %c0_i32_0, %c0_i32_1 : i32, i32, i32
  }
  func.func @transform_9(%arg0: i32) -> (i32, i32, i32) {
    %c0_i32 = arith.constant 0 : i32
    %c0_i32_0 = arith.constant 0 : i32
    %c0_i32_1 = arith.constant 0 : i32
    %c0_i32_2 = arith.constant 0 : i32
    return %c0_i32, %c0_i32_0, %c0_i32_1 : i32, i32, i32
  }
  func.func @transform_10(%arg0: i32) -> (i32, i32) {
    %c0_i32 = arith.constant 0 : i32
    %c0_i32_0 = arith.constant 0 : i32
    %c0_i32_1 = arith.constant 0 : i32
    return %c0_i32, %c0_i32_0 : i32, i32
  }
  func.func @transform_11(%arg0: i32) -> (i32, i32) {
    %c0_i32 = arith.constant 0 : i32
    %c0_i32_0 = arith.constant 0 : i32
    %c0_i32_1 = arith.constant 0 : i32
    return %c0_i32, %c0_i32_0 : i32, i32
  }
  func.func @transform_12(%arg0: i32) -> (i32, i32) {
    %c0_i32 = arith.constant 0 : i32
    %c0_i32_0 = arith.constant 0 : i32
    %c0_i32_1 = arith.constant 0 : i32
    return %c0_i32, %c0_i32_0 : i32, i32
  }
  func.func @transform_13(%arg0: i32) -> (i32, i32, i32) {
    %c0_i32 = arith.constant 0 : i32
    %c0_i32_0 = arith.constant 0 : i32
    %c0_i32_1 = arith.constant 0 : i32
    %c0_i32_2 = arith.constant 0 : i32
    return %c0_i32, %c0_i32_0, %c0_i32_1 : i32, i32, i32
  }
  func.func @transform_14(%arg0: i32) -> (i32, i32, i32) {
    %c0_i32 = arith.constant 0 : i32
    %c0_i32_0 = arith.constant 0 : i32
    %c0_i32_1 = arith.constant 0 : i32
    %c0_i32_2 = arith.constant 0 : i32
    return %c0_i32, %c0_i32_0, %c0_i32_1 : i32, i32, i32
  }
  func.func @transform_15(%arg0: i32) -> (i32, i32) {
    %c0_i32 = arith.constant 0 : i32
    %c0_i32_0 = arith.constant 0 : i32
    %c0_i32_1 = arith.constant 0 : i32
    return %c0_i32, %c0_i32_0 : i32, i32
  }
  func.func @transform_16(%arg0: i32) -> (i32, i32) {
    %c0_i32 = arith.constant 0 : i32
    %c0_i32_0 = arith.constant 0 : i32
    %c0_i32_1 = arith.constant 0 : i32
    return %c0_i32, %c0_i32_0 : i32, i32
  }
  func.func @transform_17(%arg0: i32) -> (i32, i32) {
    %c0_i32 = arith.constant 0 : i32
    %c0_i32_0 = arith.constant 0 : i32
    %c0_i32_1 = arith.constant 0 : i32
    return %c0_i32, %c0_i32_0 : i32, i32
  }
  func.func @transform_18(%arg0: i32) -> (i32, i32, i32) {
    %c0_i32 = arith.constant 0 : i32
    %c0_i32_0 = arith.constant 0 : i32
    %c0_i32_1 = arith.constant 0 : i32
    %c0_i32_2 = arith.constant 0 : i32
    return %c0_i32, %c0_i32_0, %c0_i32_1 : i32, i32, i32
  }
  func.func @transform_19(%arg0: i32) -> (i32, i32, i32) {
    %c0_i32 = arith.constant 0 : i32
    %c0_i32_0 = arith.constant 0 : i32
    %c0_i32_1 = arith.constant 0 : i32
    %c0_i32_2 = arith.constant 0 : i32
    return %c0_i32, %c0_i32_0, %c0_i32_1 : i32, i32, i32
  }
  func.func @transform_20(%arg0: i32) -> (i32, i32) {
    %c0_i32 = arith.constant 0 : i32
    %c0_i32_0 = arith.constant 0 : i32
    %c0_i32_1 = arith.constant 0 : i32
    return %c0_i32, %c0_i32_0 : i32, i32
  }
  func.func @transform_21(%arg0: i32) -> (i32, i32, i32) {
    %c0_i32 = arith.constant 0 : i32
    %c0_i32_0 = arith.constant 0 : i32
    %c0_i32_1 = arith.constant 0 : i32
    %c0_i32_2 = arith.constant 0 : i32
    return %c0_i32, %c0_i32_0, %c0_i32_1 : i32, i32, i32
  }
  func.func @transform_22(%arg0: i32) -> (i32, i32, i32) {
    %c0_i32 = arith.constant 0 : i32
    %c0_i32_0 = arith.constant 0 : i32
    %c0_i32_1 = arith.constant 0 : i32
    %c0_i32_2 = arith.constant 0 : i32
    return %c0_i32, %c0_i32_0, %c0_i32_1 : i32, i32, i32
  }
  func.func @transform_23(%arg0: i32) -> (i32, i32) {
    %c0_i32 = arith.constant 0 : i32
    %c0_i32_0 = arith.constant 0 : i32
    %c0_i32_1 = arith.constant 0 : i32
    return %c0_i32, %c0_i32_0 : i32, i32
  }
  func.func @transform_24(%arg0: i32) -> (i32, i32, i32) {
    %c0_i32 = arith.constant 0 : i32
    %c0_i32_0 = arith.constant 0 : i32
    %c0_i32_1 = arith.constant 0 : i32
    %c0_i32_2 = arith.constant 0 : i32
    return %c0_i32, %c0_i32_0, %c0_i32_1 : i32, i32, i32
  }
  func.func @transform_25(%arg0: i32) -> (i32, i32) {
    %c0_i32 = arith.constant 0 : i32
    %c0_i32_0 = arith.constant 0 : i32
    %c0_i32_1 = arith.constant 0 : i32
    return %c0_i32, %c0_i32_0 : i32, i32
  }
  func.func @transform_26(%arg0: i32) -> (i32, i32) {
    %c0_i32 = arith.constant 0 : i32
    %c0_i32_0 = arith.constant 0 : i32
    return %arg0, %c0_i32 : i32, i32
  }
}

</mosaic_0001>

<llo_original>
// kernel: discriminator_forward.1
$region0: #{discriminator_forward.1}
  #allocation0 [shape = 'u32[]', space=smem, size = 0x4, offset = 0x4, fixed_abs, tag = 'smem constant byte address 0x4 - core index']
  #allocation1 [shape = 'u32[144,128]{1,0:T(1,128)}', space=vmem, size = 0x12000, scoped, tag = 'internal scratch']
  #allocation2 [shape = 'bf16[1,1,1]{2,1,0:T(2,128)S(1)}', space=vmem, size = 0x200, scoped, tag = 'scoped memory for discriminator_forward.1']
  #allocation3 [shape = 'bf16[1,1,1]{2,1,0:T(2,128)S(1)}', space=vmem, size = 0x200, scoped, tag = 'scoped memory for discriminator_forward.1']
  %s0 = inlined_call_operand.vmem [shape: bf16[128,27], index: 0, kind: input, shape index: {}]
  %s1 = inlined_call_operand.vmem [shape: bf16[27,16], index: 1, kind: input, shape index: {}]
  %s2 = inlined_call_operand.vmem [shape: f32[1,16], index: 2, kind: input, shape index: {}]
  %s3 = inlined_call_operand.vmem [shape: bf16[9,16,64], index: 3, kind: input, shape index: {}]
  %s4 = inlined_call_operand.vmem [shape: bf16[9,16,32], index: 4, kind: input, shape index: {}]
  %s5 = inlined_call_operand.vmem [shape: f32[1,32], index: 5, kind: input, shape index: {}]
  %s6 = inlined_call_operand.vmem [shape: f32[1,32], index: 6, kind: input, shape index: {}]
  %s7 = inlined_call_operand.vmem [shape: f32[1,32], index: 7, kind: input, shape index: {}]
  %s8 = inlined_call_operand.vmem [shape: bf16[9,4,16], index: 8, kind: input, shape index: {}]
  %s9 = inlined_call_operand.vmem [shape: bf16[9,32,64], index: 9, kind: input, shape index: {}]
  %s10 = inlined_call_operand.vmem [shape: f32[1,64], index: 10, kind: input, shape index: {}]
  %s11 = inlined_call_operand.vmem [shape: f32[1,64], index: 11, kind: input, shape index: {}]
  %s12 = inlined_call_operand.vmem [shape: f32[1,64], index: 12, kind: input, shape index: {}]
  %s13 = inlined_call_operand.vmem [shape: bf16[4,1,4], index: 13, kind: input, shape index: {}]
  %s14 = inlined_call_operand.vmem [shape: bf16[4,64,128], index: 14, kind: input, shape index: {}]
  %s15 = inlined_call_operand.vmem [shape: f32[1,128], index: 15, kind: input, shape index: {}]
  %s16 = inlined_call_operand.vmem [shape: f32[1,128], index: 16, kind: input, shape index: {}]
  %s17 = inlined_call_operand.vmem [shape: f32[1,128], index: 17, kind: input, shape index: {}]
  %s18 = inlined_call_operand.<no memory space> [shape: bf16[1,1,1], index: 18, kind: input, shape index: {}, may-alias: {18,21}]
  %s19 = inlined_call_operand.vmem [shape: bf16[1,128,128], index: 19, kind: input, shape index: {}]
  %s20 = inlined_call_operand.vmem [shape: f32[1,128], index: 20, kind: input, shape index: {}]
  %s21 = inlined_call_operand.<no memory space> [shape: bf16[1,1,1], index: 21, kind: input, shape index: {}, may-alias: {18,21}]
  %s22 = inlined_call_operand.vmem [shape: bf16[1,128,128], index: 22, kind: input, shape index: {}]
  %s23 = inlined_call_operand.vmem [shape: f32[1,128], index: 23, kind: input, shape index: {}]
  %s24 = inlined_call_operand.vmem [shape: bf16[1,128,128], index: 24, kind: input, shape index: {}]
  %s25 = inlined_call_operand.vmem [shape: f32[1,128], index: 25, kind: input, shape index: {}]
  %s26 = inlined_call_operand.vmem [shape: f32[16,128], index: 26, kind: output, shape index: {}]
  %s27 = sld [smem:[#allocation0]]
  $region137: #{discriminator_forward.1} parent=0
    _
  %s29 = ssub.s32 1, %s27
  %s30 = scalar_select 0, %s29, %s27
  %v31 = vstv %s18
  %32 = vst [vmem:[#allocation2] sm:$0x1] %v31
  %v33 = vstv %s21
  %34 = vst [vmem:[#allocation3] sm:$0x1] %v33
  loop: start=0, step=1, limit=4
  $region2: #{discriminator_forward.1} parent=0 // loop_pre_header
    _
  $region3: #{discriminator_forward.1} parent=0 // loop_header
    %s36 = sphi 0, %s40
    %p37 = scmp.ge.s32.totalorder %s36, 4
    %s46 = sphi 0, %s48
    %s49 = sphi 0, %s46
    %s50 = sphi 0, %s49
    %s66 = sphi 0, %s50
    %s70 = sphi 0, %s70
    %s72 = sphi 0, %s70
    %s73 = sphi 0, %s72
    %s87 = sphi 0, %s73
    %s91 = sphi 0, %s91
    %s93 = sphi 0, %s91
    %s94 = sphi 0, %s93
    %s108 = sphi 0, %s94
    %s112 = sphi 0, %s112
    %s114 = sphi 0, %s112
    %s115 = sphi 0, %s114
    %s129 = sphi 0, %s115
    %s133 = sphi 0, %s133
    %s135 = sphi 0, %s133
    %s136 = sphi 0, %s135
    %s150 = sphi 0, %s136
    %s154 = sphi 0, %s154
    %s156 = sphi 0, %s154
    %s157 = sphi 0, %s156
    %s171 = sphi 0, %s157
    %s175 = sphi 0, %s175
    %s177 = sphi 0, %s175
    %s178 = sphi 0, %s177
    %s192 = sphi 0, %s178
    %s196 = sphi 0, %s196
    %s198 = sphi 0, %s196
    %s199 = sphi 0, %s198
    %s213 = sphi 0, %s199
    %s217 = sphi 0, %s217
    %s219 = sphi 0, %s217
    %s220 = sphi 0, %s219
    %s234 = sphi 0, %s220
    %s238 = sphi 0, %s238
    %s240 = sphi 0, %s238
    %s241 = sphi 0, %s240
    %s255 = sphi 0, %s241
    %s259 = sphi 0, %s259
    %s261 = sphi 0, %s259
    %s262 = sphi 0, %s261
    %s276 = sphi 0, %s262
    %s280 = sphi 0, %s280
    %s282 = sphi 0, %s280
    %s283 = sphi 0, %s282
    %s297 = sphi 0, %s283
    %s301 = sphi 0, %s301
    %s303 = sphi 0, %s301
    %s304 = sphi 0, %s303
    %s318 = sphi 0, %s304
    %s322 = sphi 0, %s322
    %s324 = sphi 0, %s322
    %s325 = sphi 0, %s324
    %s339 = sphi 0, %s325
    %s343 = sphi 0, %s343
    %s345 = sphi 0, %s343
    %s346 = sphi 0, %s345
    %s360 = sphi 0, %s346
    %s364 = sphi 0, %s364
    %s366 = sphi 0, %s364
    %s367 = sphi 0, %s366
    %s381 = sphi 0, %s367
    %s385 = sphi 0, %s385
    %s387 = sphi 0, %s385
    %s388 = sphi 0, %s387
    %s402 = sphi 0, %s388
    %s406 = sphi 0, %s406
    %s408 = sphi 0, %s406
    %s409 = sphi 0, %s408
    %s423 = sphi 0, %s409
    %s427 = sphi 0, %s427
    %s429 = sphi 0, %s427
    %s430 = sphi 0, %s429
    %s444 = sphi 0, %s430
    %s448 = sphi 0, %s448
    %s450 = sphi 0, %s448
    %s451 = sphi 0, %s450
    %s465 = sphi 0, %s451
    %s469 = sphi 0, %s469
    %s471 = sphi 0, %s469
    %s472 = sphi 0, %s471
    %s486 = sphi 0, %s472
    %s490 = sphi 0, %s490
    %s492 = sphi 0, %s490
    %s493 = sphi 0, %s492
    %s507 = sphi 0, %s493
    %s511 = sphi 0, %s511
    %s513 = sphi 0, %s511
    %s514 = sphi 0, %s513
    %s528 = sphi 0, %s514
    %s532 = sphi 0, %s532
    %s534 = sphi 0, %s532
    %s535 = sphi 0, %s534
    %s549 = sphi 0, %s535
    %s553 = sphi 0, %s553
    %s555 = sphi 0, %s553
    %s556 = sphi 0, %s555
    %s570 = sphi 0, %s556
    %s574 = sphi 0, %s574
    %s576 = sphi 0, %s574
    %s577 = sphi 0, %s576
    %s591 = sphi 0, %s577
    %s597 = sphi 0, %s599
    %s600 = sphi 0, %s597
    %s601 = sphi 0, %s600
    %s617 = sphi 0, %s601
  $region4: #{discriminator_forward.1} parent=0 // loop_header_branch
    %39 = sbr.rel (%p37) target = $region8
  $region5: #{discriminator_forward.1} parent=0 // loop_body
    %s41 = ssub.s32 %s36, 1
    %s42 = ssub.s32 %s36, 2
    %s43 = sadd.s32 %s36, 1
    %s44 = ssub.s32 %s36, %s43
    %p45 = scmp.eq.s32.totalorder %s44, 0
    %s47 = sadd.s32 %s46, 1
    %s48 = scalar_select %p45, %s46, %s47
    %p51 = pneg %p45
    %p52 = scmp.eq.s32.totalorder %s36, 1
    %p53 = por %p51, %p52
    %p54 = scmp.ne.s32.totalorder %s46, %s49
    %p55 = scmp.eq.s32.totalorder %s36, 0
    %p56 = por %p54, %p55
    %p57 = scmp.ne.s32.totalorder %s46, %s49
    %p58 = scmp.eq.s32.totalorder %s41, 1
    %p59 = por %p57, %p58
    %p60 = scmp.ne.s32.totalorder %s49, %s50
    %p61 = scmp.eq.s32.totalorder %s41, 0
    %p62 = por %p60, %p61
    %p63 = scmp.ne.s32.totalorder %s49, %s50
    %p64 = scmp.eq.s32.totalorder %s42, 1
    %p65 = por %p63, %p64
    %p67 = scmp.ne.s32.totalorder %s50, %s66
    %p68 = scmp.eq.s32.totalorder %s42, 0
    %p69 = por %p67, %p68
    %s71 = sadd.s32 %s70, 1
    %p74 = scmp.eq.s32.totalorder %s36, 1
    %p75 = scmp.ne.s32.totalorder %s70, %s72
    %p76 = scmp.eq.s32.totalorder %s36, 0
    %p77 = por %p75, %p76
    %p78 = scmp.ne.s32.totalorder %s70, %s72
    %p79 = scmp.eq.s32.totalorder %s41, 1
    %p80 = por %p78, %p79
    %p81 = scmp.ne.s32.totalorder %s72, %s73
    %p82 = scmp.eq.s32.totalorder %s41, 0
    %p83 = por %p81, %p82
    %p84 = scmp.ne.s32.totalorder %s72, %s73
    %p85 = scmp.eq.s32.totalorder %s42, 1
    %p86 = por %p84, %p85
    %p88 = scmp.ne.s32.totalorder %s73, %s87
    %p89 = scmp.eq.s32.totalorder %s42, 0
    %p90 = por %p88, %p89
    %s92 = sadd.s32 %s91, 1
    %p95 = scmp.eq.s32.totalorder %s36, 1
    %p96 = scmp.ne.s32.totalorder %s91, %s93
    %p97 = scmp.eq.s32.totalorder %s36, 0
    %p98 = por %p96, %p97
    %p99 = scmp.ne.s32.totalorder %s91, %s93
    %p100 = scmp.eq.s32.totalorder %s41, 1
    %p101 = por %p99, %p100
    %p102 = scmp.ne.s32.totalorder %s93, %s94
    %p103 = scmp.eq.s32.totalorder %s41, 0
    %p104 = por %p102, %p103
    %p105 = scmp.ne.s32.totalorder %s93, %s94
    %p106 = scmp.eq.s32.totalorder %s42, 1
    %p107 = por %p105, %p106
    %p109 = scmp.ne.s32.totalorder %s94, %s108
    %p110 = scmp.eq.s32.totalorder %s42, 0
    %p111 = por %p109, %p110
    %s113 = sadd.s32 %s112, 1
    %p116 = scmp.eq.s32.totalorder %s36, 1
    %p117 = scmp.ne.s32.totalorder %s112, %s114
    %p118 = scmp.eq.s32.totalorder %s36, 0
    %p119 = por %p117, %p118
    %p120 = scmp.ne.s32.totalorder %s112, %s114
    %p121 = scmp.eq.s32.totalorder %s41, 1
    %p122 = por %p120, %p121
    %p123 = scmp.ne.s32.totalorder %s114, %s115
    %p124 = scmp.eq.s32.totalorder %s41, 0
    %p125 = por %p123, %p124
    %p126 = scmp.ne.s32.totalorder %s114, %s115
    %p127 = scmp.eq.s32.totalorder %s42, 1
    %p128 = por %p126, %p127
    %p130 = scmp.ne.s32.totalorder %s115, %s129
    %p131 = scmp.eq.s32.totalorder %s42, 0
    %p132 = por %p130, %p131
    %s134 = sadd.s32 %s133, 1
    %p137 = scmp.eq.s32.totalorder %s36, 1
    %p138 = scmp.ne.s32.totalorder %s133, %s135
    %p139 = scmp.eq.s32.totalorder %s36, 0
    %p140 = por %p138, %p139
    %p141 = scmp.ne.s32.totalorder %s133, %s135
    %p142 = scmp.eq.s32.totalorder %s41, 1
    %p143 = por %p141, %p142
    %p144 = scmp.ne.s32.totalorder %s135, %s136
    %p145 = scmp.eq.s32.totalorder %s41, 0
    %p146 = por %p144, %p145
    %p147 = scmp.ne.s32.totalorder %s135, %s136
    %p148 = scmp.eq.s32.totalorder %s42, 1
    %p149 = por %p147, %p148
    %p151 = scmp.ne.s32.totalorder %s136, %s150
    %p152 = scmp.eq.s32.totalorder %s42, 0
    %p153 = por %p151, %p152
    %s155 = sadd.s32 %s154, 1
    %p158 = scmp.eq.s32.totalorder %s36, 1
    %p159 = scmp.ne.s32.totalorder %s154, %s156
    %p160 = scmp.eq.s32.totalorder %s36, 0
    %p161 = por %p159, %p160
    %p162 = scmp.ne.s32.totalorder %s154, %s156
    %p163 = scmp.eq.s32.totalorder %s41, 1
    %p164 = por %p162, %p163
    %p165 = scmp.ne.s32.totalorder %s156, %s157
    %p166 = scmp.eq.s32.totalorder %s41, 0
    %p167 = por %p165, %p166
    %p168 = scmp.ne.s32.totalorder %s156, %s157
    %p169 = scmp.eq.s32.totalorder %s42, 1
    %p170 = por %p168, %p169
    %p172 = scmp.ne.s32.totalorder %s157, %s171
    %p173 = scmp.eq.s32.totalorder %s42, 0
    %p174 = por %p172, %p173
    %s176 = sadd.s32 %s175, 1
    %p179 = scmp.eq.s32.totalorder %s36, 1
    %p180 = scmp.ne.s32.totalorder %s175, %s177
    %p181 = scmp.eq.s32.totalorder %s36, 0
    %p182 = por %p180, %p181
    %p183 = scmp.ne.s32.totalorder %s175, %s177
    %p184 = scmp.eq.s32.totalorder %s41, 1
    %p185 = por %p183, %p184
    %p186 = scmp.ne.s32.totalorder %s177, %s178
    %p187 = scmp.eq.s32.totalorder %s41, 0
    %p188 = por %p186, %p187
    %p189 = scmp.ne.s32.totalorder %s177, %s178
    %p190 = scmp.eq.s32.totalorder %s42, 1
    %p191 = por %p189, %p190
    %p193 = scmp.ne.s32.totalorder %s178, %s192
    %p194 = scmp.eq.s32.totalorder %s42, 0
    %p195 = por %p193, %p194
    %s197 = sadd.s32 %s196, 1
    %p200 = scmp.eq.s32.totalorder %s36, 1
    %p201 = scmp.ne.s32.totalorder %s196, %s198
    %p202 = scmp.eq.s32.totalorder %s36, 0
    %p203 = por %p201, %p202
    %p204 = scmp.ne.s32.totalorder %s196, %s198
    %p205 = scmp.eq.s32.totalorder %s41, 1
    %p206 = por %p204, %p205
    %p207 = scmp.ne.s32.totalorder %s198, %s199
    %p208 = scmp.eq.s32.totalorder %s41, 0
    %p209 = por %p207, %p208
    %p210 = scmp.ne.s32.totalorder %s198, %s199
    %p211 = scmp.eq.s32.totalorder %s42, 1
    %p212 = por %p210, %p211
    %p214 = scmp.ne.s32.totalorder %s199, %s213
    %p215 = scmp.eq.s32.totalorder %s42, 0
    %p216 = por %p214, %p215
    %s218 = sadd.s32 %s217, 1
    %p221 = scmp.eq.s32.totalorder %s36, 1
    %p222 = scmp.ne.s32.totalorder %s217, %s219
    %p223 = scmp.eq.s32.totalorder %s36, 0
    %p224 = por %p222, %p223
    %p225 = scmp.ne.s32.totalorder %s217, %s219
    %p226 = scmp.eq.s32.totalorder %s41, 1
    %p227 = por %p225, %p226
    %p228 = scmp.ne.s32.totalorder %s219, %s220
    %p229 = scmp.eq.s32.totalorder %s41, 0
    %p230 = por %p228, %p229
    %p231 = scmp.ne.s32.totalorder %s219, %s220
    %p232 = scmp.eq.s32.totalorder %s42, 1
    %p233 = por %p231, %p232
    %p235 = scmp.ne.s32.totalorder %s220, %s234
    %p236 = scmp.eq.s32.totalorder %s42, 0
    %p237 = por %p235, %p236
    %s239 = sadd.s32 %s238, 1
    %p242 = scmp.eq.s32.totalorder %s36, 1
    %p243 = scmp.ne.s32.totalorder %s238, %s240
    %p244 = scmp.eq.s32.totalorder %s36, 0
    %p245 = por %p243, %p244
    %p246 = scmp.ne.s32.totalorder %s238, %s240
    %p247 = scmp.eq.s32.totalorder %s41, 1
    %p248 = por %p246, %p247
    %p249 = scmp.ne.s32.totalorder %s240, %s241
    %p250 = scmp.eq.s32.totalorder %s41, 0
    %p251 = por %p249, %p250
    %p252 = scmp.ne.s32.totalorder %s240, %s241
    %p253 = scmp.eq.s32.totalorder %s42, 1
    %p254 = por %p252, %p253
    %p256 = scmp.ne.s32.totalorder %s241, %s255
    %p257 = scmp.eq.s32.totalorder %s42, 0
    %p258 = por %p256, %p257
    %s260 = sadd.s32 %s259, 1
    %p263 = scmp.eq.s32.totalorder %s36, 1
    %p264 = scmp.ne.s32.totalorder %s259, %s261
    %p265 = scmp.eq.s32.totalorder %s36, 0
    %p266 = por %p264, %p265
    %p267 = scmp.ne.s32.totalorder %s259, %s261
    %p268 = scmp.eq.s32.totalorder %s41, 1
    %p269 = por %p267, %p268
    %p270 = scmp.ne.s32.totalorder %s261, %s262
    %p271 = scmp.eq.s32.totalorder %s41, 0
    %p272 = por %p270, %p271
    %p273 = scmp.ne.s32.totalorder %s261, %s262
    %p274 = scmp.eq.s32.totalorder %s42, 1
    %p275 = por %p273, %p274
    %p277 = scmp.ne.s32.totalorder %s262, %s276
    %p278 = scmp.eq.s32.totalorder %s42, 0
    %p279 = por %p277, %p278
    %s281 = sadd.s32 %s280, 1
    %p284 = scmp.eq.s32.totalorder %s36, 1
    %p285 = scmp.ne.s32.totalorder %s280, %s282
    %p286 = scmp.eq.s32.totalorder %s36, 0
    %p287 = por %p285, %p286
    %p288 = scmp.ne.s32.totalorder %s280, %s282
    %p289 = scmp.eq.s32.totalorder %s41, 1
    %p290 = por %p288, %p289
    %p291 = scmp.ne.s32.totalorder %s282, %s283
    %p292 = scmp.eq.s32.totalorder %s41, 0
    %p293 = por %p291, %p292
    %p294 = scmp.ne.s32.totalorder %s282, %s283
    %p295 = scmp.eq.s32.totalorder %s42, 1
    %p296 = por %p294, %p295
    %p298 = scmp.ne.s32.totalorder %s283, %s297
    %p299 = scmp.eq.s32.totalorder %s42, 0
    %p300 = por %p298, %p299
    %s302 = sadd.s32 %s301, 1
    %p305 = scmp.eq.s32.totalorder %s36, 1
    %p306 = scmp.ne.s32.totalorder %s301, %s303
    %p307 = scmp.eq.s32.totalorder %s36, 0
    %p308 = por %p306, %p307
    %p309 = scmp.ne.s32.totalorder %s301, %s303
    %p310 = scmp.eq.s32.totalorder %s41, 1
    %p311 = por %p309, %p310
    %p312 = scmp.ne.s32.totalorder %s303, %s304
    %p313 = scmp.eq.s32.totalorder %s41, 0
    %p314 = por %p312, %p313
    %p315 = scmp.ne.s32.totalorder %s303, %s304
    %p316 = scmp.eq.s32.totalorder %s42, 1
    %p317 = por %p315, %p316
    %p319 = scmp.ne.s32.totalorder %s304, %s318
    %p320 = scmp.eq.s32.totalorder %s42, 0
    %p321 = por %p319, %p320
    %s323 = sadd.s32 %s322, 1
    %p326 = scmp.eq.s32.totalorder %s36, 1
    %p327 = scmp.ne.s32.totalorder %s322, %s324
    %p328 = scmp.eq.s32.totalorder %s36, 0
    %p329 = por %p327, %p328
    %p330 = scmp.ne.s32.totalorder %s322, %s324
    %p331 = scmp.eq.s32.totalorder %s41, 1
    %p332 = por %p330, %p331
    %p333 = scmp.ne.s32.totalorder %s324, %s325
    %p334 = scmp.eq.s32.totalorder %s41, 0
    %p335 = por %p333, %p334
    %p336 = scmp.ne.s32.totalorder %s324, %s325
    %p337 = scmp.eq.s32.totalorder %s42, 1
    %p338 = por %p336, %p337
    %p340 = scmp.ne.s32.totalorder %s325, %s339
    %p341 = scmp.eq.s32.totalorder %s42, 0
    %p342 = por %p340, %p341
    %s344 = sadd.s32 %s343, 1
    %p347 = scmp.eq.s32.totalorder %s36, 1
    %p348 = scmp.ne.s32.totalorder %s343, %s345
    %p349 = scmp.eq.s32.totalorder %s36, 0
    %p350 = por %p348, %p349
    %p351 = scmp.ne.s32.totalorder %s343, %s345
    %p352 = scmp.eq.s32.totalorder %s41, 1
    %p353 = por %p351, %p352
    %p354 = scmp.ne.s32.totalorder %s345, %s346
    %p355 = scmp.eq.s32.totalorder %s41, 0
    %p356 = por %p354, %p355
    %p357 = scmp.ne.s32.totalorder %s345, %s346
    %p358 = scmp.eq.s32.totalorder %s42, 1
    %p359 = por %p357, %p358
    %p361 = scmp.ne.s32.totalorder %s346, %s360
    %p362 = scmp.eq.s32.totalorder %s42, 0
    %p363 = por %p361, %p362
    %s365 = sadd.s32 %s364, 1
    %p368 = scmp.eq.s32.totalorder %s36, 1
    %p369 = scmp.ne.s32.totalorder %s364, %s366
    %p370 = scmp.eq.s32.totalorder %s36, 0
    %p371 = por %p369, %p370
    %p372 = scmp.ne.s32.totalorder %s364, %s366
    %p373 = scmp.eq.s32.totalorder %s41, 1
    %p374 = por %p372, %p373
    %p375 = scmp.ne.s32.totalorder %s366, %s367
    %p376 = scmp.eq.s32.totalorder %s41, 0
    %p377 = por %p375, %p376
    %p378 = scmp.ne.s32.totalorder %s366, %s367
    %p379 = scmp.eq.s32.totalorder %s42, 1
    %p380 = por %p378, %p379
    %p382 = scmp.ne.s32.totalorder %s367, %s381
    %p383 = scmp.eq.s32.totalorder %s42, 0
    %p384 = por %p382, %p383
    %s386 = sadd.s32 %s385, 1
    %p389 = scmp.eq.s32.totalorder %s36, 1
    %p390 = scmp.ne.s32.totalorder %s385, %s387
    %p391 = scmp.eq.s32.totalorder %s36, 0
    %p392 = por %p390, %p391
    %p393 = scmp.ne.s32.totalorder %s385, %s387
    %p394 = scmp.eq.s32.totalorder %s41, 1
    %p395 = por %p393, %p394
    %p396 = scmp.ne.s32.totalorder %s387, %s388
    %p397 = scmp.eq.s32.totalorder %s41, 0
    %p398 = por %p396, %p397
    %p399 = scmp.ne.s32.totalorder %s387, %s388
    %p400 = scmp.eq.s32.totalorder %s42, 1
    %p401 = por %p399, %p400
    %p403 = scmp.ne.s32.totalorder %s388, %s402
    %p404 = scmp.eq.s32.totalorder %s42, 0
    %p405 = por %p403, %p404
    %s407 = sadd.s32 %s406, 1
    %p410 = scmp.eq.s32.totalorder %s36, 1
    %p411 = scmp.ne.s32.totalorder %s406, %s408
    %p412 = scmp.eq.s32.totalorder %s36, 0
    %p413 = por %p411, %p412
    %p414 = scmp.ne.s32.totalorder %s406, %s408
    %p415 = scmp.eq.s32.totalorder %s41, 1
    %p416 = por %p414, %p415
    %p417 = scmp.ne.s32.totalorder %s408, %s409
    %p418 = scmp.eq.s32.totalorder %s41, 0
    %p419 = por %p417, %p418
    %p420 = scmp.ne.s32.totalorder %s408, %s409
    %p421 = scmp.eq.s32.totalorder %s42, 1
    %p422 = por %p420, %p421
    %p424 = scmp.ne.s32.totalorder %s409, %s423
    %p425 = scmp.eq.s32.totalorder %s42, 0
    %p426 = por %p424, %p425
    %s428 = sadd.s32 %s427, 1
    %p431 = scmp.eq.s32.totalorder %s36, 1
    %p432 = scmp.ne.s32.totalorder %s427, %s429
    %p433 = scmp.eq.s32.totalorder %s36, 0
    %p434 = por %p432, %p433
    %p435 = scmp.ne.s32.totalorder %s427, %s429
    %p436 = scmp.eq.s32.totalorder %s41, 1
    %p437 = por %p435, %p436
    %p438 = scmp.ne.s32.totalorder %s429, %s430
    %p439 = scmp.eq.s32.totalorder %s41, 0
    %p440 = por %p438, %p439
    %p441 = scmp.ne.s32.totalorder %s429, %s430
    %p442 = scmp.eq.s32.totalorder %s42, 1
    %p443 = por %p441, %p442
    %p445 = scmp.ne.s32.totalorder %s430, %s444
    %p446 = scmp.eq.s32.totalorder %s42, 0
    %p447 = por %p445, %p446
    %s449 = sadd.s32 %s448, 1
    %p452 = scmp.eq.s32.totalorder %s36, 1
    %p453 = scmp.ne.s32.totalorder %s448, %s450
    %p454 = scmp.eq.s32.totalorder %s36, 0
    %p455 = por %p453, %p454
    %p456 = scmp.ne.s32.totalorder %s448, %s450
    %p457 = scmp.eq.s32.totalorder %s41, 1
    %p458 = por %p456, %p457
    %p459 = scmp.ne.s32.totalorder %s450, %s451
    %p460 = scmp.eq.s32.totalorder %s41, 0
    %p461 = por %p459, %p460
    %p462 = scmp.ne.s32.totalorder %s450, %s451
    %p463 = scmp.eq.s32.totalorder %s42, 1
    %p464 = por %p462, %p463
    %p466 = scmp.ne.s32.totalorder %s451, %s465
    %p467 = scmp.eq.s32.totalorder %s42, 0
    %p468 = por %p466, %p467
    %s470 = sadd.s32 %s469, 1
    %p473 = scmp.eq.s32.totalorder %s36, 1
    %p474 = scmp.ne.s32.totalorder %s469, %s471
    %p475 = scmp.eq.s32.totalorder %s36, 0
    %p476 = por %p474, %p475
    %p477 = scmp.ne.s32.totalorder %s469, %s471
    %p478 = scmp.eq.s32.totalorder %s41, 1
    %p479 = por %p477, %p478
    %p480 = scmp.ne.s32.totalorder %s471, %s472
    %p481 = scmp.eq.s32.totalorder %s41, 0
    %p482 = por %p480, %p481
    %p483 = scmp.ne.s32.totalorder %s471, %s472
    %p484 = scmp.eq.s32.totalorder %s42, 1
    %p485 = por %p483, %p484
    %p487 = scmp.ne.s32.totalorder %s472, %s486
    %p488 = scmp.eq.s32.totalorder %s42, 0
    %p489 = por %p487, %p488
    %s491 = sadd.s32 %s490, 1
    %p494 = scmp.eq.s32.totalorder %s36, 1
    %p495 = scmp.ne.s32.totalorder %s490, %s492
    %p496 = scmp.eq.s32.totalorder %s36, 0
    %p497 = por %p495, %p496
    %p498 = scmp.ne.s32.totalorder %s490, %s492
    %p499 = scmp.eq.s32.totalorder %s41, 1
    %p500 = por %p498, %p499
    %p501 = scmp.ne.s32.totalorder %s492, %s493
    %p502 = scmp.eq.s32.totalorder %s41, 0
    %p503 = por %p501, %p502
    %p504 = scmp.ne.s32.totalorder %s492, %s493
    %p505 = scmp.eq.s32.totalorder %s42, 1
    %p506 = por %p504, %p505
    %p508 = scmp.ne.s32.totalorder %s493, %s507
    %p509 = scmp.eq.s32.totalorder %s42, 0
    %p510 = por %p508, %p509
    %s512 = sadd.s32 %s511, 1
    %p515 = scmp.eq.s32.totalorder %s36, 1
    %p516 = scmp.ne.s32.totalorder %s511, %s513
    %p517 = scmp.eq.s32.totalorder %s36, 0
    %p518 = por %p516, %p517
    %p519 = scmp.ne.s32.totalorder %s511, %s513
    %p520 = scmp.eq.s32.totalorder %s41, 1
    %p521 = por %p519, %p520
    %p522 = scmp.ne.s32.totalorder %s513, %s514
    %p523 = scmp.eq.s32.totalorder %s41, 0
    %p524 = por %p522, %p523
    %p525 = scmp.ne.s32.totalorder %s513, %s514
    %p526 = scmp.eq.s32.totalorder %s42, 1
    %p527 = por %p525, %p526
    %p529 = scmp.ne.s32.totalorder %s514, %s528
    %p530 = scmp.eq.s32.totalorder %s42, 0
    %p531 = por %p529, %p530
    %s533 = sadd.s32 %s532, 1
    %p536 = scmp.eq.s32.totalorder %s36, 1
    %p537 = scmp.ne.s32.totalorder %s532, %s534
    %p538 = scmp.eq.s32.totalorder %s36, 0
    %p539 = por %p537, %p538
    %p540 = scmp.ne.s32.totalorder %s532, %s534
    %p541 = scmp.eq.s32.totalorder %s41, 1
    %p542 = por %p540, %p541
    %p543 = scmp.ne.s32.totalorder %s534, %s535
    %p544 = scmp.eq.s32.totalorder %s41, 0
    %p545 = por %p543, %p544
    %p546 = scmp.ne.s32.totalorder %s534, %s535
    %p547 = scmp.eq.s32.totalorder %s42, 1
    %p548 = por %p546, %p547
    %p550 = scmp.ne.s32.totalorder %s535, %s549
    %p551 = scmp.eq.s32.totalorder %s42, 0
    %p552 = por %p550, %p551
    %s554 = sadd.s32 %s553, 1
    %p557 = scmp.eq.s32.totalorder %s36, 1
    %p558 = scmp.ne.s32.totalorder %s553, %s555
    %p559 = scmp.eq.s32.totalorder %s36, 0
    %p560 = por %p558, %p559
    %p561 = scmp.ne.s32.totalorder %s553, %s555
    %p562 = scmp.eq.s32.totalorder %s41, 1
    %p563 = por %p561, %p562
    %p564 = scmp.ne.s32.totalorder %s555, %s556
    %p565 = scmp.eq.s32.totalorder %s41, 0
    %p566 = por %p564, %p565
    %p567 = scmp.ne.s32.totalorder %s555, %s556
    %p568 = scmp.eq.s32.totalorder %s42, 1
    %p569 = por %p567, %p568
    %p571 = scmp.ne.s32.totalorder %s556, %s570
    %p572 = scmp.eq.s32.totalorder %s42, 0
    %p573 = por %p571, %p572
    %s575 = sadd.s32 %s574, 1
    %p578 = scmp.eq.s32.totalorder %s36, 1
    %p579 = scmp.ne.s32.totalorder %s574, %s576
    %p580 = scmp.eq.s32.totalorder %s36, 0
    %p581 = por %p579, %p580
    %p582 = scmp.ne.s32.totalorder %s574, %s576
    %p583 = scmp.eq.s32.totalorder %s41, 1
    %p584 = por %p582, %p583
    %p585 = scmp.ne.s32.totalorder %s576, %s577
    %p586 = scmp.eq.s32.totalorder %s41, 0
    %p587 = por %p585, %p586
    %p588 = scmp.ne.s32.totalorder %s576, %s577
    %p589 = scmp.eq.s32.totalorder %s42, 1
    %p590 = por %p588, %p589
    %p592 = scmp.ne.s32.totalorder %s577, %s591
    %p593 = scmp.eq.s32.totalorder %s42, 0
    %p594 = por %p592, %p593
    %s595 = ssub.s32 %s36, %s43
    %p596 = scmp.eq.s32.totalorder %s595, 0
    %s598 = sadd.s32 %s597, 1
    %s599 = scalar_select %p596, %s597, %s598
    %p602 = pneg %p596
    %p603 = scmp.eq.s32.totalorder %s36, 1
    %p604 = por %p602, %p603
    %p605 = scmp.ne.s32.totalorder %s597, %s600
    %p606 = scmp.eq.s32.totalorder %s36, 0
    %p607 = por %p605, %p606
    %p608 = scmp.ne.s32.totalorder %s597, %s600
    %p609 = scmp.eq.s32.totalorder %s41, 1
    %p610 = por %p608, %p609
    %p611 = scmp.ne.s32.totalorder %s600, %s601
    %p612 = scmp.eq.s32.totalorder %s41, 0
    %p613 = por %p611, %p612
    %p614 = scmp.ne.s32.totalorder %s600, %s601
    %p615 = scmp.eq.s32.totalorder %s42, 1
    %p616 = por %p614, %p615
    %p618 = scmp.ne.s32.totalorder %s601, %s617
    %p619 = scmp.eq.s32.totalorder %s42, 0
    %p620 = por %p618, %p619
    %p621 = scmp.le.s32.totalorder 1, %s36
    %p622 = scmp.lt.s32.totalorder %s36, 3
    %p623 = pnand %p621, %p622
    %p624 = pneg %p623
    // Predicated region
    $region9: #{discriminator_forward.1} parent=5 // pred_check
      _
    $region10: #{discriminator_forward.1} parent=5 // pred_check_branch
      %626 = sbr.rel (%p623) target = $region12
    $region11: #{discriminator_forward.1} parent=5 // pred_region
      %s627 = ssub.s32 %s36, 1
      // Predicated region
      $region13: #{discriminator_forward.1} parent=11 // pred_check
        %p628 = pneg %p83
      $region14: #{discriminator_forward.1} parent=11 // pred_check_branch
        %630 = sbr.rel (%p628) target = $region16
      $region15: #{discriminator_forward.1} parent=11 // pred_region
        _
      $region16: #{discriminator_forward.1} parent=11 // pred_fallthru
        _
      // Predicated region
      $region17: #{discriminator_forward.1} parent=11 // pred_check
        %p631 = pneg %p104
      $region18: #{discriminator_forward.1} parent=11 // pred_check_branch
        %633 = sbr.rel (%p631) target = $region20
      $region19: #{discriminator_forward.1} parent=11 // pred_region
        _
      $region20: #{discriminator_forward.1} parent=11 // pred_fallthru
        _
      // Predicated region
      $region21: #{discriminator_forward.1} parent=11 // pred_check
        %p634 = pneg %p125
      $region22: #{discriminator_forward.1} parent=11 // pred_check_branch
        %636 = sbr.rel (%p634) target = $region24
      $region23: #{discriminator_forward.1} parent=11 // pred_region
        _
      $region24: #{discriminator_forward.1} parent=11 // pred_fallthru
        _
      // Predicated region
      $region25: #{discriminator_forward.1} parent=11 // pred_check
        %p637 = pneg %p146
      $region26: #{discriminator_forward.1} parent=11 // pred_check_branch
        %639 = sbr.rel (%p637) target = $region28
      $region27: #{discriminator_forward.1} parent=11 // pred_region
        _
      $region28: #{discriminator_forward.1} parent=11 // pred_fallthru
        _
      // Predicated region
      $region29: #{discriminator_forward.1} parent=11 // pred_check
        %p640 = pneg %p167
      $region30: #{discriminator_forward.1} parent=11 // pred_check_branch
        %642 = sbr.rel (%p640) target = $region32
      $region31: #{discriminator_forward.1} parent=11 // pred_region
        _
      $region32: #{discriminator_forward.1} parent=11 // pred_fallthru
        _
      // Predicated region
      $region33: #{discriminator_forward.1} parent=11 // pred_check
        %p643 = pneg %p188
      $region34: #{discriminator_forward.1} parent=11 // pred_check_branch
        %645 = sbr.rel (%p643) target = $region36
      $region35: #{discriminator_forward.1} parent=11 // pred_region
        _
      $region36: #{discriminator_forward.1} parent=11 // pred_fallthru
        _
      // Predicated region
      $region37: #{discriminator_forward.1} parent=11 // pred_check
        %p646 = pneg %p209
      $region38: #{discriminator_forward.1} parent=11 // pred_check_branch
        %648 = sbr.rel (%p646) target = $region40
      $region39: #{discriminator_forward.1} parent=11 // pred_region
        _
      $region40: #{discriminator_forward.1} parent=11 // pred_fallthru
        _
      // Predicated region
      $region41: #{discriminator_forward.1} parent=11 // pred_check
        %p649 = pneg %p230
      $region42: #{discriminator_forward.1} parent=11 // pred_check_branch
        %651 = sbr.rel (%p649) target = $region44
      $region43: #{discriminator_forward.1} parent=11 // pred_region
        _
      $region44: #{discriminator_forward.1} parent=11 // pred_fallthru
        _
      // Predicated region
      $region45: #{discriminator_forward.1} parent=11 // pred_check
        %p652 = pneg %p251
      $region46: #{discriminator_forward.1} parent=11 // pred_check_branch
        %654 = sbr.rel (%p652) target = $region48
      $region47: #{discriminator_forward.1} parent=11 // pred_region
        _
      $region48: #{discriminator_forward.1} parent=11 // pred_fallthru
        _
      // Predicated region
      $region49: #{discriminator_forward.1} parent=11 // pred_check
        %p655 = pneg %p272
      $region50: #{discriminator_forward.1} parent=11 // pred_check_branch
        %657 = sbr.rel (%p655) target = $region52
      $region51: #{discriminator_forward.1} parent=11 // pred_region
        _
      $region52: #{discriminator_forward.1} parent=11 // pred_fallthru
        _
      // Predicated region
      $region53: #{discriminator_forward.1} parent=11 // pred_check
        %p658 = pneg %p293
      $region54: #{discriminator_forward.1} parent=11 // pred_check_branch
        %660 = sbr.rel (%p658) target = $region56
      $region55: #{discriminator_forward.1} parent=11 // pred_region
        _
      $region56: #{discriminator_forward.1} parent=11 // pred_fallthru
        _
      // Predicated region
      $region57: #{discriminator_forward.1} parent=11 // pred_check
        %p661 = pneg %p314
      $region58: #{discriminator_forward.1} parent=11 // pred_check_branch
        %663 = sbr.rel (%p661) target = $region60
      $region59: #{discriminator_forward.1} parent=11 // pred_region
        _
      $region60: #{discriminator_forward.1} parent=11 // pred_fallthru
        _
      // Predicated region
      $region61: #{discriminator_forward.1} parent=11 // pred_check
        %p664 = pneg %p335
      $region62: #{discriminator_forward.1} parent=11 // pred_check_branch
        %666 = sbr.rel (%p664) target = $region64
      $region63: #{discriminator_forward.1} parent=11 // pred_region
        _
      $region64: #{discriminator_forward.1} parent=11 // pred_fallthru
        _
      // Predicated region
      $region65: #{discriminator_forward.1} parent=11 // pred_check
        %p667 = pneg %p356
      $region66: #{discriminator_forward.1} parent=11 // pred_check_branch
        %669 = sbr.rel (%p667) target = $region68
      $region67: #{discriminator_forward.1} parent=11 // pred_region
        _
      $region68: #{discriminator_forward.1} parent=11 // pred_fallthru
        _
      // Predicated region
      $region69: #{discriminator_forward.1} parent=11 // pred_check
        %p670 = pneg %p377
      $region70: #{discriminator_forward.1} parent=11 // pred_check_branch
        %672 = sbr.rel (%p670) target = $region72
      $region71: #{discriminator_forward.1} parent=11 // pred_region
        _
      $region72: #{discriminator_forward.1} parent=11 // pred_fallthru
        _
      // Predicated region
      $region73: #{discriminator_forward.1} parent=11 // pred_check
        %p673 = pneg %p398
      $region74: #{discriminator_forward.1} parent=11 // pred_check_branch
        %675 = sbr.rel (%p673) target = $region76
      $region75: #{discriminator_forward.1} parent=11 // pred_region
        _
      $region76: #{discriminator_forward.1} parent=11 // pred_fallthru
        _
      // Predicated region
      $region77: #{discriminator_forward.1} parent=11 // pred_check
        %p676 = pneg %p419
      $region78: #{discriminator_forward.1} parent=11 // pred_check_branch
        %678 = sbr.rel (%p676) target = $region80
      $region79: #{discriminator_forward.1} parent=11 // pred_region
        _
      $region80: #{discriminator_forward.1} parent=11 // pred_fallthru
        _
      // Predicated region
      $region81: #{discriminator_forward.1} parent=11 // pred_check
        %p679 = pneg %p440
      $region82: #{discriminator_forward.1} parent=11 // pred_check_branch
        %681 = sbr.rel (%p679) target = $region84
      $region83: #{discriminator_forward.1} parent=11 // pred_region
        _
      $region84: #{discriminator_forward.1} parent=11 // pred_fallthru
        _
      // Predicated region
      $region85: #{discriminator_forward.1} parent=11 // pred_check
        %p682 = pneg %p461
      $region86: #{discriminator_forward.1} parent=11 // pred_check_branch
        %684 = sbr.rel (%p682) target = $region88
      $region87: #{discriminator_forward.1} parent=11 // pred_region
        _
      $region88: #{discriminator_forward.1} parent=11 // pred_fallthru
        _
      // Predicated region
      $region89: #{discriminator_forward.1} parent=11 // pred_check
        %p685 = pneg %p482
      $region90: #{discriminator_forward.1} parent=11 // pred_check_branch
        %687 = sbr.rel (%p685) target = $region92
      $region91: #{discriminator_forward.1} parent=11 // pred_region
        _
      $region92: #{discriminator_forward.1} parent=11 // pred_fallthru
        _
      // Predicated region
      $region93: #{discriminator_forward.1} parent=11 // pred_check
        %p688 = pneg %p503
      $region94: #{discriminator_forward.1} parent=11 // pred_check_branch
        %690 = sbr.rel (%p688) target = $region96
      $region95: #{discriminator_forward.1} parent=11 // pred_region
        _
      $region96: #{discriminator_forward.1} parent=11 // pred_fallthru
        _
      // Predicated region
      $region97: #{discriminator_forward.1} parent=11 // pred_check
        %p691 = pneg %p524
      $region98: #{discriminator_forward.1} parent=11 // pred_check_branch
        %693 = sbr.rel (%p691) target = $region100
      $region99: #{discriminator_forward.1} parent=11 // pred_region
        _
      $region100: #{discriminator_forward.1} parent=11 // pred_fallthru
        _
      // Predicated region
      $region101: #{discriminator_forward.1} parent=11 // pred_check
        %p694 = pneg %p545
      $region102: #{discriminator_forward.1} parent=11 // pred_check_branch
        %696 = sbr.rel (%p694) target = $region104
      $region103: #{discriminator_forward.1} parent=11 // pred_region
        _
      $region104: #{discriminator_forward.1} parent=11 // pred_fallthru
        _
      // Predicated region
      $region105: #{discriminator_forward.1} parent=11 // pred_check
        %p697 = pneg %p566
      $region106: #{discriminator_forward.1} parent=11 // pred_check_branch
        %699 = sbr.rel (%p697) target = $region108
      $region107: #{discriminator_forward.1} parent=11 // pred_region
        _
      $region108: #{discriminator_forward.1} parent=11 // pred_fallthru
        _
      // Predicated region
      $region109: #{discriminator_forward.1} parent=11 // pred_check
        %p700 = pneg %p587
      $region110: #{discriminator_forward.1} parent=11 // pred_check_branch
        %702 = sbr.rel (%p700) target = $region112
      $region111: #{discriminator_forward.1} parent=11 // pred_region
        _
      $region112: #{discriminator_forward.1} parent=11 // pred_fallthru
        _
    $region12: #{discriminator_forward.1} parent=5 // pred_fallthru
      _
    %p703 = scmp.lt.s32.totalorder %s36, 2
    // Predicated region
    $region113: #{discriminator_forward.1} parent=5 // pred_check
      %p704 = pneg %p703
    $region114: #{discriminator_forward.1} parent=5 // pred_check_branch
      %706 = sbr.rel (%p704) target = $region116
    $region115: #{discriminator_forward.1} parent=5 // pred_region
      // Predicated region
      $region117: #{discriminator_forward.1} parent=115 // pred_check
        %p707 = pneg %p56
      $region118: #{discriminator_forward.1} parent=115 // pred_check_branch
        %709 = sbr.rel (%p707) target = $region120
      $region119: #{discriminator_forward.1} parent=115 // pred_region
        %s710 = smul.u32 8, %s36
        %p711 = scmp.lt.s32.totalorder %s710, 15
        %s712 = scalar_select %p711, %s710, 15
        %s713 = smul.addr %s712, 4
        %s714 = scalar_lea.vmem %s0, %s713
        %s715 = smul.u32 8, %s36
      $region120: #{discriminator_forward.1} parent=115 // pred_fallthru
        _
    $region116: #{discriminator_forward.1} parent=5 // pred_fallthru
      _
    %p716 = scmp.le.s32.totalorder 1, %s36
    %p717 = scmp.lt.s32.totalorder %s36, 3
    %p718 = pnand %p716, %p717
    %p719 = pneg %p718
    // Predicated region
    $region121: #{discriminator_forward.1} parent=5 // pred_check
      _
    $region122: #{discriminator_forward.1} parent=5 // pred_check_branch
      %721 = sbr.rel (%p718) target = $region124
    $region123: #{discriminator_forward.1} parent=5 // pred_region
      %s722 = ssub.s32 %s36, 1
      %s723 = smul.u32 8, %s41
      %p724 = scmp.lt.s32.totalorder %s723, 15
      %s725 = scalar_select %p724, %s723, 15
      %s726 = smul.addr %s725, 4
      %s727 = scalar_lea.vmem %s0, %s726
      %p728 = pneg %p62
      %p729 = pneg %p59
      %p730 = pneg %p83
      %p731 = pneg %p80
      %p732 = pneg %p104
      %p733 = pneg %p101
      %p734 = pneg %p125
      %p735 = pneg %p122
      %p736 = pneg %p146
      %p737 = pneg %p143
      %p738 = pneg %p167
      %p739 = pneg %p164
      %p740 = pneg %p188
      %p741 = pneg %p185
      %p742 = pneg %p209
      %p743 = pneg %p206
      %p744 = pneg %p230
      %p745 = pneg %p227
      %p746 = pneg %p251
      %p747 = pneg %p248
      %p748 = pneg %p272
      %p749 = pneg %p269
      %p750 = pneg %p293
      %p751 = pneg %p290
      %p752 = pneg %p314
      %p753 = pneg %p311
      %p754 = pneg %p335
      %p755 = pneg %p332
      %p756 = pneg %p356
      %p757 = pneg %p353
      %p758 = pneg %p377
      %p759 = pneg %p374
      %p760 = pneg %p398
      %p761 = pneg %p395
      %p762 = pneg %p419
      %p763 = pneg %p416
      %p764 = pneg %p440
      %p765 = pneg %p437
      %p766 = pneg %p461
      %p767 = pneg %p458
      %p768 = pneg %p482
      %p769 = pneg %p479
      %p770 = pneg %p503
      %p771 = pneg %p500
      %p772 = pneg %p524
      %p773 = pneg %p521
      %p774 = pneg %p545
      %p775 = pneg %p542
      %p776 = pneg %p566
      %p777 = pneg %p563
      %p778 = pneg %p587
      %p779 = pneg %p584
      %p780 = pneg %p613
      %p781 = pneg %p610
      %p782 = scmp.lt.s32.totalorder %s41, 1
      %s783 = scalar_select %p782, %s41, 1
      %s784 = smul.addr %s783, 8
      %s785 = scalar_lea.vmem %s26, %s784
      %s786 = smul.u32 8, %s41
      %p787 = scmp.lt.s32.totalorder %s786, 15
      %s788 = scalar_select %p787, %s786, 15
      %s789 = smul.addr %s788, 4
      %s790 = scalar_lea.vmem %s0, %s789
      %s791 = smul.u32 8, %s41
      %p792 = scmp.lt.s32.totalorder %s41, 1
      %s793 = scalar_select %p792, %s41, 1
      %s794 = smul.addr %s793, 8
      %s795 = scalar_lea.vmem %s26, %s794
      %v797 = vld [vmem:[%s790] sm:$0xf]
      %v798 = vld [vmem:[%s790 + $0x4] sm:$0xf]
      %v799 = vld [vmem:[%s790 + $0x8] sm:$0xf]
      %v800 = vld [vmem:[%s790 + $0xc] sm:$0xf]
      %v801 = vld [vmem:[%s790 + $0x10] sm:$0xf]
      %v802 = vld [vmem:[%s790 + $0x14] sm:$0xf]
      %v803 = vld [vmem:[%s790 + $0x18] sm:$0xf]
      %v804 = vld [vmem:[%s790 + $0x1c] sm:$0xf]
      %v805 = vld [vmem:[%s1] sm:$0xf]
      %v806 = vld [vmem:[%s1 + $0x4] sm:$0xf]
      %v807 = vld [vmem:[%s1 + $0x8] sm:$0xf]
      %v808 = vld [vmem:[%s1 + $0xc] sm:$0x3]
      %v809 = vld [vmem:[%s2] sm:$0x1]
      %v811 = vlaneseq
      %v812 = vshrl.u32 %v811, 7
      %v813 = vsub.s32 0, %v812
      %v814 = vrot.slane %v809, %v813
      %v824 = vunpack.c.l.b16 %v797
      %v825 = vunpack.c.l.b16 %v798
      %v826 = vunpack.c.l.b16 %v799
      %v827 = vunpack.c.l.b16 %v800
      %v828 = vunpack.c.l.b16 %v801
      %v829 = vunpack.c.l.b16 %v802
      %v830 = vunpack.c.l.b16 %v803
      %v831 = vunpack.c.l.b16 %v804
      %v832 = vpack.c.b16 %v825, %v824
      %v833 = vpack.c.b16 %v827, %v826
      %v834 = vpack.c.b16 %v829, %v828
      %v835 = vpack.c.b16 %v831, %v830
      %v840 = vunpack.c.l.b16 %v805
      %v841 = vunpack.c.l.b16 %v806
      %v842 = vunpack.c.l.b16 %v807
      %v843 = vunpack.c.l.b16 %v808
      %v844 = vpack.c.b16 %v841, %v840
      %v845 = vpack.c.b16 %v843, %v842
      %vm847 = vcmask 220160
      %v849 = vsel %vm847, %v832, 0
      %v852 = vsel %vm847, %v833, 0
      %v855 = vsel %vm847, %v834, 0
      %v858 = vsel %vm847, %v835, 0
      %vm860 = vcmask 1044480
      %vm861 = vcmask 1045504
      %v862 = vsel %vm860, 4294967295, 65535
      %v863 = vsel %vm861, %v862, 0
      %v865 = vand.u32 %v845, %v863
      %867 = vmatprep.subr.bf16.mxu0 0
      %868 = vmatpush1.bf16.msra.mxu0 %v844
      %869 = vmatprep.subr.bf16.mxu0 0
      %870 = vmatpush1.bf16.msra.mxu0 %v865
      %871 = vmatprep.subr.bf16.mxu0 0
      %872 = vmatpush1.bf16.msra.mxu0 0
      %873 = vmatprep.subr.bf16.mxu0 0
      %874 = vmatpush1.bf16.msra.mxu0 0
      %875 = vmatprep.subr.bf16.mxu0 0
      %876 = vmatpush1.bf16.msra.mxu0 0
      %877 = vmatprep.subr.bf16.mxu0 0
      %878 = vmatpush1.bf16.msra.mxu0 0
      %879 = vmatprep.subr.bf16.mxu0 0
      %880 = vmatpush1.bf16.msra.mxu0 0
      %881 = vmatprep.subr.bf16.mxu0 0
      %882 = vmatpush1.bf16.msra.mxu0 0
      %883 = vmatprep.subr.bf16.mxu0 0
      %884 = vmatpush1.bf16.msra.mxu0 0
      %885 = vmatprep.subr.bf16.mxu0 0
      %886 = vmatpush1.bf16.msra.mxu0 0
      %887 = vmatprep.subr.bf16.mxu0 0
      %888 = vmatpush1.bf16.msra.mxu0 0
      %889 = vmatprep.subr.bf16.mxu0 0
      %890 = vmatpush1.bf16.msra.mxu0 0
      %891 = vmatprep.subr.bf16.mxu0 0
      %892 = vmatpush1.bf16.msra.mxu0 0
      %893 = vmatprep.subr.bf16.mxu0 0
      %894 = vmatpush1.bf16.msra.mxu0 0
      %895 = vmatprep.subr.bf16.mxu0 0
      %896 = vmatpush1.bf16.msra.mxu0 0
      %897 = vmatprep.subr.bf16.mxu0 0
      %898 = vmatpush1.bf16.msra.mxu0 0
      %899 = vmatprep.mubr.bf16.mxu0 0
      %900 = vmatmul.mubr.bf16.gmra.mrb[0].mxu0 %v849
      %v901 = vpop.f32.mrb[0].mxu0
      %v902 = vadd.f32 %v814, %v901
      %v903 = vpop.f32.mrb[0].mxu0
      %v904 = vpop.f32.mrb[0].mxu0
      %v905 = vadd.f32 %v814, %v904
      %v906 = vpop.f32.mrb[0].mxu0
      %907 = vmatprep.mubr.bf16.mxu0 0
      %908 = vmatmul.mubr.bf16.gmra.mrb[0].mxu0 %v852
      %v909 = vpop.f32.mrb[0].mxu0
      %v910 = vadd.f32 %v814, %v909
      %v911 = vpop.f32.mrb[0].mxu0
      %v912 = vpop.f32.mrb[0].mxu0
      %v913 = vadd.f32 %v814, %v912
      %v914 = vpop.f32.mrb[0].mxu0
      %915 = vmatprep.mubr.bf16.mxu0 0
      %916 = vmatmul.mubr.bf16.gmra.mrb[0].mxu0 %v855
      %v917 = vpop.f32.mrb[0].mxu0
      %v918 = vadd.f32 %v814, %v917
      %v919 = vpop.f32.mrb[0].mxu0
      %v920 = vpop.f32.mrb[0].mxu0
      %v921 = vadd.f32 %v814, %v920
      %v922 = vpop.f32.mrb[0].mxu0
      %923 = vmatprep.mubr.bf16.mxu0 0
      %924 = vmatmul.mubr.bf16.gmra.mrb[0].mxu0 %v858
      %v925 = vpop.f32.mrb[0].mxu0
      %v926 = vadd.f32 %v814, %v925
      %v927 = vpop.f32.mrb[0].mxu0
      %v928 = vpop.f32.mrb[0].mxu0
      %v929 = vadd.f32 %v814, %v928
      %v930 = vpop.f32.mrb[0].mxu0
      %931 = vdwg.mxu0
      %vm932 = vcmp.gt.f32.partialorder %v902, 0.0
      %vm933 = vcmp.gt.f32.partialorder %v905, 0.0
      %vm934 = vcmp.gt.f32.partialorder %v910, 0.0
      %vm935 = vcmp.gt.f32.partialorder %v913, 0.0
      %vm936 = vcmp.gt.f32.partialorder %v918, 0.0
      %vm937 = vcmp.gt.f32.partialorder %v921, 0.0
      %vm938 = vcmp.gt.f32.partialorder %v926, 0.0
      %vm939 = vcmp.gt.f32.partialorder %v929, 0.0
      %v940 = vmul.f32 %v902, 0.2
      %v941 = vmul.f32 %v905, 0.2
      %v942 = vmul.f32 %v910, 0.2
      %v943 = vmul.f32 %v913, 0.2
      %v944 = vmul.f32 %v918, 0.2
      %v945 = vmul.f32 %v921, 0.2
      %v946 = vmul.f32 %v926, 0.2
      %v947 = vmul.f32 %v929, 0.2
      %v948 = vsel %vm932, %v902, %v940
      %v949 = vsel %vm933, %v905, %v941
      %v950 = vsel %vm934, %v910, %v942
      %v951 = vsel %vm935, %v913, %v943
      %v952 = vsel %vm936, %v918, %v944
      %v953 = vsel %vm937, %v921, %v945
      %v954 = vsel %vm938, %v926, %v946
      %v955 = vsel %vm939, %v929, %v947
      %v956 = vpack.c.bf16 %v949, %v948
      %v957 = vpack.c.bf16 %v951, %v950
      %v958 = vpack.c.bf16 %v953, %v952
      %v959 = vpack.c.bf16 %v955, %v954
      %v960 = vld [vmem:[%s3] sm:$0xf]
      %v961 = vld [vmem:[%s3 + $0x4] sm:$0xf]
      %v964 = vunpack.c.l.b16 %v960
      %v965 = vunpack.c.l.b16 %v961
      %v966 = vpack.c.b16 %v965, %v964
      %vm967 = vcmask 523264
      %v969 = vsel %vm967, %v966, 0
      %971 = vmatprep.subr.bf16.mxu0 0
      %972 = vmatpush1.bf16.msra.mxu0 %v956
      %973 = vmatprep.subr.bf16.mxu0 0
      %974 = vmatpush1.bf16.msra.mxu0 %v957
      %975 = vmatprep.subr.bf16.mxu0 0
      %976 = vmatpush1.bf16.msra.mxu0 %v958
      %977 = vmatprep.subr.bf16.mxu0 0
      %978 = vmatpush1.bf16.msra.mxu0 %v959
      %979 = vmatprep.subr.bf16.mxu0 0
      %980 = vmatpush1.bf16.msra.mxu0 0
      %981 = vmatprep.subr.bf16.mxu0 0
      %982 = vmatpush1.bf16.msra.mxu0 0
      %983 = vmatprep.subr.bf16.mxu0 0
      %984 = vmatpush1.bf16.msra.mxu0 0
      %985 = vmatprep.subr.bf16.mxu0 0
      %986 = vmatpush1.bf16.msra.mxu0 0
      %987 = vmatprep.subr.bf16.mxu0 0
      %988 = vmatpush1.bf16.msra.mxu0 0
      %989 = vmatprep.subr.bf16.mxu0 0
      %990 = vmatpush1.bf16.msra.mxu0 0
      %991 = vmatprep.subr.bf16.mxu0 0
      %992 = vmatpush1.bf16.msra.mxu0 0
      %993 = vmatprep.subr.bf16.mxu0 0
      %994 = vmatpush1.bf16.msra.mxu0 0
      %995 = vmatprep.subr.bf16.mxu0 0
      %996 = vmatpush1.bf16.msra.mxu0 0
      %997 = vmatprep.subr.bf16.mxu0 0
      %998 = vmatpush1.bf16.msra.mxu0 0
      %999 = vmatprep.subr.bf16.mxu0 0
      %1000 = vmatpush1.bf16.msra.mxu0 0
      %1001 = vmatprep.subr.bf16.mxu0 0
      %1002 = vmatpush1.bf16.msra.mxu0 0
      %1003 = vmatprep.mubr.bf16.mxu0 0
      %1004 = vmatmul.mubr.bf16.gmra.mrb[0].mxu0 %v969
      %v1005 = vpop.f32.mrb[0].mxu0
      %v1006 = vadd.f32 0.0, %v1005
      %v1007 = vpop.f32.mrb[0].mxu0
      %v1008 = vpop.f32.mrb[0].mxu0
      %v1009 = vadd.f32 0.0, %v1008
      %v1010 = vpop.f32.mrb[0].mxu0
      %1011 = vdwg.mxu0
      %v1012 = vpack.c.bf16 %v1009, %v1006
      %v1013 = vld [vmem:[%s4] sm:$0xf]
      %v1014 = vld [vmem:[%s4 + $0x4] sm:$0xf]
      %s1015 = scalar_lea.vmem %s3, 8
      %v1016 = vld [vmem:[%s1015] sm:$0xf]
      %v1017 = vld [vmem:[%s1015 + $0x4] sm:$0xf]
      %v1020 = vunpack.c.l.b16 %v1016
      %v1021 = vunpack.c.l.b16 %v1017
      %v1022 = vpack.c.b16 %v1021, %v1020
      %v1024 = vsel %vm967, %v1022, 0
      %1026 = vmatprep.subr.bf16.mxu0 0
      %1027 = vmatpush1.bf16.msra.mxu0 %v956
      %1028 = vmatprep.subr.bf16.mxu0 0
      %1029 = vmatpush1.bf16.msra.mxu0 %v957
      %1030 = vmatprep.subr.bf16.mxu0 0
      %1031 = vmatpush1.bf16.msra.mxu0 %v958
      %1032 = vmatprep.subr.bf16.mxu0 0
      %1033 = vmatpush1.bf16.msra.mxu0 %v959
      %1034 = vmatprep.subr.bf16.mxu0 0
      %1035 = vmatpush1.bf16.msra.mxu0 0
      %1036 = vmatprep.subr.bf16.mxu0 0
      %1037 = vmatpush1.bf16.msra.mxu0 0
      %1038 = vmatprep.subr.bf16.mxu0 0
      %1039 = vmatpush1.bf16.msra.mxu0 0
      %1040 = vmatprep.subr.bf16.mxu0 0
      %1041 = vmatpush1.bf16.msra.mxu0 0
      %1042 = vmatprep.subr.bf16.mxu0 0
      %1043 = vmatpush1.bf16.msra.mxu0 0
      %1044 = vmatprep.subr.bf16.mxu0 0
      %1045 = vmatpush1.bf16.msra.mxu0 0
      %1046 = vmatprep.subr.bf16.mxu0 0
      %1047 = vmatpush1.bf16.msra.mxu0 0
      %1048 = vmatprep.subr.bf16.mxu0 0
      %1049 = vmatpush1.bf16.msra.mxu0 0
      %1050 = vmatprep.subr.bf16.mxu0 0
      %1051 = vmatpush1.bf16.msra.mxu0 0
      %1052 = vmatprep.subr.bf16.mxu0 0
      %1053 = vmatpush1.bf16.msra.mxu0 0
      %1054 = vmatprep.subr.bf16.mxu0 0
      %1055 = vmatpush1.bf16.msra.mxu0 0
      %1056 = vmatprep.subr.bf16.mxu0 0
      %1057 = vmatpush1.bf16.msra.mxu0 0
      %1058 = vmatprep.mubr.bf16.mxu0 0
      %1059 = vmatmul.mubr.bf16.gmra.mrb[0].mxu0 %v1024
      %v1060 = vpop.f32.mrb[0].mxu0
      %v1061 = vadd.f32 0.0, %v1060
      %v1062 = vpop.f32.mrb[0].mxu0
      %v1063 = vpop.f32.mrb[0].mxu0
      %v1064 = vadd.f32 0.0, %v1063
      %v1065 = vpop.f32.mrb[0].mxu0
      %1066 = vdwg.mxu0
      %v1067 = vpack.c.bf16 %v1064, %v1061
      %s1068 = scalar_lea.vmem %s4, 8
      %v1069 = vld [vmem:[%s1068] sm:$0xf]
      %v1070 = vld [vmem:[%s1068 + $0x4] sm:$0xf]
      %v1073 = vunpack.c.l.b16 %v1069
      %v1074 = vunpack.c.l.b16 %v1070
      %v1075 = vpack.c.b16 %v1074, %v1073
      %vm1077 = vcmask 130048
      %v1079 = vsel %vm1077, %v1067, 0
      %1081 = vmatprep.subr.bf16.mxu0 0
      %1082 = vmatpush1.bf16.msra.mxu0 %v1075
      %1083 = vmatprep.subr.bf16.mxu0 0
      %1084 = vmatpush1.bf16.msra.mxu0 0
      %1085 = vmatprep.subr.bf16.mxu0 0
      %1086 = vmatpush1.bf16.msra.mxu0 0
      %1087 = vmatprep.subr.bf16.mxu0 0
      %1088 = vmatpush1.bf16.msra.mxu0 0
      %1089 = vmatprep.subr.bf16.mxu0 0
      %1090 = vmatpush1.bf16.msra.mxu0 0
      %1091 = vmatprep.subr.bf16.mxu0 0
      %1092 = vmatpush1.bf16.msra.mxu0 0
      %1093 = vmatprep.subr.bf16.mxu0 0
      %1094 = vmatpush1.bf16.msra.mxu0 0
      %1095 = vmatprep.subr.bf16.mxu0 0
      %1096 = vmatpush1.bf16.msra.mxu0 0
      %1097 = vmatprep.subr.bf16.mxu0 0
      %1098 = vmatpush1.bf16.msra.mxu0 0
      %1099 = vmatprep.subr.bf16.mxu0 0
      %1100 = vmatpush1.bf16.msra.mxu0 0
      %1101 = vmatprep.subr.bf16.mxu0 0
      %1102 = vmatpush1.bf16.msra.mxu0 0
      %1103 = vmatprep.subr.bf16.mxu0 0
      %1104 = vmatpush1.bf16.msra.mxu0 0
      %1105 = vmatprep.subr.bf16.mxu0 0
      %1106 = vmatpush1.bf16.msra.mxu0 0
      %1107 = vmatprep.subr.bf16.mxu0 0
      %1108 = vmatpush1.bf16.msra.mxu0 0
      %1109 = vmatprep.subr.bf16.mxu0 0
      %1110 = vmatpush1.bf16.msra.mxu0 0
      %1111 = vmatprep.subr.bf16.mxu0 0
      %1112 = vmatpush1.bf16.msra.mxu0 0
      %1113 = vmatprep.mubr.bf16.mxu0 0
      %1114 = vmatmul.mubr.bf16.gmra.mrb[0].mxu0 %v1079
      %v1115 = vpop.f32.mrb[0].mxu0
      %v1116 = vadd.f32 0.0, %v1115
      %v1117 = vpop.f32.mrb[0].mxu0
      %v1118 = vpop.f32.mrb[0].mxu0
      %v1119 = vadd.f32 0.0, %v1118
      %v1120 = vpop.f32.mrb[0].mxu0
      %1121 = vdwg.mxu0
      %v1124 = vunpack.c.l.b16 %v1013
      %v1125 = vunpack.c.l.b16 %v1014
      %v1126 = vpack.c.b16 %v1125, %v1124
      %v1129 = vsel %vm1077, %v1012, 0
      %1131 = vmatprep.subr.bf16.mxu0 0
      %1132 = vmatpush1.bf16.msra.mxu0 %v1126
      %1133 = vmatprep.subr.bf16.mxu0 0
      %1134 = vmatpush1.bf16.msra.mxu0 0
      %1135 = vmatprep.subr.bf16.mxu0 0
      %1136 = vmatpush1.bf16.msra.mxu0 0
      %1137 = vmatprep.subr.bf16.mxu0 0
      %1138 = vmatpush1.bf16.msra.mxu0 0
      %1139 = vmatprep.subr.bf16.mxu0 0
      %1140 = vmatpush1.bf16.msra.mxu0 0
      %1141 = vmatprep.subr.bf16.mxu0 0
      %1142 = vmatpush1.bf16.msra.mxu0 0
      %1143 = vmatprep.subr.bf16.mxu0 0
      %1144 = vmatpush1.bf16.msra.mxu0 0
      %1145 = vmatprep.subr.bf16.mxu0 0
      %1146 = vmatpush1.bf16.msra.mxu0 0
      %1147 = vmatprep.subr.bf16.mxu0 0
      %1148 = vmatpush1.bf16.msra.mxu0 0
      %1149 = vmatprep.subr.bf16.mxu0 0
      %1150 = vmatpush1.bf16.msra.mxu0 0
      %1151 = vmatprep.subr.bf16.mxu0 0
      %1152 = vmatpush1.bf16.msra.mxu0 0
      %1153 = vmatprep.subr.bf16.mxu0 0
      %1154 = vmatpush1.bf16.msra.mxu0 0
      %1155 = vmatprep.subr.bf16.mxu0 0
      %1156 = vmatpush1.bf16.msra.mxu0 0
      %1157 = vmatprep.subr.bf16.mxu0 0
      %1158 = vmatpush1.bf16.msra.mxu0 0
      %1159 = vmatprep.subr.bf16.mxu0 0
      %1160 = vmatpush1.bf16.msra.mxu0 0
      %1161 = vmatprep.subr.bf16.mxu0 0
      %1162 = vmatpush1.bf16.msra.mxu0 0
      %1163 = vmatprep.mubr.bf16.mxu0 0
      %1164 = vmatmul.mubr.bf16.gmra.mrb[0].mxu0 %v1129
      %v1165 = vpop.f32.mrb[0].mxu0
      %v1166 = vadd.f32 %v1116, %v1165
      %v1167 = vpop.f32.mrb[0].mxu0
      %v1168 = vpop.f32.mrb[0].mxu0
      %v1169 = vadd.f32 %v1119, %v1168
      %v1170 = vpop.f32.mrb[0].mxu0
      %1171 = vdwg.mxu0
      %s1172 = scalar_lea.vmem %s3, 16
      %v1173 = vld [vmem:[%s1172] sm:$0xf]
      %v1174 = vld [vmem:[%s1172 + $0x4] sm:$0xf]
      %v1177 = vunpack.c.l.b16 %v1173
      %v1178 = vunpack.c.l.b16 %v1174
      %v1179 = vpack.c.b16 %v1178, %v1177
      %v1181 = vsel %vm967, %v1179, 0
      %1183 = vmatprep.subr.bf16.mxu0 0
      %1184 = vmatpush1.bf16.msra.mxu0 %v956
      %1185 = vmatprep.subr.bf16.mxu0 0
      %1186 = vmatpush1.bf16.msra.mxu0 %v957
      %1187 = vmatprep.subr.bf16.mxu0 0
      %1188 = vmatpush1.bf16.msra.mxu0 %v958
      %1189 = vmatprep.subr.bf16.mxu0 0
      %1190 = vmatpush1.bf16.msra.mxu0 %v959
      %1191 = vmatprep.subr.bf16.mxu0 0
      %1192 = vmatpush1.bf16.msra.mxu0 0
      %1193 = vmatprep.subr.bf16.mxu0 0
      %1194 = vmatpush1.bf16.msra.mxu0 0
      %1195 = vmatprep.subr.bf16.mxu0 0
      %1196 = vmatpush1.bf16.msra.mxu0 0
      %1197 = vmatprep.subr.bf16.mxu0 0
      %1198 = vmatpush1.bf16.msra.mxu0 0
      %1199 = vmatprep.subr.bf16.mxu0 0
      %1200 = vmatpush1.bf16.msra.mxu0 0
      %1201 = vmatprep.subr.bf16.mxu0 0
      %1202 = vmatpush1.bf16.msra.mxu0 0
      %1203 = vmatprep.subr.bf16.mxu0 0
      %1204 = vmatpush1.bf16.msra.mxu0 0
      %1205 = vmatprep.subr.bf16.mxu0 0
      %1206 = vmatpush1.bf16.msra.mxu0 0
      %1207 = vmatprep.subr.bf16.mxu0 0
      %1208 = vmatpush1.bf16.msra.mxu0 0
      %1209 = vmatprep.subr.bf16.mxu0 0
      %1210 = vmatpush1.bf16.msra.mxu0 0
      %1211 = vmatprep.subr.bf16.mxu0 0
      %1212 = vmatpush1.bf16.msra.mxu0 0
      %1213 = vmatprep.subr.bf16.mxu0 0
      %1214 = vmatpush1.bf16.msra.mxu0 0
      %1215 = vmatprep.mubr.bf16.mxu0 0
      %1216 = vmatmul.mubr.bf16.gmra.mrb[0].mxu0 %v1181
      %v1217 = vpop.f32.mrb[0].mxu0
      %v1218 = vadd.f32 0.0, %v1217
      %v1219 = vpop.f32.mrb[0].mxu0
      %v1220 = vpop.f32.mrb[0].mxu0
      %v1221 = vadd.f32 0.0, %v1220
      %v1222 = vpop.f32.mrb[0].mxu0
      %1223 = vdwg.mxu0
      %v1224 = vpack.c.bf16 %v1221, %v1218
      %s1225 = scalar_lea.vmem %s4, 16
      %v1226 = vld [vmem:[%s1225] sm:$0xf]
      %v1227 = vld [vmem:[%s1225 + $0x4] sm:$0xf]
      %v1230 = vunpack.c.l.b16 %v1226
      %v1231 = vunpack.c.l.b16 %v1227
      %v1232 = vpack.c.b16 %v1231, %v1230
      %v1235 = vsel %vm1077, %v1224, 0
      %1237 = vmatprep.subr.bf16.mxu0 0
      %1238 = vmatpush1.bf16.msra.mxu0 %v1232
      %1239 = vmatprep.subr.bf16.mxu0 0
      %1240 = vmatpush1.bf16.msra.mxu0 0
      %1241 = vmatprep.subr.bf16.mxu0 0
      %1242 = vmatpush1.bf16.msra.mxu0 0
      %1243 = vmatprep.subr.bf16.mxu0 0
      %1244 = vmatpush1.bf16.msra.mxu0 0
      %1245 = vmatprep.subr.bf16.mxu0 0
      %1246 = vmatpush1.bf16.msra.mxu0 0
      %1247 = vmatprep.subr.bf16.mxu0 0
      %1248 = vmatpush1.bf16.msra.mxu0 0
      %1249 = vmatprep.subr.bf16.mxu0 0
      %1250 = vmatpush1.bf16.msra.mxu0 0
      %1251 = vmatprep.subr.bf16.mxu0 0
      %1252 = vmatpush1.bf16.msra.mxu0 0
      %1253 = vmatprep.subr.bf16.mxu0 0
      %1254 = vmatpush1.bf16.msra.mxu0 0
      %1255 = vmatprep.subr.bf16.mxu0 0
      %1256 = vmatpush1.bf16.msra.mxu0 0
      %1257 = vmatprep.subr.bf16.mxu0 0
      %1258 = vmatpush1.bf16.msra.mxu0 0
      %1259 = vmatprep.subr.bf16.mxu0 0
      %1260 = vmatpush1.bf16.msra.mxu0 0
      %1261 = vmatprep.subr.bf16.mxu0 0
      %1262 = vmatpush1.bf16.msra.mxu0 0
      %1263 = vmatprep.subr.bf16.mxu0 0
      %1264 = vmatpush1.bf16.msra.mxu0 0
      %1265 = vmatprep.subr.bf16.mxu0 0
      %1266 = vmatpush1.bf16.msra.mxu0 0
      %1267 = vmatprep.subr.bf16.mxu0 0
      %1268 = vmatpush1.bf16.msra.mxu0 0
      %1269 = vmatprep.mubr.bf16.mxu0 0
      %1270 = vmatmul.mubr.bf16.gmra.mrb[0].mxu0 %v1235
      %v1271 = vpop.f32.mrb[0].mxu0
      %v1272 = vadd.f32 0.0, %v1271
      %v1273 = vpop.f32.mrb[0].mxu0
      %v1274 = vpop.f32.mrb[0].mxu0
      %v1275 = vadd.f32 0.0, %v1274
      %v1276 = vpop.f32.mrb[0].mxu0
      %1277 = vdwg.mxu0
      %v1278 = vadd.f32 %v1166, %v1272
      %v1279 = vadd.f32 %v1169, %v1275
      %s1280 = scalar_lea.vmem %s3, 24
      %v1281 = vld [vmem:[%s1280] sm:$0xf]
      %v1282 = vld [vmem:[%s1280 + $0x4] sm:$0xf]
      %v1285 = vunpack.c.l.b16 %v1281
      %v1286 = vunpack.c.l.b16 %v1282
      %v1287 = vpack.c.b16 %v1286, %v1285
      %v1289 = vsel %vm967, %v1287, 0
      %1291 = vmatprep.subr.bf16.mxu0 0
      %1292 = vmatpush1.bf16.msra.mxu0 %v956
      %1293 = vmatprep.subr.bf16.mxu0 0
      %1294 = vmatpush1.bf16.msra.mxu0 %v957
      %1295 = vmatprep.subr.bf16.mxu0 0
      %1296 = vmatpush1.bf16.msra.mxu0 %v958
      %1297 = vmatprep.subr.bf16.mxu0 0
      %1298 = vmatpush1.bf16.msra.mxu0 %v959
      %1299 = vmatprep.subr.bf16.mxu0 0
      %1300 = vmatpush1.bf16.msra.mxu0 0
      %1301 = vmatprep.subr.bf16.mxu0 0
      %1302 = vmatpush1.bf16.msra.mxu0 0
      %1303 = vmatprep.subr.bf16.mxu0 0
      %1304 = vmatpush1.bf16.msra.mxu0 0
      %1305 = vmatprep.subr.bf16.mxu0 0
      %1306 = vmatpush1.bf16.msra.mxu0 0
      %1307 = vmatprep.subr.bf16.mxu0 0
      %1308 = vmatpush1.bf16.msra.mxu0 0
      %1309 = vmatprep.subr.bf16.mxu0 0
      %1310 = vmatpush1.bf16.msra.mxu0 0
      %1311 = vmatprep.subr.bf16.mxu0 0
      %1312 = vmatpush1.bf16.msra.mxu0 0
      %1313 = vmatprep.subr.bf16.mxu0 0
      %1314 = vmatpush1.bf16.msra.mxu0 0
      %1315 = vmatprep.subr.bf16.mxu0 0
      %1316 = vmatpush1.bf16.msra.mxu0 0
      %1317 = vmatprep.subr.bf16.mxu0 0
      %1318 = vmatpush1.bf16.msra.mxu0 0
      %1319 = vmatprep.subr.bf16.mxu0 0
      %1320 = vmatpush1.bf16.msra.mxu0 0
      %1321 = vmatprep.subr.bf16.mxu0 0
      %1322 = vmatpush1.bf16.msra.mxu0 0
      %1323 = vmatprep.mubr.bf16.mxu0 0
      %1324 = vmatmul.mubr.bf16.gmra.mrb[0].mxu0 %v1289
      %v1325 = vpop.f32.mrb[0].mxu0
      %v1326 = vadd.f32 0.0, %v1325
      %v1327 = vpop.f32.mrb[0].mxu0
      %v1328 = vpop.f32.mrb[0].mxu0
      %v1329 = vadd.f32 0.0, %v1328
      %v1330 = vpop.f32.mrb[0].mxu0
      %1331 = vdwg.mxu0
      %v1332 = vpack.c.bf16 %v1329, %v1326
      %s1333 = scalar_lea.vmem %s4, 24
      %v1334 = vld [vmem:[%s1333] sm:$0xf]
      %v1335 = vld [vmem:[%s1333 + $0x4] sm:$0xf]
      %v1338 = vunpack.c.l.b16 %v1334
      %v1339 = vunpack.c.l.b16 %v1335
      %v1340 = vpack.c.b16 %v1339, %v1338
      %v1343 = vsel %vm1077, %v1332, 0
      %1345 = vmatprep.subr.bf16.mxu0 0
      %1346 = vmatpush1.bf16.msra.mxu0 %v1340
      %1347 = vmatprep.subr.bf16.mxu0 0
      %1348 = vmatpush1.bf16.msra.mxu0 0
      %1349 = vmatprep.subr.bf16.mxu0 0
      %1350 = vmatpush1.bf16.msra.mxu0 0
      %1351 = vmatprep.subr.bf16.mxu0 0
      %1352 = vmatpush1.bf16.msra.mxu0 0
      %1353 = vmatprep.subr.bf16.mxu0 0
      %1354 = vmatpush1.bf16.msra.mxu0 0
      %1355 = vmatprep.subr.bf16.mxu0 0
      %1356 = vmatpush1.bf16.msra.mxu0 0
      %1357 = vmatprep.subr.bf16.mxu0 0
      %1358 = vmatpush1.bf16.msra.mxu0 0
      %1359 = vmatprep.subr.bf16.mxu0 0
      %1360 = vmatpush1.bf16.msra.mxu0 0
      %1361 = vmatprep.subr.bf16.mxu0 0
      %1362 = vmatpush1.bf16.msra.mxu0 0
      %1363 = vmatprep.subr.bf16.mxu0 0
      %1364 = vmatpush1.bf16.msra.mxu0 0
      %1365 = vmatprep.subr.bf16.mxu0 0
      %1366 = vmatpush1.bf16.msra.mxu0 0
      %1367 = vmatprep.subr.bf16.mxu0 0
      %1368 = vmatpush1.bf16.msra.mxu0 0
      %1369 = vmatprep.subr.bf16.mxu0 0
      %1370 = vmatpush1.bf16.msra.mxu0 0
      %1371 = vmatprep.subr.bf16.mxu0 0
      %1372 = vmatpush1.bf16.msra.mxu0 0
      %1373 = vmatprep.subr.bf16.mxu0 0
      %1374 = vmatpush1.bf16.msra.mxu0 0
      %1375 = vmatprep.subr.bf16.mxu0 0
      %1376 = vmatpush1.bf16.msra.mxu0 0
      %1377 = vmatprep.mubr.bf16.mxu0 0
      %1378 = vmatmul.mubr.bf16.gmra.mrb[0].mxu0 %v1343
      %v1379 = vpop.f32.mrb[0].mxu0
      %v1380 = vadd.f32 0.0, %v1379
      %v1381 = vpop.f32.mrb[0].mxu0
      %v1382 = vpop.f32.mrb[0].mxu0
      %v1383 = vadd.f32 0.0, %v1382
      %v1384 = vpop.f32.mrb[0].mxu0
      %1385 = vdwg.mxu0
      %v1386 = vadd.f32 %v1278, %v1380
      %v1387 = vadd.f32 %v1279, %v1383
      %s1388 = scalar_lea.vmem %s3, 32
      %v1389 = vld [vmem:[%s1388] sm:$0xf]
      %v1390 = vld [vmem:[%s1388 + $0x4] sm:$0xf]
      %v1393 = vunpack.c.l.b16 %v1389
      %v1394 = vunpack.c.l.b16 %v1390
      %v1395 = vpack.c.b16 %v1394, %v1393
      %v1397 = vsel %vm967, %v1395, 0
      %1399 = vmatprep.subr.bf16.mxu0 0
      %1400 = vmatpush1.bf16.msra.mxu0 %v956
      %1401 = vmatprep.subr.bf16.mxu0 0
      %1402 = vmatpush1.bf16.msra.mxu0 %v957
      %1403 = vmatprep.subr.bf16.mxu0 0
      %1404 = vmatpush1.bf16.msra.mxu0 %v958
      %1405 = vmatprep.subr.bf16.mxu0 0
      %1406 = vmatpush1.bf16.msra.mxu0 %v959
      %1407 = vmatprep.subr.bf16.mxu0 0
      %1408 = vmatpush1.bf16.msra.mxu0 0
      %1409 = vmatprep.subr.bf16.mxu0 0
      %1410 = vmatpush1.bf16.msra.mxu0 0
      %1411 = vmatprep.subr.bf16.mxu0 0
      %1412 = vmatpush1.bf16.msra.mxu0 0
      %1413 = vmatprep.subr.bf16.mxu0 0
      %1414 = vmatpush1.bf16.msra.mxu0 0
      %1415 = vmatprep.subr.bf16.mxu0 0
      %1416 = vmatpush1.bf16.msra.mxu0 0
      %1417 = vmatprep.subr.bf16.mxu0 0
      %1418 = vmatpush1.bf16.msra.mxu0 0
      %1419 = vmatprep.subr.bf16.mxu0 0
      %1420 = vmatpush1.bf16.msra.mxu0 0
      %1421 = vmatprep.subr.bf16.mxu0 0
      %1422 = vmatpush1.bf16.msra.mxu0 0
      %1423 = vmatprep.subr.bf16.mxu0 0
      %1424 = vmatpush1.bf16.msra.mxu0 0
      %1425 = vmatprep.subr.bf16.mxu0 0
      %1426 = vmatpush1.bf16.msra.mxu0 0
      %1427 = vmatprep.subr.bf16.mxu0 0
      %1428 = vmatpush1.bf16.msra.mxu0 0
      %1429 = vmatprep.subr.bf16.mxu0 0
      %1430 = vmatpush1.bf16.msra.mxu0 0
      %1431 = vmatprep.mubr.bf16.mxu0 0
      %1432 = vmatmul.mubr.bf16.gmra.mrb[0].mxu0 %v1397
      %v1433 = vpop.f32.mrb[0].mxu0
      %v1434 = vadd.f32 0.0, %v1433
      %v1435 = vpop.f32.mrb[0].mxu0
      %v1436 = vpop.f32.mrb[0].mxu0
      %v1437 = vadd.f32 0.0, %v1436
      %v1438 = vpop.f32.mrb[0].mxu0
      %1439 = vdwg.mxu0
      %v1440 = vpack.c.bf16 %v1437, %v1434
      %s1441 = scalar_lea.vmem %s4, 32
      %v1442 = vld [vmem:[%s1441] sm:$0xf]
      %v1443 = vld [vmem:[%s1441 + $0x4] sm:$0xf]
      %v1446 = vunpack.c.l.b16 %v1442
      %v1447 = vunpack.c.l.b16 %v1443
      %v1448 = vpack.c.b16 %v1447, %v1446
      %v1451 = vsel %vm1077, %v1440, 0
      %1453 = vmatprep.subr.bf16.mxu0 0
      %1454 = vmatpush1.bf16.msra.mxu0 %v1448
      %1455 = vmatprep.subr.bf16.mxu0 0
      %1456 = vmatpush1.bf16.msra.mxu0 0
      %1457 = vmatprep.subr.bf16.mxu0 0
      %1458 = vmatpush1.bf16.msra.mxu0 0
      %1459 = vmatprep.subr.bf16.mxu0 0
      %1460 = vmatpush1.bf16.msra.mxu0 0
      %1461 = vmatprep.subr.bf16.mxu0 0
      %1462 = vmatpush1.bf16.msra.mxu0 0
      %1463 = vmatprep.subr.bf16.mxu0 0
      %1464 = vmatpush1.bf16.msra.mxu0 0
      %1465 = vmatprep.subr.bf16.mxu0 0
      %1466 = vmatpush1.bf16.msra.mxu0 0
      %1467 = vmatprep.subr.bf16.mxu0 0
      %1468 = vmatpush1.bf16.msra.mxu0 0
      %1469 = vmatprep.subr.bf16.mxu0 0
      %1470 = vmatpush1.bf16.msra.mxu0 0
      %1471 = vmatprep.subr.bf16.mxu0 0
      %1472 = vmatpush1.bf16.msra.mxu0 0
      %1473 = vmatprep.subr.bf16.mxu0 0
      %1474 = vmatpush1.bf16.msra.mxu0 0
      %1475 = vmatprep.subr.bf16.mxu0 0
      %1476 = vmatpush1.bf16.msra.mxu0 0
      %1477 = vmatprep.subr.bf16.mxu0 0
      %1478 = vmatpush1.bf16.msra.mxu0 0
      %1479 = vmatprep.subr.bf16.mxu0 0
      %1480 = vmatpush1.bf16.msra.mxu0 0
      %1481 = vmatprep.subr.bf16.mxu0 0
      %1482 = vmatpush1.bf16.msra.mxu0 0
      %1483 = vmatprep.subr.bf16.mxu0 0
      %1484 = vmatpush1.bf16.msra.mxu0 0
      %1485 = vmatprep.mubr.bf16.mxu0 0
      %1486 = vmatmul.mubr.bf16.gmra.mrb[0].mxu0 %v1451
      %v1487 = vpop.f32.mrb[0].mxu0
      %v1488 = vadd.f32 0.0, %v1487
      %v1489 = vpop.f32.mrb[0].mxu0
      %v1490 = vpop.f32.mrb[0].mxu0
      %v1491 = vadd.f32 0.0, %v1490
      %v1492 = vpop.f32.mrb[0].mxu0
      %1493 = vdwg.mxu0
      %v1494 = vadd.f32 %v1386, %v1488
      %v1495 = vadd.f32 %v1387, %v1491
      %s1496 = scalar_lea.vmem %s3, 40
      %v1497 = vld [vmem:[%s1496] sm:$0xf]
      %v1498 = vld [vmem:[%s1496 + $0x4] sm:$0xf]
      %v1501 = vunpack.c.l.b16 %v1497
      %v1502 = vunpack.c.l.b16 %v1498
      %v1503 = vpack.c.b16 %v1502, %v1501
      %v1505 = vsel %vm967, %v1503, 0
      %1507 = vmatprep.subr.bf16.mxu0 0
      %1508 = vmatpush1.bf16.msra.mxu0 %v956
      %1509 = vmatprep.subr.bf16.mxu0 0
      %1510 = vmatpush1.bf16.msra.mxu0 %v957
      %1511 = vmatprep.subr.bf16.mxu0 0
      %1512 = vmatpush1.bf16.msra.mxu0 %v958
      %1513 = vmatprep.subr.bf16.mxu0 0
      %1514 = vmatpush1.bf16.msra.mxu0 %v959
      %1515 = vmatprep.subr.bf16.mxu0 0
      %1516 = vmatpush1.bf16.msra.mxu0 0
      %1517 = vmatprep.subr.bf16.mxu0 0
      %1518 = vmatpush1.bf16.msra.mxu0 0
      %1519 = vmatprep.subr.bf16.mxu0 0
      %1520 = vmatpush1.bf16.msra.mxu0 0
      %1521 = vmatprep.subr.bf16.mxu0 0
      %1522 = vmatpush1.bf16.msra.mxu0 0
      %1523 = vmatprep.subr.bf16.mxu0 0
      %1524 = vmatpush1.bf16.msra.mxu0 0
      %1525 = vmatprep.subr.bf16.mxu0 0
      %1526 = vmatpush1.bf16.msra.mxu0 0
      %1527 = vmatprep.subr.bf16.mxu0 0
      %1528 = vmatpush1.bf16.msra.mxu0 0
      %1529 = vmatprep.subr.bf16.mxu0 0
      %1530 = vmatpush1.bf16.msra.mxu0 0
      %1531 = vmatprep.subr.bf16.mxu0 0
      %1532 = vmatpush1.bf16.msra.mxu0 0
      %1533 = vmatprep.subr.bf16.mxu0 0
      %1534 = vmatpush1.bf16.msra.mxu0 0
      %1535 = vmatprep.subr.bf16.mxu0 0
      %1536 = vmatpush1.bf16.msra.mxu0 0
      %1537 = vmatprep.subr.bf16.mxu0 0
      %1538 = vmatpush1.bf16.msra.mxu0 0
      %1539 = vmatprep.mubr.bf16.mxu0 0
      %1540 = vmatmul.mubr.bf16.gmra.mrb[0].mxu0 %v1505
      %v1541 = vpop.f32.mrb[0].mxu0
      %v1542 = vadd.f32 0.0, %v1541
      %v1543 = vpop.f32.mrb[0].mxu0
      %v1544 = vpop.f32.mrb[0].mxu0
      %v1545 = vadd.f32 0.0, %v1544
      %v1546 = vpop.f32.mrb[0].mxu0
      %1547 = vdwg.mxu0
      %v1548 = vpack.c.bf16 %v1545, %v1542
      %s1549 = scalar_lea.vmem %s4, 40
      %v1550 = vld [vmem:[%s1549] sm:$0xf]
      %v1551 = vld [vmem:[%s1549 + $0x4] sm:$0xf]
      %v1554 = vunpack.c.l.b16 %v1550
      %v1555 = vunpack.c.l.b16 %v1551
      %v1556 = vpack.c.b16 %v1555, %v1554
      %v1559 = vsel %vm1077, %v1548, 0
      %1561 = vmatprep.subr.bf16.mxu0 0
      %1562 = vmatpush1.bf16.msra.mxu0 %v1556
      %1563 = vmatprep.subr.bf16.mxu0 0
      %1564 = vmatpush1.bf16.msra.mxu0 0
      %1565 = vmatprep.subr.bf16.mxu0 0
      %1566 = vmatpush1.bf16.msra.mxu0 0
      %1567 = vmatprep.subr.bf16.mxu0 0
      %1568 = vmatpush1.bf16.msra.mxu0 0
      %1569 = vmatprep.subr.bf16.mxu0 0
      %1570 = vmatpush1.bf16.msra.mxu0 0
      %1571 = vmatprep.subr.bf16.mxu0 0
      %1572 = vmatpush1.bf16.msra.mxu0 0
      %1573 = vmatprep.subr.bf16.mxu0 0
      %1574 = vmatpush1.bf16.msra.mxu0 0
      %1575 = vmatprep.subr.bf16.mxu0 0
      %1576 = vmatpush1.bf16.msra.mxu0 0
      %1577 = vmatprep.subr.bf16.mxu0 0
      %1578 = vmatpush1.bf16.msra.mxu0 0
      %1579 = vmatprep.subr.bf16.mxu0 0
      %1580 = vmatpush1.bf16.msra.mxu0 0
      %1581 = vmatprep.subr.bf16.mxu0 0
      %1582 = vmatpush1.bf16.msra.mxu0 0
      %1583 = vmatprep.subr.bf16.mxu0 0
      %1584 = vmatpush1.bf16.msra.mxu0 0
      %1585 = vmatprep.subr.bf16.mxu0 0
      %1586 = vmatpush1.bf16.msra.mxu0 0
      %1587 = vmatprep.subr.bf16.mxu0 0
      %1588 = vmatpush1.bf16.msra.mxu0 0
      %1589 = vmatprep.subr.bf16.mxu0 0
      %1590 = vmatpush1.bf16.msra.mxu0 0
      %1591 = vmatprep.subr.bf16.mxu0 0
      %1592 = vmatpush1.bf16.msra.mxu0 0
      %1593 = vmatprep.mubr.bf16.mxu0 0
      %1594 = vmatmul.mubr.bf16.gmra.mrb[0].mxu0 %v1559
      %v1595 = vpop.f32.mrb[0].mxu0
      %v1596 = vadd.f32 0.0, %v1595
      %v1597 = vpop.f32.mrb[0].mxu0
      %v1598 = vpop.f32.mrb[0].mxu0
      %v1599 = vadd.f32 0.0, %v1598
      %v1600 = vpop.f32.mrb[0].mxu0
      %1601 = vdwg.mxu0
      %v1602 = vadd.f32 %v1494, %v1596
      %v1603 = vadd.f32 %v1495, %v1599
      %s1604 = scalar_lea.vmem %s3, 48
      %v1605 = vld [vmem:[%s1604] sm:$0xf]
      %v1606 = vld [vmem:[%s1604 + $0x4] sm:$0xf]
      %v1609 = vunpack.c.l.b16 %v1605
      %v1610 = vunpack.c.l.b16 %v1606
      %v1611 = vpack.c.b16 %v1610, %v1609
      %v1613 = vsel %vm967, %v1611, 0
      %1615 = vmatprep.subr.bf16.mxu0 0
      %1616 = vmatpush1.bf16.msra.mxu0 %v956
      %1617 = vmatprep.subr.bf16.mxu0 0
      %1618 = vmatpush1.bf16.msra.mxu0 %v957
      %1619 = vmatprep.subr.bf16.mxu0 0
      %1620 = vmatpush1.bf16.msra.mxu0 %v958
      %1621 = vmatprep.subr.bf16.mxu0 0
      %1622 = vmatpush1.bf16.msra.mxu0 %v959
      %1623 = vmatprep.subr.bf16.mxu0 0
      %1624 = vmatpush1.bf16.msra.mxu0 0
      %1625 = vmatprep.subr.bf16.mxu0 0
      %1626 = vmatpush1.bf16.msra.mxu0 0
      %1627 = vmatprep.subr.bf16.mxu0 0
      %1628 = vmatpush1.bf16.msra.mxu0 0
      %1629 = vmatprep.subr.bf16.mxu0 0
      %1630 = vmatpush1.bf16.msra.mxu0 0
      %1631 = vmatprep.subr.bf16.mxu0 0
      %1632 = vmatpush1.bf16.msra.mxu0 0
      %1633 = vmatprep.subr.bf16.mxu0 0
      %1634 = vmatpush1.bf16.msra.mxu0 0
      %1635 = vmatprep.subr.bf16.mxu0 0
      %1636 = vmatpush1.bf16.msra.mxu0 0
      %1637 = vmatprep.subr.bf16.mxu0 0
      %1638 = vmatpush1.bf16.msra.mxu0 0
      %1639 = vmatprep.subr.bf16.mxu0 0
      %1640 = vmatpush1.bf16.msra.mxu0 0
      %1641 = vmatprep.subr.bf16.mxu0 0
      %1642 = vmatpush1.bf16.msra.mxu0 0
      %1643 = vmatprep.subr.bf16.mxu0 0
      %1644 = vmatpush1.bf16.msra.mxu0 0
      %1645 = vmatprep.subr.bf16.mxu0 0
      %1646 = vmatpush1.bf16.msra.mxu0 0
      %1647 = vmatprep.mubr.bf16.mxu0 0
      %1648 = vmatmul.mubr.bf16.gmra.mrb[0].mxu0 %v1613
      %v1649 = vpop.f32.mrb[0].mxu0
      %v1650 = vadd.f32 0.0, %v1649
      %v1651 = vpop.f32.mrb[0].mxu0
      %v1652 = vpop.f32.mrb[0].mxu0
      %v1653 = vadd.f32 0.0, %v1652
      %v1654 = vpop.f32.mrb[0].mxu0
      %1655 = vdwg.mxu0
      %v1656 = vpack.c.bf16 %v1653, %v1650
      %s1657 = scalar_lea.vmem %s4, 48
      %v1658 = vld [vmem:[%s1657] sm:$0xf]
      %v1659 = vld [vmem:[%s1657 + $0x4] sm:$0xf]
      %v1662 = vunpack.c.l.b16 %v1658
      %v1663 = vunpack.c.l.b16 %v1659
      %v1664 = vpack.c.b16 %v1663, %v1662
      %v1667 = vsel %vm1077, %v1656, 0
      %1669 = vmatprep.subr.bf16.mxu0 0
      %1670 = vmatpush1.bf16.msra.mxu0 %v1664
      %1671 = vmatprep.subr.bf16.mxu0 0
      %1672 = vmatpush1.bf16.msra.mxu0 0
      %1673 = vmatprep.subr.bf16.mxu0 0
      %1674 = vmatpush1.bf16.msra.mxu0 0
      %1675 = vmatprep.subr.bf16.mxu0 0
      %1676 = vmatpush1.bf16.msra.mxu0 0
      %1677 = vmatprep.subr.bf16.mxu0 0
      %1678 = vmatpush1.bf16.msra.mxu0 0
      %1679 = vmatprep.subr.bf16.mxu0 0
      %1680 = vmatpush1.bf16.msra.mxu0 0
      %1681 = vmatprep.subr.bf16.mxu0 0
      %1682 = vmatpush1.bf16.msra.mxu0 0
      %1683 = vmatprep.subr.bf16.mxu0 0
      %1684 = vmatpush1.bf16.msra.mxu0 0
      %1685 = vmatprep.subr.bf16.mxu0 0
      %1686 = vmatpush1.bf16.msra.mxu0 0
      %1687 = vmatprep.subr.bf16.mxu0 0
      %1688 = vmatpush1.bf16.msra.mxu0 0
      %1689 = vmatprep.subr.bf16.mxu0 0
      %1690 = vmatpush1.bf16.msra.mxu0 0
      %1691 = vmatprep.subr.bf16.mxu0 0
      %1692 = vmatpush1.bf16.msra.mxu0 0
      %1693 = vmatprep.subr.bf16.mxu0 0
      %1694 = vmatpush1.bf16.msra.mxu0 0
      %1695 = vmatprep.subr.bf16.mxu0 0
      %1696 = vmatpush1.bf16.msra.mxu0 0
      %1697 = vmatprep.subr.bf16.mxu0 0
      %1698 = vmatpush1.bf16.msra.mxu0 0
      %1699 = vmatprep.subr.bf16.mxu0 0
      %1700 = vmatpush1.bf16.msra.mxu0 0
      %1701 = vmatprep.mubr.bf16.mxu0 0
      %1702 = vmatmul.mubr.bf16.gmra.mrb[0].mxu0 %v1667
      %v1703 = vpop.f32.mrb[0].mxu0
      %v1704 = vadd.f32 0.0, %v1703
      %v1705 = vpop.f32.mrb[0].mxu0
      %v1706 = vpop.f32.mrb[0].mxu0
      %v1707 = vadd.f32 0.0, %v1706
      %v1708 = vpop.f32.mrb[0].mxu0
      %1709 = vdwg.mxu0
      %v1710 = vadd.f32 %v1602, %v1704
      %v1711 = vadd.f32 %v1603, %v1707
      %s1712 = scalar_lea.vmem %s3, 56
      %v1713 = vld [vmem:[%s1712] sm:$0xf]
      %v1714 = vld [vmem:[%s1712 + $0x4] sm:$0xf]
      %v1717 = vunpack.c.l.b16 %v1713
      %v1718 = vunpack.c.l.b16 %v1714
      %v1719 = vpack.c.b16 %v1718, %v1717
      %v1721 = vsel %vm967, %v1719, 0
      %1723 = vmatprep.subr.bf16.mxu0 0
      %1724 = vmatpush1.bf16.msra.mxu0 %v956
      %1725 = vmatprep.subr.bf16.mxu0 0
      %1726 = vmatpush1.bf16.msra.mxu0 %v957
      %1727 = vmatprep.subr.bf16.mxu0 0
      %1728 = vmatpush1.bf16.msra.mxu0 %v958
      %1729 = vmatprep.subr.bf16.mxu0 0
      %1730 = vmatpush1.bf16.msra.mxu0 %v959
      %1731 = vmatprep.subr.bf16.mxu0 0
      %1732 = vmatpush1.bf16.msra.mxu0 0
      %1733 = vmatprep.subr.bf16.mxu0 0
      %1734 = vmatpush1.bf16.msra.mxu0 0
      %1735 = vmatprep.subr.bf16.mxu0 0
      %1736 = vmatpush1.bf16.msra.mxu0 0
      %1737 = vmatprep.subr.bf16.mxu0 0
      %1738 = vmatpush1.bf16.msra.mxu0 0
      %1739 = vmatprep.subr.bf16.mxu0 0
      %1740 = vmatpush1.bf16.msra.mxu0 0
      %1741 = vmatprep.subr.bf16.mxu0 0
      %1742 = vmatpush1.bf16.msra.mxu0 0
      %1743 = vmatprep.subr.bf16.mxu0 0
      %1744 = vmatpush1.bf16.msra.mxu0 0
      %1745 = vmatprep.subr.bf16.mxu0 0
      %1746 = vmatpush1.bf16.msra.mxu0 0
      %1747 = vmatprep.subr.bf16.mxu0 0
      %1748 = vmatpush1.bf16.msra.mxu0 0
      %1749 = vmatprep.subr.bf16.mxu0 0
      %1750 = vmatpush1.bf16.msra.mxu0 0
      %1751 = vmatprep.subr.bf16.mxu0 0
      %1752 = vmatpush1.bf16.msra.mxu0 0
      %1753 = vmatprep.subr.bf16.mxu0 0
      %1754 = vmatpush1.bf16.msra.mxu0 0
      %1755 = vmatprep.mubr.bf16.mxu0 0
      %1756 = vmatmul.mubr.bf16.gmra.mrb[0].mxu0 %v1721
      %v1757 = vpop.f32.mrb[0].mxu0
      %v1758 = vadd.f32 0.0, %v1757
      %v1759 = vpop.f32.mrb[0].mxu0
      %v1760 = vpop.f32.mrb[0].mxu0
      %v1761 = vadd.f32 0.0, %v1760
      %v1762 = vpop.f32.mrb[0].mxu0
      %1763 = vdwg.mxu0
      %v1764 = vpack.c.bf16 %v1761, %v1758
      %s1765 = scalar_lea.vmem %s4, 56
      %v1766 = vld [vmem:[%s1765] sm:$0xf]
      %v1767 = vld [vmem:[%s1765 + $0x4] sm:$0xf]
      %v1770 = vunpack.c.l.b16 %v1766
      %v1771 = vunpack.c.l.b16 %v1767
      %v1772 = vpack.c.b16 %v1771, %v1770
      %v1775 = vsel %vm1077, %v1764, 0
      %1777 = vmatprep.subr.bf16.mxu0 0
      %1778 = vmatpush1.bf16.msra.mxu0 %v1772
      %1779 = vmatprep.subr.bf16.mxu0 0
      %1780 = vmatpush1.bf16.msra.mxu0 0
      %1781 = vmatprep.subr.bf16.mxu0 0
      %1782 = vmatpush1.bf16.msra.mxu0 0
      %1783 = vmatprep.subr.bf16.mxu0 0
      %1784 = vmatpush1.bf16.msra.mxu0 0
      %1785 = vmatprep.subr.bf16.mxu0 0
      %1786 = vmatpush1.bf16.msra.mxu0 0
      %1787 = vmatprep.subr.bf16.mxu0 0
      %1788 = vmatpush1.bf16.msra.mxu0 0
      %1789 = vmatprep.subr.bf16.mxu0 0
      %1790 = vmatpush1.bf16.msra.mxu0 0
      %1791 = vmatprep.subr.bf16.mxu0 0
      %1792 = vmatpush1.bf16.msra.mxu0 0
      %1793 = vmatprep.subr.bf16.mxu0 0
      %1794 = vmatpush1.bf16.msra.mxu0 0
      %1795 = vmatprep.subr.bf16.mxu0 0
      %1796 = vmatpush1.bf16.msra.mxu0 0
      %1797 = vmatprep.subr.bf16.mxu0 0
      %1798 = vmatpush1.bf16.msra.mxu0 0
      %1799 = vmatprep.subr.bf16.mxu0 0
      %1800 = vmatpush1.bf16.msra.mxu0 0
      %1801 = vmatprep.subr.bf16.mxu0 0
      %1802 = vmatpush1.bf16.msra.mxu0 0
      %1803 = vmatprep.subr.bf16.mxu0 0
      %1804 = vmatpush1.bf16.msra.mxu0 0
      %1805 = vmatprep.subr.bf16.mxu0 0
      %1806 = vmatpush1.bf16.msra.mxu0 0
      %1807 = vmatprep.subr.bf16.mxu0 0
      %1808 = vmatpush1.bf16.msra.mxu0 0
      %1809 = vmatprep.mubr.bf16.mxu0 0
      %1810 = vmatmul.mubr.bf16.gmra.mrb[0].mxu0 %v1775
      %v1811 = vpop.f32.mrb[0].mxu0
      %v1812 = vadd.f32 0.0, %v1811
      %v1813 = vpop.f32.mrb[0].mxu0
      %v1814 = vpop.f32.mrb[0].mxu0
      %v1815 = vadd.f32 0.0, %v1814
      %v1816 = vpop.f32.mrb[0].mxu0
      %1817 = vdwg.mxu0
      %v1818 = vadd.f32 %v1710, %v1812
      %v1819 = vadd.f32 %v1711, %v1815
      %s1820 = scalar_lea.vmem %s3, 64
      %v1821 = vld [vmem:[%s1820] sm:$0xf]
      %v1822 = vld [vmem:[%s1820 + $0x4] sm:$0xf]
      %v1825 = vunpack.c.l.b16 %v1821
      %v1826 = vunpack.c.l.b16 %v1822
      %v1827 = vpack.c.b16 %v1826, %v1825
      %v1829 = vsel %vm967, %v1827, 0
      %1831 = vmatprep.subr.bf16.mxu0 0
      %1832 = vmatpush1.bf16.msra.mxu0 %v956
      %1833 = vmatprep.subr.bf16.mxu0 0
      %1834 = vmatpush1.bf16.msra.mxu0 %v957
      %1835 = vmatprep.subr.bf16.mxu0 0
      %1836 = vmatpush1.bf16.msra.mxu0 %v958
      %1837 = vmatprep.subr.bf16.mxu0 0
      %1838 = vmatpush1.bf16.msra.mxu0 %v959
      %1839 = vmatprep.subr.bf16.mxu0 0
      %1840 = vmatpush1.bf16.msra.mxu0 0
      %1841 = vmatprep.subr.bf16.mxu0 0
      %1842 = vmatpush1.bf16.msra.mxu0 0
      %1843 = vmatprep.subr.bf16.mxu0 0
      %1844 = vmatpush1.bf16.msra.mxu0 0
      %1845 = vmatprep.subr.bf16.mxu0 0
      %1846 = vmatpush1.bf16.msra.mxu0 0
      %1847 = vmatprep.subr.bf16.mxu0 0
      %1848 = vmatpush1.bf16.msra.mxu0 0
      %1849 = vmatprep.subr.bf16.mxu0 0
      %1850 = vmatpush1.bf16.msra.mxu0 0
      %1851 = vmatprep.subr.bf16.mxu0 0
      %1852 = vmatpush1.bf16.msra.mxu0 0
      %1853 = vmatprep.subr.bf16.mxu0 0
      %1854 = vmatpush1.bf16.msra.mxu0 0
      %1855 = vmatprep.subr.bf16.mxu0 0
      %1856 = vmatpush1.bf16.msra.mxu0 0
      %1857 = vmatprep.subr.bf16.mxu0 0
      %1858 = vmatpush1.bf16.msra.mxu0 0
      %1859 = vmatprep.subr.bf16.mxu0 0
      %1860 = vmatpush1.bf16.msra.mxu0 0
      %1861 = vmatprep.subr.bf16.mxu0 0
      %1862 = vmatpush1.bf16.msra.mxu0 0
      %1863 = vmatprep.mubr.bf16.mxu0 0
      %1864 = vmatmul.mubr.bf16.gmra.mrb[0].mxu0 %v1829
      %v1865 = vpop.f32.mrb[0].mxu0
      %v1866 = vadd.f32 0.0, %v1865
      %v1867 = vpop.f32.mrb[0].mxu0
      %v1868 = vpop.f32.mrb[0].mxu0
      %v1869 = vadd.f32 0.0, %v1868
      %v1870 = vpop.f32.mrb[0].mxu0
      %1871 = vdwg.mxu0
      %v1872 = vpack.c.bf16 %v1869, %v1866
      %s1873 = scalar_lea.vmem %s4, 64
      %v1874 = vld [vmem:[%s1873] sm:$0xf]
      %v1875 = vld [vmem:[%s1873 + $0x4] sm:$0xf]
      %v1878 = vunpack.c.l.b16 %v1874
      %v1879 = vunpack.c.l.b16 %v1875
      %v1880 = vpack.c.b16 %v1879, %v1878
      %v1883 = vsel %vm1077, %v1872, 0
      %1885 = vmatprep.subr.bf16.mxu0 0
      %1886 = vmatpush1.bf16.msra.mxu0 %v1880
      %1887 = vmatprep.subr.bf16.mxu0 0
      %1888 = vmatpush1.bf16.msra.mxu0 0
      %1889 = vmatprep.subr.bf16.mxu0 0
      %1890 = vmatpush1.bf16.msra.mxu0 0
      %1891 = vmatprep.subr.bf16.mxu0 0
      %1892 = vmatpush1.bf16.msra.mxu0 0
      %1893 = vmatprep.subr.bf16.mxu0 0
      %1894 = vmatpush1.bf16.msra.mxu0 0
      %1895 = vmatprep.subr.bf16.mxu0 0
      %1896 = vmatpush1.bf16.msra.mxu0 0
      %1897 = vmatprep.subr.bf16.mxu0 0
      %1898 = vmatpush1.bf16.msra.mxu0 0
      %1899 = vmatprep.subr.bf16.mxu0 0
      %1900 = vmatpush1.bf16.msra.mxu0 0
      %1901 = vmatprep.subr.bf16.mxu0 0
      %1902 = vmatpush1.bf16.msra.mxu0 0
      %1903 = vmatprep.subr.bf16.mxu0 0
      %1904 = vmatpush1.bf16.msra.mxu0 0
      %1905 = vmatprep.subr.bf16.mxu0 0
      %1906 = vmatpush1.bf16.msra.mxu0 0
      %1907 = vmatprep.subr.bf16.mxu0 0
      %1908 = vmatpush1.bf16.msra.mxu0 0
      %1909 = vmatprep.subr.bf16.mxu0 0
      %1910 = vmatpush1.bf16.msra.mxu0 0
      %1911 = vmatprep.subr.bf16.mxu0 0
      %1912 = vmatpush1.bf16.msra.mxu0 0
      %1913 = vmatprep.subr.bf16.mxu0 0
      %1914 = vmatpush1.bf16.msra.mxu0 0
      %1915 = vmatprep.subr.bf16.mxu0 0
      %1916 = vmatpush1.bf16.msra.mxu0 0
      %1917 = vmatprep.mubr.bf16.mxu0 0
      %1918 = vmatmul.mubr.bf16.gmra.mrb[0].mxu0 %v1883
      %v1919 = vpop.f32.mrb[0].mxu0
      %v1920 = vadd.f32 0.0, %v1919
      %v1921 = vpop.f32.mrb[0].mxu0
      %v1922 = vpop.f32.mrb[0].mxu0
      %v1923 = vadd.f32 0.0, %v1922
      %v1924 = vpop.f32.mrb[0].mxu0
      %1925 = vdwg.mxu0
      %v1926 = vadd.f32 %v1818, %v1920
      %v1927 = vadd.f32 %v1819, %v1923
      %v1928 = vld [vmem:[%s5] sm:$0x1]
      %v1930 = vlaneseq
      %v1931 = vshrl.u32 %v1930, 7
      %v1932 = vsub.s32 0, %v1931
      %v1933 = vrot.slane %v1928, %v1932
      %v1935 = vadd.f32 %v1926, %v1933
      %v1936 = vadd.f32 %v1927, %v1933
      %vm1937 = vcmp.gt.f32.partialorder %v1935, 0.0
      %vm1938 = vcmp.gt.f32.partialorder %v1936, 0.0
      %v1939 = vmul.f32 %v1935, 0.2
      %v1940 = vmul.f32 %v1936, 0.2
      %v1941 = vsel %vm1937, %v1935, %v1939
      %v1942 = vsel %vm1938, %v1936, %v1940
      %v1943 = vld [vmem:[%s6] sm:$0x1]
      %v1945 = vlaneseq
      %v1946 = vshrl.u32 %v1945, 7
      %v1947 = vsub.s32 0, %v1946
      %v1948 = vrot.slane %v1943, %v1947
      %v1950 = vmul.f32 %v1941, %v1948
      %v1951 = vmul.f32 %v1942, %v1948
      %v1952 = vld [vmem:[%s7] sm:$0x1]
      %v1954 = vlaneseq
      %v1955 = vshrl.u32 %v1954, 7
      %v1956 = vsub.s32 0, %v1955
      %v1957 = vrot.slane %v1952, %v1956
      %v1959 = vadd.f32 %v1950, %v1957
      %v1960 = vadd.f32 %v1951, %v1957
      %v1961 = vpack.c.bf16 %v1960, %v1959
      %v1962 = vld [vmem:[%s8] sm:$0x3]
      %v1964 = vsel %vm1077, %v1962, 0
      %1966 = vmatprep.subr.bf16.mxu0 0
      %1967 = vmatpush1.bf16.msra.mxu0 %v1961
      %1968 = vmatprep.subr.bf16.mxu0 0
      %1969 = vmatpush1.bf16.msra.mxu0 0
      %1970 = vmatprep.subr.bf16.mxu0 0
      %1971 = vmatpush1.bf16.msra.mxu0 0
      %1972 = vmatprep.subr.bf16.mxu0 0
      %1973 = vmatpush1.bf16.msra.mxu0 0
      %1974 = vmatprep.subr.bf16.mxu0 0
      %1975 = vmatpush1.bf16.msra.mxu0 0
      %1976 = vmatprep.subr.bf16.mxu0 0
      %1977 = vmatpush1.bf16.msra.mxu0 0
      %1978 = vmatprep.subr.bf16.mxu0 0
      %1979 = vmatpush1.bf16.msra.mxu0 0
      %1980 = vmatprep.subr.bf16.mxu0 0
      %1981 = vmatpush1.bf16.msra.mxu0 0
      %1982 = vmatprep.subr.bf16.mxu0 0
      %1983 = vmatpush1.bf16.msra.mxu0 0
      %1984 = vmatprep.subr.bf16.mxu0 0
      %1985 = vmatpush1.bf16.msra.mxu0 0
      %1986 = vmatprep.subr.bf16.mxu0 0
      %1987 = vmatpush1.bf16.msra.mxu0 0
      %1988 = vmatprep.subr.bf16.mxu0 0
      %1989 = vmatpush1.bf16.msra.mxu0 0
      %1990 = vmatprep.subr.bf16.mxu0 0
      %1991 = vmatpush1.bf16.msra.mxu0 0
      %1992 = vmatprep.subr.bf16.mxu0 0
      %1993 = vmatpush1.bf16.msra.mxu0 0
      %1994 = vmatprep.subr.bf16.mxu0 0
      %1995 = vmatpush1.bf16.msra.mxu0 0
      %1996 = vmatprep.subr.bf16.mxu0 0
      %1997 = vmatpush1.bf16.msra.mxu0 0
      %1998 = vmatprep.mubr.bf16.mxu0 0
      %1999 = vmatmul.mubr.bf16.gmra.mrb[0].mxu0 %v1964
      %v2000 = vpop.f32.mrb[0].mxu0
      %v2001 = vadd.f32 0.0, %v2000
      %v2002 = vpop.f32.mrb[0].mxu0
      %v2003 = vpop.f32.mrb[0].mxu0
      %v2004 = vpop.f32.mrb[0].mxu0
      %2005 = vdwg.mxu0
      %v2006 = vpack.c.bf16 %v2001, %v2001
      %v2007 = vld [vmem:[%s9] sm:$0xf]
      %v2008 = vld [vmem:[%s9 + $0x4] sm:$0xf]
      %v2009 = vld [vmem:[%s9 + $0x8] sm:$0xf]
      %v2010 = vld [vmem:[%s9 + $0xc] sm:$0xf]
      %s2011 = scalar_lea.vmem %s8, 2
      %v2012 = vld [vmem:[%s2011] sm:$0x3]
      %v2014 = vsel %vm1077, %v2012, 0
      %2016 = vmatprep.subr.bf16.mxu0 0
      %2017 = vmatpush1.bf16.msra.mxu0 %v1961
      %2018 = vmatprep.subr.bf16.mxu0 0
      %2019 = vmatpush1.bf16.msra.mxu0 0
      %2020 = vmatprep.subr.bf16.mxu0 0
      %2021 = vmatpush1.bf16.msra.mxu0 0
      %2022 = vmatprep.subr.bf16.mxu0 0
      %2023 = vmatpush1.bf16.msra.mxu0 0
      %2024 = vmatprep.subr.bf16.mxu0 0
      %2025 = vmatpush1.bf16.msra.mxu0 0
      %2026 = vmatprep.subr.bf16.mxu0 0
      %2027 = vmatpush1.bf16.msra.mxu0 0
      %2028 = vmatprep.subr.bf16.mxu0 0
      %2029 = vmatpush1.bf16.msra.mxu0 0
      %2030 = vmatprep.subr.bf16.mxu0 0
      %2031 = vmatpush1.bf16.msra.mxu0 0
      %2032 = vmatprep.subr.bf16.mxu0 0
      %2033 = vmatpush1.bf16.msra.mxu0 0
      %2034 = vmatprep.subr.bf16.mxu0 0
      %2035 = vmatpush1.bf16.msra.mxu0 0
      %2036 = vmatprep.subr.bf16.mxu0 0
      %2037 = vmatpush1.bf16.msra.mxu0 0
      %2038 = vmatprep.subr.bf16.mxu0 0
      %2039 = vmatpush1.bf16.msra.mxu0 0
      %2040 = vmatprep.subr.bf16.mxu0 0
      %2041 = vmatpush1.bf16.msra.mxu0 0
      %2042 = vmatprep.subr.bf16.mxu0 0
      %2043 = vmatpush1.bf16.msra.mxu0 0
      %2044 = vmatprep.subr.bf16.mxu0 0
      %2045 = vmatpush1.bf16.msra.mxu0 0
      %2046 = vmatprep.subr.bf16.mxu0 0
      %2047 = vmatpush1.bf16.msra.mxu0 0
      %2048 = vmatprep.mubr.bf16.mxu0 0
      %2049 = vmatmul.mubr.bf16.gmra.mrb[0].mxu0 %v2014
      %v2050 = vpop.f32.mrb[0].mxu0
      %v2051 = vadd.f32 0.0, %v2050
      %v2052 = vpop.f32.mrb[0].mxu0
      %v2053 = vpop.f32.mrb[0].mxu0
      %v2054 = vpop.f32.mrb[0].mxu0
      %2055 = vdwg.mxu0
      %v2056 = vpack.c.bf16 %v2051, %v2051
      %s2057 = scalar_lea.vmem %s9, 16
      %v2058 = vld [vmem:[%s2057] sm:$0xf]
      %v2059 = vld [vmem:[%s2057 + $0x4] sm:$0xf]
      %v2060 = vld [vmem:[%s2057 + $0x8] sm:$0xf]
      %v2061 = vld [vmem:[%s2057 + $0xc] sm:$0xf]
      %v2066 = vunpack.c.l.b16 %v2058
      %v2067 = vunpack.c.l.b16 %v2059
      %v2068 = vunpack.c.l.b16 %v2060
      %v2069 = vunpack.c.l.b16 %v2061
      %v2070 = vpack.c.b16 %v2067, %v2066
      %v2071 = vpack.c.b16 %v2069, %v2068
      %vm2074 = vcmask 261120
      %v2076 = vsel %vm2074, %v2056, 0
      %2078 = vmatprep.subr.bf16.mxu0 0
      %2079 = vmatpush1.bf16.msra.mxu0 %v2070
      %2080 = vmatprep.subr.bf16.mxu0 0
      %2081 = vmatpush1.bf16.msra.mxu0 %v2071
      %2082 = vmatprep.subr.bf16.mxu0 0
      %2083 = vmatpush1.bf16.msra.mxu0 0
      %2084 = vmatprep.subr.bf16.mxu0 0
      %2085 = vmatpush1.bf16.msra.mxu0 0
      %2086 = vmatprep.subr.bf16.mxu0 0
      %2087 = vmatpush1.bf16.msra.mxu0 0
      %2088 = vmatprep.subr.bf16.mxu0 0
      %2089 = vmatpush1.bf16.msra.mxu0 0
      %2090 = vmatprep.subr.bf16.mxu0 0
      %2091 = vmatpush1.bf16.msra.mxu0 0
      %2092 = vmatprep.subr.bf16.mxu0 0
      %2093 = vmatpush1.bf16.msra.mxu0 0
      %2094 = vmatprep.subr.bf16.mxu0 0
      %2095 = vmatpush1.bf16.msra.mxu0 0
      %2096 = vmatprep.subr.bf16.mxu0 0
      %2097 = vmatpush1.bf16.msra.mxu0 0
      %2098 = vmatprep.subr.bf16.mxu0 0
      %2099 = vmatpush1.bf16.msra.mxu0 0
      %2100 = vmatprep.subr.bf16.mxu0 0
      %2101 = vmatpush1.bf16.msra.mxu0 0
      %2102 = vmatprep.subr.bf16.mxu0 0
      %2103 = vmatpush1.bf16.msra.mxu0 0
      %2104 = vmatprep.subr.bf16.mxu0 0
      %2105 = vmatpush1.bf16.msra.mxu0 0
      %2106 = vmatprep.subr.bf16.mxu0 0
      %2107 = vmatpush1.bf16.msra.mxu0 0
      %2108 = vmatprep.subr.bf16.mxu0 0
      %2109 = vmatpush1.bf16.msra.mxu0 0
      %2110 = vmatprep.mubr.bf16.mxu0 0
      %2111 = vmatmul.mubr.bf16.gmra.mrb[0].mxu0 %v2076
      %v2112 = vpop.f32.mrb[0].mxu0
      %v2113 = vadd.f32 0.0, %v2112
      %v2114 = vpop.f32.mrb[0].mxu0
      %v2115 = vpop.f32.mrb[0].mxu0
      %v2116 = vpop.f32.mrb[0].mxu0
      %2117 = vdwg.mxu0
      %v2122 = vunpack.c.l.b16 %v2007
      %v2123 = vunpack.c.l.b16 %v2008
      %v2124 = vunpack.c.l.b16 %v2009
      %v2125 = vunpack.c.l.b16 %v2010
      %v2126 = vpack.c.b16 %v2123, %v2122
      %v2127 = vpack.c.b16 %v2125, %v2124
      %v2131 = vsel %vm2074, %v2006, 0
      %2133 = vmatprep.subr.bf16.mxu0 0
      %2134 = vmatpush1.bf16.msra.mxu0 %v2126
      %2135 = vmatprep.subr.bf16.mxu0 0
      %2136 = vmatpush1.bf16.msra.mxu0 %v2127
      %2137 = vmatprep.subr.bf16.mxu0 0
      %2138 = vmatpush1.bf16.msra.mxu0 0
      %2139 = vmatprep.subr.bf16.mxu0 0
      %2140 = vmatpush1.bf16.msra.mxu0 0
      %2141 = vmatprep.subr.bf16.mxu0 0
      %2142 = vmatpush1.bf16.msra.mxu0 0
      %2143 = vmatprep.subr.bf16.mxu0 0
      %2144 = vmatpush1.bf16.msra.mxu0 0
      %2145 = vmatprep.subr.bf16.mxu0 0
      %2146 = vmatpush1.bf16.msra.mxu0 0
      %2147 = vmatprep.subr.bf16.mxu0 0
      %2148 = vmatpush1.bf16.msra.mxu0 0
      %2149 = vmatprep.subr.bf16.mxu0 0
      %2150 = vmatpush1.bf16.msra.mxu0 0
      %2151 = vmatprep.subr.bf16.mxu0 0
      %2152 = vmatpush1.bf16.msra.mxu0 0
      %2153 = vmatprep.subr.bf16.mxu0 0
      %2154 = vmatpush1.bf16.msra.mxu0 0
      %2155 = vmatprep.subr.bf16.mxu0 0
      %2156 = vmatpush1.bf16.msra.mxu0 0
      %2157 = vmatprep.subr.bf16.mxu0 0
      %2158 = vmatpush1.bf16.msra.mxu0 0
      %2159 = vmatprep.subr.bf16.mxu0 0
      %2160 = vmatpush1.bf16.msra.mxu0 0
      %2161 = vmatprep.subr.bf16.mxu0 0
      %2162 = vmatpush1.bf16.msra.mxu0 0
      %2163 = vmatprep.subr.bf16.mxu0 0
      %2164 = vmatpush1.bf16.msra.mxu0 0
      %2165 = vmatprep.mubr.bf16.mxu0 0
      %2166 = vmatmul.mubr.bf16.gmra.mrb[0].mxu0 %v2131
      %v2167 = vpop.f32.mrb[0].mxu0
      %v2168 = vadd.f32 %v2113, %v2167
      %v2169 = vpop.f32.mrb[0].mxu0
      %v2170 = vpop.f32.mrb[0].mxu0
      %v2171 = vpop.f32.mrb[0].mxu0
      %2172 = vdwg.mxu0
      %s2173 = scalar_lea.vmem %s8, 4
      %v2174 = vld [vmem:[%s2173] sm:$0x3]
      %v2176 = vsel %vm1077, %v2174, 0
      %2178 = vmatprep.subr.bf16.mxu0 0
      %2179 = vmatpush1.bf16.msra.mxu0 %v1961
      %2180 = vmatprep.subr.bf16.mxu0 0
      %2181 = vmatpush1.bf16.msra.mxu0 0
      %2182 = vmatprep.subr.bf16.mxu0 0
      %2183 = vmatpush1.bf16.msra.mxu0 0
      %2184 = vmatprep.subr.bf16.mxu0 0
      %2185 = vmatpush1.bf16.msra.mxu0 0
      %2186 = vmatprep.subr.bf16.mxu0 0
      %2187 = vmatpush1.bf16.msra.mxu0 0
      %2188 = vmatprep.subr.bf16.mxu0 0
      %2189 = vmatpush1.bf16.msra.mxu0 0
      %2190 = vmatprep.subr.bf16.mxu0 0
      %2191 = vmatpush1.bf16.msra.mxu0 0
      %2192 = vmatprep.subr.bf16.mxu0 0
      %2193 = vmatpush1.bf16.msra.mxu0 0
      %2194 = vmatprep.subr.bf16.mxu0 0
      %2195 = vmatpush1.bf16.msra.mxu0 0
      %2196 = vmatprep.subr.bf16.mxu0 0
      %2197 = vmatpush1.bf16.msra.mxu0 0
      %2198 = vmatprep.subr.bf16.mxu0 0
      %2199 = vmatpush1.bf16.msra.mxu0 0
      %2200 = vmatprep.subr.bf16.mxu0 0
      %2201 = vmatpush1.bf16.msra.mxu0 0
      %2202 = vmatprep.subr.bf16.mxu0 0
      %2203 = vmatpush1.bf16.msra.mxu0 0
      %2204 = vmatprep.subr.bf16.mxu0 0
      %2205 = vmatpush1.bf16.msra.mxu0 0
      %2206 = vmatprep.subr.bf16.mxu0 0
      %2207 = vmatpush1.bf16.msra.mxu0 0
      %2208 = vmatprep.subr.bf16.mxu0 0
      %2209 = vmatpush1.bf16.msra.mxu0 0
      %2210 = vmatprep.mubr.bf16.mxu0 0
      %2211 = vmatmul.mubr.bf16.gmra.mrb[0].mxu0 %v2176
      %v2212 = vpop.f32.mrb[0].mxu0
      %v2213 = vadd.f32 0.0, %v2212
      %v2214 = vpop.f32.mrb[0].mxu0
      %v2215 = vpop.f32.mrb[0].mxu0
      %v2216 = vpop.f32.mrb[0].mxu0
      %2217 = vdwg.mxu0
      %v2218 = vpack.c.bf16 %v2213, %v2213
      %s2219 = scalar_lea.vmem %s9, 32
      %v2220 = vld [vmem:[%s2219] sm:$0xf]
      %v2221 = vld [vmem:[%s2219 + $0x4] sm:$0xf]
      %v2222 = vld [vmem:[%s2219 + $0x8] sm:$0xf]
      %v2223 = vld [vmem:[%s2219 + $0xc] sm:$0xf]
      %v2228 = vunpack.c.l.b16 %v2220
      %v2229 = vunpack.c.l.b16 %v2221
      %v2230 = vunpack.c.l.b16 %v2222
      %v2231 = vunpack.c.l.b16 %v2223
      %v2232 = vpack.c.b16 %v2229, %v2228
      %v2233 = vpack.c.b16 %v2231, %v2230
      %v2237 = vsel %vm2074, %v2218, 0
      %2239 = vmatprep.subr.bf16.mxu0 0
      %2240 = vmatpush1.bf16.msra.mxu0 %v2232
      %2241 = vmatprep.subr.bf16.mxu0 0
      %2242 = vmatpush1.bf16.msra.mxu0 %v2233
      %2243 = vmatprep.subr.bf16.mxu0 0
      %2244 = vmatpush1.bf16.msra.mxu0 0
      %2245 = vmatprep.subr.bf16.mxu0 0
      %2246 = vmatpush1.bf16.msra.mxu0 0
      %2247 = vmatprep.subr.bf16.mxu0 0
      %2248 = vmatpush1.bf16.msra.mxu0 0
      %2249 = vmatprep.subr.bf16.mxu0 0
      %2250 = vmatpush1.bf16.msra.mxu0 0
      %2251 = vmatprep.subr.bf16.mxu0 0
      %2252 = vmatpush1.bf16.msra.mxu0 0
      %2253 = vmatprep.subr.bf16.mxu0 0
      %2254 = vmatpush1.bf16.msra.mxu0 0
      %2255 = vmatprep.subr.bf16.mxu0 0
      %2256 = vmatpush1.bf16.msra.mxu0 0
      %2257 = vmatprep.subr.bf16.mxu0 0
      %2258 = vmatpush1.bf16.msra.mxu0 0
      %2259 = vmatprep.subr.bf16.mxu0 0
      %2260 = vmatpush1.bf16.msra.mxu0 0
      %2261 = vmatprep.subr.bf16.mxu0 0
      %2262 = vmatpush1.bf16.msra.mxu0 0
      %2263 = vmatprep.subr.bf16.mxu0 0
      %2264 = vmatpush1.bf16.msra.mxu0 0
      %2265 = vmatprep.subr.bf16.mxu0 0
      %2266 = vmatpush1.bf16.msra.mxu0 0
      %2267 = vmatprep.subr.bf16.mxu0 0
      %2268 = vmatpush1.bf16.msra.mxu0 0
      %2269 = vmatprep.subr.bf16.mxu0 0
      %2270 = vmatpush1.bf16.msra.mxu0 0
      %2271 = vmatprep.mubr.bf16.mxu0 0
      %2272 = vmatmul.mubr.bf16.gmra.mrb[0].mxu0 %v2237
      %v2273 = vpop.f32.mrb[0].mxu0
      %v2274 = vadd.f32 0.0, %v2273
      %v2275 = vpop.f32.mrb[0].mxu0
      %v2276 = vpop.f32.mrb[0].mxu0
      %v2277 = vpop.f32.mrb[0].mxu0
      %2278 = vdwg.mxu0
      %v2279 = vadd.f32 %v2168, %v2274
      %s2280 = scalar_lea.vmem %s8, 6
      %v2281 = vld [vmem:[%s2280] sm:$0x3]
      %v2283 = vsel %vm1077, %v2281, 0
      %2285 = vmatprep.subr.bf16.mxu0 0
      %2286 = vmatpush1.bf16.msra.mxu0 %v1961
      %2287 = vmatprep.subr.bf16.mxu0 0
      %2288 = vmatpush1.bf16.msra.mxu0 0
      %2289 = vmatprep.subr.bf16.mxu0 0
      %2290 = vmatpush1.bf16.msra.mxu0 0
      %2291 = vmatprep.subr.bf16.mxu0 0
      %2292 = vmatpush1.bf16.msra.mxu0 0
      %2293 = vmatprep.subr.bf16.mxu0 0
      %2294 = vmatpush1.bf16.msra.mxu0 0
      %2295 = vmatprep.subr.bf16.mxu0 0
      %2296 = vmatpush1.bf16.msra.mxu0 0
      %2297 = vmatprep.subr.bf16.mxu0 0
      %2298 = vmatpush1.bf16.msra.mxu0 0
      %2299 = vmatprep.subr.bf16.mxu0 0
      %2300 = vmatpush1.bf16.msra.mxu0 0
      %2301 = vmatprep.subr.bf16.mxu0 0
      %2302 = vmatpush1.bf16.msra.mxu0 0
      %2303 = vmatprep.subr.bf16.mxu0 0
      %2304 = vmatpush1.bf16.msra.mxu0 0
      %2305 = vmatprep.subr.bf16.mxu0 0
      %2306 = vmatpush1.bf16.msra.mxu0 0
      %2307 = vmatprep.subr.bf16.mxu0 0
      %2308 = vmatpush1.bf16.msra.mxu0 0
      %2309 = vmatprep.subr.bf16.mxu0 0
      %2310 = vmatpush1.bf16.msra.mxu0 0
      %2311 = vmatprep.subr.bf16.mxu0 0
      %2312 = vmatpush1.bf16.msra.mxu0 0
      %2313 = vmatprep.subr.bf16.mxu0 0
      %2314 = vmatpush1.bf16.msra.mxu0 0
      %2315 = vmatprep.subr.bf16.mxu0 0
      %2316 = vmatpush1.bf16.msra.mxu0 0
      %2317 = vmatprep.mubr.bf16.mxu0 0
      %2318 = vmatmul.mubr.bf16.gmra.mrb[0].mxu0 %v2283
      %v2319 = vpop.f32.mrb[0].mxu0
      %v2320 = vadd.f32 0.0, %v2319
      %v2321 = vpop.f32.mrb[0].mxu0
      %v2322 = vpop.f32.mrb[0].mxu0
      %v2323 = vpop.f32.mrb[0].mxu0
      %2324 = vdwg.mxu0
      %v2325 = vpack.c.bf16 %v2320, %v2320
      %s2326 = scalar_lea.vmem %s9, 48
      %v2327 = vld [vmem:[%s2326] sm:$0xf]
      %v2328 = vld [vmem:[%s2326 + $0x4] sm:$0xf]
      %v2329 = vld [vmem:[%s2326 + $0x8] sm:$0xf]
      %v2330 = vld [vmem:[%s2326 + $0xc] sm:$0xf]
      %v2335 = vunpack.c.l.b16 %v2327
      %v2336 = vunpack.c.l.b16 %v2328
      %v2337 = vunpack.c.l.b16 %v2329
      %v2338 = vunpack.c.l.b16 %v2330
      %v2339 = vpack.c.b16 %v2336, %v2335
      %v2340 = vpack.c.b16 %v2338, %v2337
      %v2344 = vsel %vm2074, %v2325, 0
      %2346 = vmatprep.subr.bf16.mxu0 0
      %2347 = vmatpush1.bf16.msra.mxu0 %v2339
      %2348 = vmatprep.subr.bf16.mxu0 0
      %2349 = vmatpush1.bf16.msra.mxu0 %v2340
      %2350 = vmatprep.subr.bf16.mxu0 0
      %2351 = vmatpush1.bf16.msra.mxu0 0
      %2352 = vmatprep.subr.bf16.mxu0 0
      %2353 = vmatpush1.bf16.msra.mxu0 0
      %2354 = vmatprep.subr.bf16.mxu0 0
      %2355 = vmatpush1.bf16.msra.mxu0 0
      %2356 = vmatprep.subr.bf16.mxu0 0
      %2357 = vmatpush1.bf16.msra.mxu0 0
      %2358 = vmatprep.subr.bf16.mxu0 0
      %2359 = vmatpush1.bf16.msra.mxu0 0
      %2360 = vmatprep.subr.bf16.mxu0 0
      %2361 = vmatpush1.bf16.msra.mxu0 0
      %2362 = vmatprep.subr.bf16.mxu0 0
      %2363 = vmatpush1.bf16.msra.mxu0 0
      %2364 = vmatprep.subr.bf16.mxu0 0
      %2365 = vmatpush1.bf16.msra.mxu0 0
      %2366 = vmatprep.subr.bf16.mxu0 0
      %2367 = vmatpush1.bf16.msra.mxu0 0
      %2368 = vmatprep.subr.bf16.mxu0 0
      %2369 = vmatpush1.bf16.msra.mxu0 0
      %2370 = vmatprep.subr.bf16.mxu0 0
      %2371 = vmatpush1.bf16.msra.mxu0 0
      %2372 = vmatprep.subr.bf16.mxu0 0
      %2373 = vmatpush1.bf16.msra.mxu0 0
      %2374 = vmatprep.subr.bf16.mxu0 0
      %2375 = vmatpush1.bf16.msra.mxu0 0
      %2376 = vmatprep.subr.bf16.mxu0 0
      %2377 = vmatpush1.bf16.msra.mxu0 0
      %2378 = vmatprep.mubr.bf16.mxu0 0
      %2379 = vmatmul.mubr.bf16.gmra.mrb[0].mxu0 %v2344
      %v2380 = vpop.f32.mrb[0].mxu0
      %v2381 = vadd.f32 0.0, %v2380
      %v2382 = vpop.f32.mrb[0].mxu0
      %v2383 = vpop.f32.mrb[0].mxu0
      %v2384 = vpop.f32.mrb[0].mxu0
      %2385 = vdwg.mxu0
      %v2386 = vadd.f32 %v2279, %v2381
      %s2387 = scalar_lea.vmem %s8, 8
      %v2388 = vld [vmem:[%s2387] sm:$0x3]
      %v2390 = vsel %vm1077, %v2388, 0
      %2392 = vmatprep.subr.bf16.mxu0 0
      %2393 = vmatpush1.bf16.msra.mxu0 %v1961
      %2394 = vmatprep.subr.bf16.mxu0 0
      %2395 = vmatpush1.bf16.msra.mxu0 0
      %2396 = vmatprep.subr.bf16.mxu0 0
      %2397 = vmatpush1.bf16.msra.mxu0 0
      %2398 = vmatprep.subr.bf16.mxu0 0
      %2399 = vmatpush1.bf16.msra.mxu0 0
      %2400 = vmatprep.subr.bf16.mxu0 0
      %2401 = vmatpush1.bf16.msra.mxu0 0
      %2402 = vmatprep.subr.bf16.mxu0 0
      %2403 = vmatpush1.bf16.msra.mxu0 0
      %2404 = vmatprep.subr.bf16.mxu0 0
      %2405 = vmatpush1.bf16.msra.mxu0 0
      %2406 = vmatprep.subr.bf16.mxu0 0
      %2407 = vmatpush1.bf16.msra.mxu0 0
      %2408 = vmatprep.subr.bf16.mxu0 0
      %2409 = vmatpush1.bf16.msra.mxu0 0
      %2410 = vmatprep.subr.bf16.mxu0 0
      %2411 = vmatpush1.bf16.msra.mxu0 0
      %2412 = vmatprep.subr.bf16.mxu0 0
      %2413 = vmatpush1.bf16.msra.mxu0 0
      %2414 = vmatprep.subr.bf16.mxu0 0
      %2415 = vmatpush1.bf16.msra.mxu0 0
      %2416 = vmatprep.subr.bf16.mxu0 0
      %2417 = vmatpush1.bf16.msra.mxu0 0
      %2418 = vmatprep.subr.bf16.mxu0 0
      %2419 = vmatpush1.bf16.msra.mxu0 0
      %2420 = vmatprep.subr.bf16.mxu0 0
      %2421 = vmatpush1.bf16.msra.mxu0 0
      %2422 = vmatprep.subr.bf16.mxu0 0
      %2423 = vmatpush1.bf16.msra.mxu0 0
      %2424 = vmatprep.mubr.bf16.mxu0 0
      %2425 = vmatmul.mubr.bf16.gmra.mrb[0].mxu0 %v2390
      %v2426 = vpop.f32.mrb[0].mxu0
      %v2427 = vadd.f32 0.0, %v2426
      %v2428 = vpop.f32.mrb[0].mxu0
      %v2429 = vpop.f32.mrb[0].mxu0
      %v2430 = vpop.f32.mrb[0].mxu0
      %2431 = vdwg.mxu0
      %v2432 = vpack.c.bf16 %v2427, %v2427
      %s2433 = scalar_lea.vmem %s9, 64
      %v2434 = vld [vmem:[%s2433] sm:$0xf]
      %v2435 = vld [vmem:[%s2433 + $0x4] sm:$0xf]
      %v2436 = vld [vmem:[%s2433 + $0x8] sm:$0xf]
      %v2437 = vld [vmem:[%s2433 + $0xc] sm:$0xf]
      %v2442 = vunpack.c.l.b16 %v2434
      %v2443 = vunpack.c.l.b16 %v2435
      %v2444 = vunpack.c.l.b16 %v2436
      %v2445 = vunpack.c.l.b16 %v2437
      %v2446 = vpack.c.b16 %v2443, %v2442
      %v2447 = vpack.c.b16 %v2445, %v2444
      %v2451 = vsel %vm2074, %v2432, 0
      %2453 = vmatprep.subr.bf16.mxu0 0
      %2454 = vmatpush1.bf16.msra.mxu0 %v2446
      %2455 = vmatprep.subr.bf16.mxu0 0
      %2456 = vmatpush1.bf16.msra.mxu0 %v2447
      %2457 = vmatprep.subr.bf16.mxu0 0
      %2458 = vmatpush1.bf16.msra.mxu0 0
      %2459 = vmatprep.subr.bf16.mxu0 0
      %2460 = vmatpush1.bf16.msra.mxu0 0
      %2461 = vmatprep.subr.bf16.mxu0 0
      %2462 = vmatpush1.bf16.msra.mxu0 0
      %2463 = vmatprep.subr.bf16.mxu0 0
      %2464 = vmatpush1.bf16.msra.mxu0 0
      %2465 = vmatprep.subr.bf16.mxu0 0
      %2466 = vmatpush1.bf16.msra.mxu0 0
      %2467 = vmatprep.subr.bf16.mxu0 0
      %2468 = vmatpush1.bf16.msra.mxu0 0
      %2469 = vmatprep.subr.bf16.mxu0 0
      %2470 = vmatpush1.bf16.msra.mxu0 0
      %2471 = vmatprep.subr.bf16.mxu0 0
      %2472 = vmatpush1.bf16.msra.mxu0 0
      %2473 = vmatprep.subr.bf16.mxu0 0
      %2474 = vmatpush1.bf16.msra.mxu0 0
      %2475 = vmatprep.subr.bf16.mxu0 0
      %2476 = vmatpush1.bf16.msra.mxu0 0
      %2477 = vmatprep.subr.bf16.mxu0 0
      %2478 = vmatpush1.bf16.msra.mxu0 0
      %2479 = vmatprep.subr.bf16.mxu0 0
      %2480 = vmatpush1.bf16.msra.mxu0 0
      %2481 = vmatprep.subr.bf16.mxu0 0
      %2482 = vmatpush1.bf16.msra.mxu0 0
      %2483 = vmatprep.subr.bf16.mxu0 0
      %2484 = vmatpush1.bf16.msra.mxu0 0
      %2485 = vmatprep.mubr.bf16.mxu0 0
      %2486 = vmatmul.mubr.bf16.gmra.mrb[0].mxu0 %v2451
      %v2487 = vpop.f32.mrb[0].mxu0
      %v2488 = vadd.f32 0.0, %v2487
      %v2489 = vpop.f32.mrb[0].mxu0
      %v2490 = vpop.f32.mrb[0].mxu0
      %v2491 = vpop.f32.mrb[0].mxu0
      %2492 = vdwg.mxu0
      %v2493 = vadd.f32 %v2386, %v2488
      %s2494 = scalar_lea.vmem %s8, 10
      %v2495 = vld [vmem:[%s2494] sm:$0x3]
      %v2497 = vsel %vm1077, %v2495, 0
      %2499 = vmatprep.subr.bf16.mxu0 0
      %2500 = vmatpush1.bf16.msra.mxu0 %v1961
      %2501 = vmatprep.subr.bf16.mxu0 0
      %2502 = vmatpush1.bf16.msra.mxu0 0
      %2503 = vmatprep.subr.bf16.mxu0 0
      %2504 = vmatpush1.bf16.msra.mxu0 0
      %2505 = vmatprep.subr.bf16.mxu0 0
      %2506 = vmatpush1.bf16.msra.mxu0 0
      %2507 = vmatprep.subr.bf16.mxu0 0
      %2508 = vmatpush1.bf16.msra.mxu0 0
      %2509 = vmatprep.subr.bf16.mxu0 0
      %2510 = vmatpush1.bf16.msra.mxu0 0
      %2511 = vmatprep.subr.bf16.mxu0 0
      %2512 = vmatpush1.bf16.msra.mxu0 0
      %2513 = vmatprep.subr.bf16.mxu0 0
      %2514 = vmatpush1.bf16.msra.mxu0 0
      %2515 = vmatprep.subr.bf16.mxu0 0
      %2516 = vmatpush1.bf16.msra.mxu0 0
      %2517 = vmatprep.subr.bf16.mxu0 0
      %2518 = vmatpush1.bf16.msra.mxu0 0
      %2519 = vmatprep.subr.bf16.mxu0 0
      %2520 = vmatpush1.bf16.msra.mxu0 0
      %2521 = vmatprep.subr.bf16.mxu0 0
      %2522 = vmatpush1.bf16.msra.mxu0 0
      %2523 = vmatprep.subr.bf16.mxu0 0
      %2524 = vmatpush1.bf16.msra.mxu0 0
      %2525 = vmatprep.subr.bf16.mxu0 0
      %2526 = vmatpush1.bf16.msra.mxu0 0
      %2527 = vmatprep.subr.bf16.mxu0 0
      %2528 = vmatpush1.bf16.msra.mxu0 0
      %2529 = vmatprep.subr.bf16.mxu0 0
      %2530 = vmatpush1.bf16.msra.mxu0 0
      %2531 = vmatprep.mubr.bf16.mxu0 0
      %2532 = vmatmul.mubr.bf16.gmra.mrb[0].mxu0 %v2497
      %v2533 = vpop.f32.mrb[0].mxu0
      %v2534 = vadd.f32 0.0, %v2533
      %v2535 = vpop.f32.mrb[0].mxu0
      %v2536 = vpop.f32.mrb[0].mxu0
      %v2537 = vpop.f32.mrb[0].mxu0
      %2538 = vdwg.mxu0
      %v2539 = vpack.c.bf16 %v2534, %v2534
      %s2540 = scalar_lea.vmem %s9, 80
      %v2541 = vld [vmem:[%s2540] sm:$0xf]
      %v2542 = vld [vmem:[%s2540 + $0x4] sm:$0xf]
      %v2543 = vld [vmem:[%s2540 + $0x8] sm:$0xf]
      %v2544 = vld [vmem:[%s2540 + $0xc] sm:$0xf]
      %v2549 = vunpack.c.l.b16 %v2541
      %v2550 = vunpack.c.l.b16 %v2542
      %v2551 = vunpack.c.l.b16 %v2543
      %v2552 = vunpack.c.l.b16 %v2544
      %v2553 = vpack.c.b16 %v2550, %v2549
      %v2554 = vpack.c.b16 %v2552, %v2551
      %v2558 = vsel %vm2074, %v2539, 0
      %2560 = vmatprep.subr.bf16.mxu0 0
      %2561 = vmatpush1.bf16.msra.mxu0 %v2553
      %2562 = vmatprep.subr.bf16.mxu0 0
      %2563 = vmatpush1.bf16.msra.mxu0 %v2554
      %2564 = vmatprep.subr.bf16.mxu0 0
      %2565 = vmatpush1.bf16.msra.mxu0 0
      %2566 = vmatprep.subr.bf16.mxu0 0
      %2567 = vmatpush1.bf16.msra.mxu0 0
      %2568 = vmatprep.subr.bf16.mxu0 0
      %2569 = vmatpush1.bf16.msra.mxu0 0
      %2570 = vmatprep.subr.bf16.mxu0 0
      %2571 = vmatpush1.bf16.msra.mxu0 0
      %2572 = vmatprep.subr.bf16.mxu0 0
      %2573 = vmatpush1.bf16.msra.mxu0 0
      %2574 = vmatprep.subr.bf16.mxu0 0
      %2575 = vmatpush1.bf16.msra.mxu0 0
      %2576 = vmatprep.subr.bf16.mxu0 0
      %2577 = vmatpush1.bf16.msra.mxu0 0
      %2578 = vmatprep.subr.bf16.mxu0 0
      %2579 = vmatpush1.bf16.msra.mxu0 0
      %2580 = vmatprep.subr.bf16.mxu0 0
      %2581 = vmatpush1.bf16.msra.mxu0 0
      %2582 = vmatprep.subr.bf16.mxu0 0
      %2583 = vmatpush1.bf16.msra.mxu0 0
      %2584 = vmatprep.subr.bf16.mxu0 0
      %2585 = vmatpush1.bf16.msra.mxu0 0
      %2586 = vmatprep.subr.bf16.mxu0 0
      %2587 = vmatpush1.bf16.msra.mxu0 0
      %2588 = vmatprep.subr.bf16.mxu0 0
      %2589 = vmatpush1.bf16.msra.mxu0 0
      %2590 = vmatprep.subr.bf16.mxu0 0
      %2591 = vmatpush1.bf16.msra.mxu0 0
      %2592 = vmatprep.mubr.bf16.mxu0 0
      %2593 = vmatmul.mubr.bf16.gmra.mrb[0].mxu0 %v2558
      %v2594 = vpop.f32.mrb[0].mxu0
      %v2595 = vadd.f32 0.0, %v2594
      %v2596 = vpop.f32.mrb[0].mxu0
      %v2597 = vpop.f32.mrb[0].mxu0
      %v2598 = vpop.f32.mrb[0].mxu0
      %2599 = vdwg.mxu0
      %v2600 = vadd.f32 %v2493, %v2595
      %s2601 = scalar_lea.vmem %s8, 12
      %v2602 = vld [vmem:[%s2601] sm:$0x3]
      %v2604 = vsel %vm1077, %v2602, 0
      %2606 = vmatprep.subr.bf16.mxu0 0
      %2607 = vmatpush1.bf16.msra.mxu0 %v1961
      %2608 = vmatprep.subr.bf16.mxu0 0
      %2609 = vmatpush1.bf16.msra.mxu0 0
      %2610 = vmatprep.subr.bf16.mxu0 0
      %2611 = vmatpush1.bf16.msra.mxu0 0
      %2612 = vmatprep.subr.bf16.mxu0 0
      %2613 = vmatpush1.bf16.msra.mxu0 0
      %2614 = vmatprep.subr.bf16.mxu0 0
      %2615 = vmatpush1.bf16.msra.mxu0 0
      %2616 = vmatprep.subr.bf16.mxu0 0
      %2617 = vmatpush1.bf16.msra.mxu0 0
      %2618 = vmatprep.subr.bf16.mxu0 0
      %2619 = vmatpush1.bf16.msra.mxu0 0
      %2620 = vmatprep.subr.bf16.mxu0 0
      %2621 = vmatpush1.bf16.msra.mxu0 0
      %2622 = vmatprep.subr.bf16.mxu0 0
      %2623 = vmatpush1.bf16.msra.mxu0 0
      %2624 = vmatprep.subr.bf16.mxu0 0
      %2625 = vmatpush1.bf16.msra.mxu0 0
      %2626 = vmatprep.subr.bf16.mxu0 0
      %2627 = vmatpush1.bf16.msra.mxu0 0
      %2628 = vmatprep.subr.bf16.mxu0 0
      %2629 = vmatpush1.bf16.msra.mxu0 0
      %2630 = vmatprep.subr.bf16.mxu0 0
      %2631 = vmatpush1.bf16.msra.mxu0 0
      %2632 = vmatprep.subr.bf16.mxu0 0
      %2633 = vmatpush1.bf16.msra.mxu0 0
      %2634 = vmatprep.subr.bf16.mxu0 0
      %2635 = vmatpush1.bf16.msra.mxu0 0
      %2636 = vmatprep.subr.bf16.mxu0 0
      %2637 = vmatpush1.bf16.msra.mxu0 0
      %2638 = vmatprep.mubr.bf16.mxu0 0
      %2639 = vmatmul.mubr.bf16.gmra.mrb[0].mxu0 %v2604
      %v2640 = vpop.f32.mrb[0].mxu0
      %v2641 = vadd.f32 0.0, %v2640
      %v2642 = vpop.f32.mrb[0].mxu0
      %v2643 = vpop.f32.mrb[0].mxu0
      %v2644 = vpop.f32.mrb[0].mxu0
      %2645 = vdwg.mxu0
      %v2646 = vpack.c.bf16 %v2641, %v2641
      %s2647 = scalar_lea.vmem %s9, 96
      %v2648 = vld [vmem:[%s2647] sm:$0xf]
      %v2649 = vld [vmem:[%s2647 + $0x4] sm:$0xf]
      %v2650 = vld [vmem:[%s2647 + $0x8] sm:$0xf]
      %v2651 = vld [vmem:[%s2647 + $0xc] sm:$0xf]
      %v2656 = vunpack.c.l.b16 %v2648
      %v2657 = vunpack.c.l.b16 %v2649
      %v2658 = vunpack.c.l.b16 %v2650
      %v2659 = vunpack.c.l.b16 %v2651
      %v2660 = vpack.c.b16 %v2657, %v2656
      %v2661 = vpack.c.b16 %v2659, %v2658
      %v2665 = vsel %vm2074, %v2646, 0
      %2667 = vmatprep.subr.bf16.mxu0 0
      %2668 = vmatpush1.bf16.msra.mxu0 %v2660
      %2669 = vmatprep.subr.bf16.mxu0 0
      %2670 = vmatpush1.bf16.msra.mxu0 %v2661
      %2671 = vmatprep.subr.bf16.mxu0 0
      %2672 = vmatpush1.bf16.msra.mxu0 0
      %2673 = vmatprep.subr.bf16.mxu0 0
      %2674 = vmatpush1.bf16.msra.mxu0 0
      %2675 = vmatprep.subr.bf16.mxu0 0
      %2676 = vmatpush1.bf16.msra.mxu0 0
      %2677 = vmatprep.subr.bf16.mxu0 0
      %2678 = vmatpush1.bf16.msra.mxu0 0
      %2679 = vmatprep.subr.bf16.mxu0 0
      %2680 = vmatpush1.bf16.msra.mxu0 0
      %2681 = vmatprep.subr.bf16.mxu0 0
      %2682 = vmatpush1.bf16.msra.mxu0 0
      %2683 = vmatprep.subr.bf16.mxu0 0
      %2684 = vmatpush1.bf16.msra.mxu0 0
      %2685 = vmatprep.subr.bf16.mxu0 0
      %2686 = vmatpush1.bf16.msra.mxu0 0
      %2687 = vmatprep.subr.bf16.mxu0 0
      %2688 = vmatpush1.bf16.msra.mxu0 0
      %2689 = vmatprep.subr.bf16.mxu0 0
      %2690 = vmatpush1.bf16.msra.mxu0 0
      %2691 = vmatprep.subr.bf16.mxu0 0
      %2692 = vmatpush1.bf16.msra.mxu0 0
      %2693 = vmatprep.subr.bf16.mxu0 0
      %2694 = vmatpush1.bf16.msra.mxu0 0
      %2695 = vmatprep.subr.bf16.mxu0 0
      %2696 = vmatpush1.bf16.msra.mxu0 0
      %2697 = vmatprep.subr.bf16.mxu0 0
      %2698 = vmatpush1.bf16.msra.mxu0 0
      %2699 = vmatprep.mubr.bf16.mxu0 0
      %2700 = vmatmul.mubr.bf16.gmra.mrb[0].mxu0 %v2665
      %v2701 = vpop.f32.mrb[0].mxu0
      %v2702 = vadd.f32 0.0, %v2701
      %v2703 = vpop.f32.mrb[0].mxu0
      %v2704 = vpop.f32.mrb[0].mxu0
      %v2705 = vpop.f32.mrb[0].mxu0
      %2706 = vdwg.mxu0
      %v2707 = vadd.f32 %v2600, %v2702
      %s2708 = scalar_lea.vmem %s8, 14
      %v2709 = vld [vmem:[%s2708] sm:$0x3]
      %v2711 = vsel %vm1077, %v2709, 0
      %2713 = vmatprep.subr.bf16.mxu0 0
      %2714 = vmatpush1.bf16.msra.mxu0 %v1961
      %2715 = vmatprep.subr.bf16.mxu0 0
      %2716 = vmatpush1.bf16.msra.mxu0 0
      %2717 = vmatprep.subr.bf16.mxu0 0
      %2718 = vmatpush1.bf16.msra.mxu0 0
      %2719 = vmatprep.subr.bf16.mxu0 0
      %2720 = vmatpush1.bf16.msra.mxu0 0
      %2721 = vmatprep.subr.bf16.mxu0 0
      %2722 = vmatpush1.bf16.msra.mxu0 0
      %2723 = vmatprep.subr.bf16.mxu0 0
      %2724 = vmatpush1.bf16.msra.mxu0 0
      %2725 = vmatprep.subr.bf16.mxu0 0
      %2726 = vmatpush1.bf16.msra.mxu0 0
      %2727 = vmatprep.subr.bf16.mxu0 0
      %2728 = vmatpush1.bf16.msra.mxu0 0
      %2729 = vmatprep.subr.bf16.mxu0 0
      %2730 = vmatpush1.bf16.msra.mxu0 0
      %2731 = vmatprep.subr.bf16.mxu0 0
      %2732 = vmatpush1.bf16.msra.mxu0 0
      %2733 = vmatprep.subr.bf16.mxu0 0
      %2734 = vmatpush1.bf16.msra.mxu0 0
      %2735 = vmatprep.subr.bf16.mxu0 0
      %2736 = vmatpush1.bf16.msra.mxu0 0
      %2737 = vmatprep.subr.bf16.mxu0 0
      %2738 = vmatpush1.bf16.msra.mxu0 0
      %2739 = vmatprep.subr.bf16.mxu0 0
      %2740 = vmatpush1.bf16.msra.mxu0 0
      %2741 = vmatprep.subr.bf16.mxu0 0
      %2742 = vmatpush1.bf16.msra.mxu0 0
      %2743 = vmatprep.subr.bf16.mxu0 0
      %2744 = vmatpush1.bf16.msra.mxu0 0
      %2745 = vmatprep.mubr.bf16.mxu0 0
      %2746 = vmatmul.mubr.bf16.gmra.mrb[0].mxu0 %v2711
      %v2747 = vpop.f32.mrb[0].mxu0
      %v2748 = vadd.f32 0.0, %v2747
      %v2749 = vpop.f32.mrb[0].mxu0
      %v2750 = vpop.f32.mrb[0].mxu0
      %v2751 = vpop.f32.mrb[0].mxu0
      %2752 = vdwg.mxu0
      %v2753 = vpack.c.bf16 %v2748, %v2748
      %s2754 = scalar_lea.vmem %s9, 112
      %v2755 = vld [vmem:[%s2754] sm:$0xf]
      %v2756 = vld [vmem:[%s2754 + $0x4] sm:$0xf]
      %v2757 = vld [vmem:[%s2754 + $0x8] sm:$0xf]
      %v2758 = vld [vmem:[%s2754 + $0xc] sm:$0xf]
      %v2763 = vunpack.c.l.b16 %v2755
      %v2764 = vunpack.c.l.b16 %v2756
      %v2765 = vunpack.c.l.b16 %v2757
      %v2766 = vunpack.c.l.b16 %v2758
      %v2767 = vpack.c.b16 %v2764, %v2763
      %v2768 = vpack.c.b16 %v2766, %v2765
      %v2772 = vsel %vm2074, %v2753, 0
      %2774 = vmatprep.subr.bf16.mxu0 0
      %2775 = vmatpush1.bf16.msra.mxu0 %v2767
      %2776 = vmatprep.subr.bf16.mxu0 0
      %2777 = vmatpush1.bf16.msra.mxu0 %v2768
      %2778 = vmatprep.subr.bf16.mxu0 0
      %2779 = vmatpush1.bf16.msra.mxu0 0
      %2780 = vmatprep.subr.bf16.mxu0 0
      %2781 = vmatpush1.bf16.msra.mxu0 0
      %2782 = vmatprep.subr.bf16.mxu0 0
      %2783 = vmatpush1.bf16.msra.mxu0 0
      %2784 = vmatprep.subr.bf16.mxu0 0
      %2785 = vmatpush1.bf16.msra.mxu0 0
      %2786 = vmatprep.subr.bf16.mxu0 0
      %2787 = vmatpush1.bf16.msra.mxu0 0
      %2788 = vmatprep.subr.bf16.mxu0 0
      %2789 = vmatpush1.bf16.msra.mxu0 0
      %2790 = vmatprep.subr.bf16.mxu0 0
      %2791 = vmatpush1.bf16.msra.mxu0 0
      %2792 = vmatprep.subr.bf16.mxu0 0
      %2793 = vmatpush1.bf16.msra.mxu0 0
      %2794 = vmatprep.subr.bf16.mxu0 0
      %2795 = vmatpush1.bf16.msra.mxu0 0
      %2796 = vmatprep.subr.bf16.mxu0 0
      %2797 = vmatpush1.bf16.msra.mxu0 0
      %2798 = vmatprep.subr.bf16.mxu0 0
      %2799 = vmatpush1.bf16.msra.mxu0 0
      %2800 = vmatprep.subr.bf16.mxu0 0
      %2801 = vmatpush1.bf16.msra.mxu0 0
      %2802 = vmatprep.subr.bf16.mxu0 0
      %2803 = vmatpush1.bf16.msra.mxu0 0
      %2804 = vmatprep.subr.bf16.mxu0 0
      %2805 = vmatpush1.bf16.msra.mxu0 0
      %2806 = vmatprep.mubr.bf16.mxu0 0
      %2807 = vmatmul.mubr.bf16.gmra.mrb[0].mxu0 %v2772
      %v2808 = vpop.f32.mrb[0].mxu0
      %v2809 = vadd.f32 0.0, %v2808
      %v2810 = vpop.f32.mrb[0].mxu0
      %v2811 = vpop.f32.mrb[0].mxu0
      %v2812 = vpop.f32.mrb[0].mxu0
      %2813 = vdwg.mxu0
      %v2814 = vadd.f32 %v2707, %v2809
      %s2815 = scalar_lea.vmem %s8, 16
      %v2816 = vld [vmem:[%s2815] sm:$0x3]
      %v2818 = vsel %vm1077, %v2816, 0
      %2820 = vmatprep.subr.bf16.mxu0 0
      %2821 = vmatpush1.bf16.msra.mxu0 %v1961
      %2822 = vmatprep.subr.bf16.mxu0 0
      %2823 = vmatpush1.bf16.msra.mxu0 0
      %2824 = vmatprep.subr.bf16.mxu0 0
      %2825 = vmatpush1.bf16.msra.mxu0 0
      %2826 = vmatprep.subr.bf16.mxu0 0
      %2827 = vmatpush1.bf16.msra.mxu0 0
      %2828 = vmatprep.subr.bf16.mxu0 0
      %2829 = vmatpush1.bf16.msra.mxu0 0
      %2830 = vmatprep.subr.bf16.mxu0 0
      %2831 = vmatpush1.bf16.msra.mxu0 0
      %2832 = vmatprep.subr.bf16.mxu0 0
      %2833 = vmatpush1.bf16.msra.mxu0 0
      %2834 = vmatprep.subr.bf16.mxu0 0
      %2835 = vmatpush1.bf16.msra.mxu0 0
      %2836 = vmatprep.subr.bf16.mxu0 0
      %2837 = vmatpush1.bf16.msra.mxu0 0
      %2838 = vmatprep.subr.bf16.mxu0 0
      %2839 = vmatpush1.bf16.msra.mxu0 0
      %2840 = vmatprep.subr.bf16.mxu0 0
      %2841 = vmatpush1.bf16.msra.mxu0 0
      %2842 = vmatprep.subr.bf16.mxu0 0
      %2843 = vmatpush1.bf16.msra.mxu0 0
      %2844 = vmatprep.subr.bf16.mxu0 0
      %2845 = vmatpush1.bf16.msra.mxu0 0
      %2846 = vmatprep.subr.bf16.mxu0 0
      %2847 = vmatpush1.bf16.msra.mxu0 0
      %2848 = vmatprep.subr.bf16.mxu0 0
      %2849 = vmatpush1.bf16.msra.mxu0 0
      %2850 = vmatprep.subr.bf16.mxu0 0
      %2851 = vmatpush1.bf16.msra.mxu0 0
      %2852 = vmatprep.mubr.bf16.mxu0 0
      %2853 = vmatmul.mubr.bf16.gmra.mrb[0].mxu0 %v2818
      %v2854 = vpop.f32.mrb[0].mxu0
      %v2855 = vadd.f32 0.0, %v2854
      %v2856 = vpop.f32.mrb[0].mxu0
      %v2857 = vpop.f32.mrb[0].mxu0
      %v2858 = vpop.f32.mrb[0].mxu0
      %2859 = vdwg.mxu0
      %v2860 = vpack.c.bf16 %v2855, %v2855
      %s2861 = scalar_lea.vmem %s9, 128
      %v2862 = vld [vmem:[%s2861] sm:$0xf]
      %v2863 = vld [vmem:[%s2861 + $0x4] sm:$0xf]
      %v2864 = vld [vmem:[%s2861 + $0x8] sm:$0xf]
      %v2865 = vld [vmem:[%s2861 + $0xc] sm:$0xf]
      %v2870 = vunpack.c.l.b16 %v2862
      %v2871 = vunpack.c.l.b16 %v2863
      %v2872 = vunpack.c.l.b16 %v2864
      %v2873 = vunpack.c.l.b16 %v2865
      %v2874 = vpack.c.b16 %v2871, %v2870
      %v2875 = vpack.c.b16 %v2873, %v2872
      %v2879 = vsel %vm2074, %v2860, 0
      %2881 = vmatprep.subr.bf16.mxu0 0
      %2882 = vmatpush1.bf16.msra.mxu0 %v2874
      %2883 = vmatprep.subr.bf16.mxu0 0
      %2884 = vmatpush1.bf16.msra.mxu0 %v2875
      %2885 = vmatprep.subr.bf16.mxu0 0
      %2886 = vmatpush1.bf16.msra.mxu0 0
      %2887 = vmatprep.subr.bf16.mxu0 0
      %2888 = vmatpush1.bf16.msra.mxu0 0
      %2889 = vmatprep.subr.bf16.mxu0 0
      %2890 = vmatpush1.bf16.msra.mxu0 0
      %2891 = vmatprep.subr.bf16.mxu0 0
      %2892 = vmatpush1.bf16.msra.mxu0 0
      %2893 = vmatprep.subr.bf16.mxu0 0
      %2894 = vmatpush1.bf16.msra.mxu0 0
      %2895 = vmatprep.subr.bf16.mxu0 0
      %2896 = vmatpush1.bf16.msra.mxu0 0
      %2897 = vmatprep.subr.bf16.mxu0 0
      %2898 = vmatpush1.bf16.msra.mxu0 0
      %2899 = vmatprep.subr.bf16.mxu0 0
      %2900 = vmatpush1.bf16.msra.mxu0 0
      %2901 = vmatprep.subr.bf16.mxu0 0
      %2902 = vmatpush1.bf16.msra.mxu0 0
      %2903 = vmatprep.subr.bf16.mxu0 0
      %2904 = vmatpush1.bf16.msra.mxu0 0
      %2905 = vmatprep.subr.bf16.mxu0 0
      %2906 = vmatpush1.bf16.msra.mxu0 0
      %2907 = vmatprep.subr.bf16.mxu0 0
      %2908 = vmatpush1.bf16.msra.mxu0 0
      %2909 = vmatprep.subr.bf16.mxu0 0
      %2910 = vmatpush1.bf16.msra.mxu0 0
      %2911 = vmatprep.subr.bf16.mxu0 0
      %2912 = vmatpush1.bf16.msra.mxu0 0
      %2913 = vmatprep.mubr.bf16.mxu0 0
      %2914 = vmatmul.mubr.bf16.gmra.mrb[0].mxu0 %v2879
      %v2915 = vpop.f32.mrb[0].mxu0
      %v2916 = vadd.f32 0.0, %v2915
      %v2917 = vpop.f32.mrb[0].mxu0
      %v2918 = vpop.f32.mrb[0].mxu0
      %v2919 = vpop.f32.mrb[0].mxu0
      %2920 = vdwg.mxu0
      %v2921 = vadd.f32 %v2814, %v2916
      %v2922 = vld [vmem:[%s10] sm:$0x1]
      %v2924 = vlaneseq
      %v2925 = vshrl.u32 %v2924, 7
      %v2926 = vsub.s32 0, %v2925
      %v2927 = vrot.slane %v2922, %v2926
      %v2929 = vadd.f32 %v2921, %v2927
      %vm2930 = vcmp.gt.f32.partialorder %v2929, 0.0
      %v2931 = vmul.f32 %v2929, 0.2
      %v2932 = vsel %vm2930, %v2929, %v2931
      %v2933 = vld [vmem:[%s11] sm:$0x1]
      %v2935 = vlaneseq
      %v2936 = vshrl.u32 %v2935, 7
      %v2937 = vsub.s32 0, %v2936
      %v2938 = vrot.slane %v2933, %v2937
      %v2940 = vmul.f32 %v2932, %v2938
      %v2941 = vld [vmem:[%s12] sm:$0x1]
      %v2943 = vlaneseq
      %v2944 = vshrl.u32 %v2943, 7
      %v2945 = vsub.s32 0, %v2944
      %v2946 = vrot.slane %v2941, %v2945
      %v2948 = vadd.f32 %v2940, %v2946
      %v2949 = vpack.c.bf16 %v2948, %v2948
      %v2950 = vld [vmem:[%s13] sm:$0x1]
      %vm2951 = vcmask 31744
      %v2953 = vsel %vm2951, %v2950, 0
      %vm2955 = vcmask 1041408
      %v2957 = vsel %vm2955, %v2949, 0
      %2959 = vmatprep.subr.bf16.mxu0 0
      %2960 = vmatpush1.bf16.msra.mxu0 %v2957
      %2961 = vmatprep.subr.bf16.mxu0 0
      %2962 = vmatpush1.bf16.msra.mxu0 0
      %2963 = vmatprep.subr.bf16.mxu0 0
      %2964 = vmatpush1.bf16.msra.mxu0 0
      %2965 = vmatprep.subr.bf16.mxu0 0
      %2966 = vmatpush1.bf16.msra.mxu0 0
      %2967 = vmatprep.subr.bf16.mxu0 0
      %2968 = vmatpush1.bf16.msra.mxu0 0
      %2969 = vmatprep.subr.bf16.mxu0 0
      %2970 = vmatpush1.bf16.msra.mxu0 0
      %2971 = vmatprep.subr.bf16.mxu0 0
      %2972 = vmatpush1.bf16.msra.mxu0 0
      %2973 = vmatprep.subr.bf16.mxu0 0
      %2974 = vmatpush1.bf16.msra.mxu0 0
      %2975 = vmatprep.subr.bf16.mxu0 0
      %2976 = vmatpush1.bf16.msra.mxu0 0
      %2977 = vmatprep.subr.bf16.mxu0 0
      %2978 = vmatpush1.bf16.msra.mxu0 0
      %2979 = vmatprep.subr.bf16.mxu0 0
      %2980 = vmatpush1.bf16.msra.mxu0 0
      %2981 = vmatprep.subr.bf16.mxu0 0
      %2982 = vmatpush1.bf16.msra.mxu0 0
      %2983 = vmatprep.subr.bf16.mxu0 0
      %2984 = vmatpush1.bf16.msra.mxu0 0
      %2985 = vmatprep.subr.bf16.mxu0 0
      %2986 = vmatpush1.bf16.msra.mxu0 0
      %2987 = vmatprep.subr.bf16.mxu0 0
      %2988 = vmatpush1.bf16.msra.mxu0 0
      %2989 = vmatprep.subr.bf16.mxu0 0
      %2990 = vmatpush1.bf16.msra.mxu0 0
      %2991 = vmatprep.mubr.bf16.mxu0 0
      %2992 = vmatmul.mubr.bf16.gmra.mrb[0].mxu0 %v2953
      %v2993 = vpop.f32.mrb[0].mxu0
      %v2994 = vadd.f32 0.0, %v2993
      %v2995 = vpop.f32.mrb[0].mxu0
      %v2996 = vpop.f32.mrb[0].mxu0
      %v2997 = vpop.f32.mrb[0].mxu0
      %2998 = vdwg.mxu0
      %v2999 = vpack.c.bf16 %v2994, %v2994
      %v3000 = vld [vmem:[%s14] sm:$0xf]
      %v3001 = vld [vmem:[%s14 + $0x4] sm:$0xf]
      %v3002 = vld [vmem:[%s14 + $0x8] sm:$0xf]
      %v3003 = vld [vmem:[%s14 + $0xc] sm:$0xf]
      %v3004 = vld [vmem:[%s14 + $0x10] sm:$0xf]
      %v3005 = vld [vmem:[%s14 + $0x14] sm:$0xf]
      %v3006 = vld [vmem:[%s14 + $0x18] sm:$0xf]
      %v3007 = vld [vmem:[%s14 + $0x1c] sm:$0xf]
      %s3008 = scalar_lea.vmem %s13, 1
      %v3009 = vld [vmem:[%s3008] sm:$0x1]
      %v3011 = vsel %vm2951, %v3009, 0
      %3013 = vmatprep.subr.bf16.mxu0 0
      %3014 = vmatpush1.bf16.msra.mxu0 %v2957
      %3015 = vmatprep.subr.bf16.mxu0 0
      %3016 = vmatpush1.bf16.msra.mxu0 0
      %3017 = vmatprep.subr.bf16.mxu0 0
      %3018 = vmatpush1.bf16.msra.mxu0 0
      %3019 = vmatprep.subr.bf16.mxu0 0
      %3020 = vmatpush1.bf16.msra.mxu0 0
      %3021 = vmatprep.subr.bf16.mxu0 0
      %3022 = vmatpush1.bf16.msra.mxu0 0
      %3023 = vmatprep.subr.bf16.mxu0 0
      %3024 = vmatpush1.bf16.msra.mxu0 0
      %3025 = vmatprep.subr.bf16.mxu0 0
      %3026 = vmatpush1.bf16.msra.mxu0 0
      %3027 = vmatprep.subr.bf16.mxu0 0
      %3028 = vmatpush1.bf16.msra.mxu0 0
      %3029 = vmatprep.subr.bf16.mxu0 0
      %3030 = vmatpush1.bf16.msra.mxu0 0
      %3031 = vmatprep.subr.bf16.mxu0 0
      %3032 = vmatpush1.bf16.msra.mxu0 0
      %3033 = vmatprep.subr.bf16.mxu0 0
      %3034 = vmatpush1.bf16.msra.mxu0 0
      %3035 = vmatprep.subr.bf16.mxu0 0
      %3036 = vmatpush1.bf16.msra.mxu0 0
      %3037 = vmatprep.subr.bf16.mxu0 0
      %3038 = vmatpush1.bf16.msra.mxu0 0
      %3039 = vmatprep.subr.bf16.mxu0 0
      %3040 = vmatpush1.bf16.msra.mxu0 0
      %3041 = vmatprep.subr.bf16.mxu0 0
      %3042 = vmatpush1.bf16.msra.mxu0 0
      %3043 = vmatprep.subr.bf16.mxu0 0
      %3044 = vmatpush1.bf16.msra.mxu0 0
      %3045 = vmatprep.mubr.bf16.mxu0 0
      %3046 = vmatmul.mubr.bf16.gmra.mrb[0].mxu0 %v3011
      %v3047 = vpop.f32.mrb[0].mxu0
      %v3048 = vadd.f32 0.0, %v3047
      %v3049 = vpop.f32.mrb[0].mxu0
      %v3050 = vpop.f32.mrb[0].mxu0
      %v3051 = vpop.f32.mrb[0].mxu0
      %3052 = vdwg.mxu0
      %v3053 = vpack.c.bf16 %v3048, %v3048
      %s3054 = scalar_lea.vmem %s14, 32
      %v3055 = vld [vmem:[%s3054] sm:$0xf]
      %v3056 = vld [vmem:[%s3054 + $0x4] sm:$0xf]
      %v3057 = vld [vmem:[%s3054 + $0x8] sm:$0xf]
      %v3058 = vld [vmem:[%s3054 + $0xc] sm:$0xf]
      %v3059 = vld [vmem:[%s3054 + $0x10] sm:$0xf]
      %v3060 = vld [vmem:[%s3054 + $0x14] sm:$0xf]
      %v3061 = vld [vmem:[%s3054 + $0x18] sm:$0xf]
      %v3062 = vld [vmem:[%s3054 + $0x1c] sm:$0xf]
      %v3071 = vunpack.c.l.b16 %v3055
      %v3072 = vunpack.c.l.b16 %v3056
      %v3073 = vunpack.c.l.b16 %v3057
      %v3074 = vunpack.c.l.b16 %v3058
      %v3075 = vunpack.c.l.b16 %v3059
      %v3076 = vunpack.c.l.b16 %v3060
      %v3077 = vunpack.c.l.b16 %v3061
      %v3078 = vunpack.c.l.b16 %v3062
      %v3079 = vpack.c.b16 %v3072, %v3071
      %v3080 = vpack.c.b16 %v3074, %v3073
      %v3081 = vpack.c.b16 %v3076, %v3075
      %v3082 = vpack.c.b16 %v3078, %v3077
      %v3088 = vsel %vm967, %v3053, 0
      %3090 = vmatprep.subr.bf16.mxu0 0
      %3091 = vmatpush1.bf16.msra.mxu0 %v3079
      %3092 = vmatprep.subr.bf16.mxu0 0
      %3093 = vmatpush1.bf16.msra.mxu0 %v3080
      %3094 = vmatprep.subr.bf16.mxu0 0
      %3095 = vmatpush1.bf16.msra.mxu0 %v3081
      %3096 = vmatprep.subr.bf16.mxu0 0
      %3097 = vmatpush1.bf16.msra.mxu0 %v3082
      %3098 = vmatprep.subr.bf16.mxu0 0
      %3099 = vmatpush1.bf16.msra.mxu0 0
      %3100 = vmatprep.subr.bf16.mxu0 0
      %3101 = vmatpush1.bf16.msra.mxu0 0
      %3102 = vmatprep.subr.bf16.mxu0 0
      %3103 = vmatpush1.bf16.msra.mxu0 0
      %3104 = vmatprep.subr.bf16.mxu0 0
      %3105 = vmatpush1.bf16.msra.mxu0 0
      %3106 = vmatprep.subr.bf16.mxu0 0
      %3107 = vmatpush1.bf16.msra.mxu0 0
      %3108 = vmatprep.subr.bf16.mxu0 0
      %3109 = vmatpush1.bf16.msra.mxu0 0
      %3110 = vmatprep.subr.bf16.mxu0 0
      %3111 = vmatpush1.bf16.msra.mxu0 0
      %3112 = vmatprep.subr.bf16.mxu0 0
      %3113 = vmatpush1.bf16.msra.mxu0 0
      %3114 = vmatprep.subr.bf16.mxu0 0
      %3115 = vmatpush1.bf16.msra.mxu0 0
      %3116 = vmatprep.subr.bf16.mxu0 0
      %3117 = vmatpush1.bf16.msra.mxu0 0
      %3118 = vmatprep.subr.bf16.mxu0 0
      %3119 = vmatpush1.bf16.msra.mxu0 0
      %3120 = vmatprep.subr.bf16.mxu0 0
      %3121 = vmatpush1.bf16.msra.mxu0 0
      %3122 = vmatprep.mubr.bf16.mxu0 0
      %3123 = vmatmul.mubr.bf16.gmra.mrb[0].mxu0 %v3088
      %v3124 = vpop.f32.mrb[0].mxu0
      %v3125 = vadd.f32 0.0, %v3124
      %v3126 = vpop.f32.mrb[0].mxu0
      %v3127 = vpop.f32.mrb[0].mxu0
      %v3128 = vpop.f32.mrb[0].mxu0
      %3129 = vdwg.mxu0
      %v3138 = vunpack.c.l.b16 %v3000
      %v3139 = vunpack.c.l.b16 %v3001
      %v3140 = vunpack.c.l.b16 %v3002
      %v3141 = vunpack.c.l.b16 %v3003
      %v3142 = vunpack.c.l.b16 %v3004
      %v3143 = vunpack.c.l.b16 %v3005
      %v3144 = vunpack.c.l.b16 %v3006
      %v3145 = vunpack.c.l.b16 %v3007
      %v3146 = vpack.c.b16 %v3139, %v3138
      %v3147 = vpack.c.b16 %v3141, %v3140
      %v3148 = vpack.c.b16 %v3143, %v3142
      %v3149 = vpack.c.b16 %v3145, %v3144
      %v3155 = vsel %vm967, %v2999, 0
      %3157 = vmatprep.subr.bf16.mxu0 0
      %3158 = vmatpush1.bf16.msra.mxu0 %v3146
      %3159 = vmatprep.subr.bf16.mxu0 0
      %3160 = vmatpush1.bf16.msra.mxu0 %v3147
      %3161 = vmatprep.subr.bf16.mxu0 0
      %3162 = vmatpush1.bf16.msra.mxu0 %v3148
      %3163 = vmatprep.subr.bf16.mxu0 0
      %3164 = vmatpush1.bf16.msra.mxu0 %v3149
      %3165 = vmatprep.subr.bf16.mxu0 0
      %3166 = vmatpush1.bf16.msra.mxu0 0
      %3167 = vmatprep.subr.bf16.mxu0 0
      %3168 = vmatpush1.bf16.msra.mxu0 0
      %3169 = vmatprep.subr.bf16.mxu0 0
      %3170 = vmatpush1.bf16.msra.mxu0 0
      %3171 = vmatprep.subr.bf16.mxu0 0
      %3172 = vmatpush1.bf16.msra.mxu0 0
      %3173 = vmatprep.subr.bf16.mxu0 0
      %3174 = vmatpush1.bf16.msra.mxu0 0
      %3175 = vmatprep.subr.bf16.mxu0 0
      %3176 = vmatpush1.bf16.msra.mxu0 0
      %3177 = vmatprep.subr.bf16.mxu0 0
      %3178 = vmatpush1.bf16.msra.mxu0 0
      %3179 = vmatprep.subr.bf16.mxu0 0
      %3180 = vmatpush1.bf16.msra.mxu0 0
      %3181 = vmatprep.subr.bf16.mxu0 0
      %3182 = vmatpush1.bf16.msra.mxu0 0
      %3183 = vmatprep.subr.bf16.mxu0 0
      %3184 = vmatpush1.bf16.msra.mxu0 0
      %3185 = vmatprep.subr.bf16.mxu0 0
      %3186 = vmatpush1.bf16.msra.mxu0 0
      %3187 = vmatprep.subr.bf16.mxu0 0
      %3188 = vmatpush1.bf16.msra.mxu0 0
      %3189 = vmatprep.mubr.bf16.mxu0 0
      %3190 = vmatmul.mubr.bf16.gmra.mrb[0].mxu0 %v3155
      %v3191 = vpop.f32.mrb[0].mxu0
      %v3192 = vadd.f32 %v3125, %v3191
      %v3193 = vpop.f32.mrb[0].mxu0
      %v3194 = vpop.f32.mrb[0].mxu0
      %v3195 = vpop.f32.mrb[0].mxu0
      %3196 = vdwg.mxu0
      %s3197 = scalar_lea.vmem %s13, 2
      %v3198 = vld [vmem:[%s3197] sm:$0x1]
      %v3200 = vsel %vm2951, %v3198, 0
      %3202 = vmatprep.subr.bf16.mxu0 0
      %3203 = vmatpush1.bf16.msra.mxu0 %v2957
      %3204 = vmatprep.subr.bf16.mxu0 0
      %3205 = vmatpush1.bf16.msra.mxu0 0
      %3206 = vmatprep.subr.bf16.mxu0 0
      %3207 = vmatpush1.bf16.msra.mxu0 0
      %3208 = vmatprep.subr.bf16.mxu0 0
      %3209 = vmatpush1.bf16.msra.mxu0 0
      %3210 = vmatprep.subr.bf16.mxu0 0
      %3211 = vmatpush1.bf16.msra.mxu0 0
      %3212 = vmatprep.subr.bf16.mxu0 0
      %3213 = vmatpush1.bf16.msra.mxu0 0
      %3214 = vmatprep.subr.bf16.mxu0 0
      %3215 = vmatpush1.bf16.msra.mxu0 0
      %3216 = vmatprep.subr.bf16.mxu0 0
      %3217 = vmatpush1.bf16.msra.mxu0 0
      %3218 = vmatprep.subr.bf16.mxu0 0
      %3219 = vmatpush1.bf16.msra.mxu0 0
      %3220 = vmatprep.subr.bf16.mxu0 0
      %3221 = vmatpush1.bf16.msra.mxu0 0
      %3222 = vmatprep.subr.bf16.mxu0 0
      %3223 = vmatpush1.bf16.msra.mxu0 0
      %3224 = vmatprep.subr.bf16.mxu0 0
      %3225 = vmatpush1.bf16.msra.mxu0 0
      %3226 = vmatprep.subr.bf16.mxu0 0
      %3227 = vmatpush1.bf16.msra.mxu0 0
      %3228 = vmatprep.subr.bf16.mxu0 0
      %3229 = vmatpush1.bf16.msra.mxu0 0
      %3230 = vmatprep.subr.bf16.mxu0 0
      %3231 = vmatpush1.bf16.msra.mxu0 0
      %3232 = vmatprep.subr.bf16.mxu0 0
      %3233 = vmatpush1.bf16.msra.mxu0 0
      %3234 = vmatprep.mubr.bf16.mxu0 0
      %3235 = vmatmul.mubr.bf16.gmra.mrb[0].mxu0 %v3200
      %v3236 = vpop.f32.mrb[0].mxu0
      %v3237 = vadd.f32 0.0, %v3236
      %v3238 = vpop.f32.mrb[0].mxu0
      %v3239 = vpop.f32.mrb[0].mxu0
      %v3240 = vpop.f32.mrb[0].mxu0
      %3241 = vdwg.mxu0
      %v3242 = vpack.c.bf16 %v3237, %v3237
      %s3243 = scalar_lea.vmem %s14, 64
      %v3244 = vld [vmem:[%s3243] sm:$0xf]
      %v3245 = vld [vmem:[%s3243 + $0x4] sm:$0xf]
      %v3246 = vld [vmem:[%s3243 + $0x8] sm:$0xf]
      %v3247 = vld [vmem:[%s3243 + $0xc] sm:$0xf]
      %v3248 = vld [vmem:[%s3243 + $0x10] sm:$0xf]
      %v3249 = vld [vmem:[%s3243 + $0x14] sm:$0xf]
      %v3250 = vld [vmem:[%s3243 + $0x18] sm:$0xf]
      %v3251 = vld [vmem:[%s3243 + $0x1c] sm:$0xf]
      %v3260 = vunpack.c.l.b16 %v3244
      %v3261 = vunpack.c.l.b16 %v3245
      %v3262 = vunpack.c.l.b16 %v3246
      %v3263 = vunpack.c.l.b16 %v3247
      %v3264 = vunpack.c.l.b16 %v3248
      %v3265 = vunpack.c.l.b16 %v3249
      %v3266 = vunpack.c.l.b16 %v3250
      %v3267 = vunpack.c.l.b16 %v3251
      %v3268 = vpack.c.b16 %v3261, %v3260
      %v3269 = vpack.c.b16 %v3263, %v3262
      %v3270 = vpack.c.b16 %v3265, %v3264
      %v3271 = vpack.c.b16 %v3267, %v3266
      %v3277 = vsel %vm967, %v3242, 0
      %3279 = vmatprep.subr.bf16.mxu0 0
      %3280 = vmatpush1.bf16.msra.mxu0 %v3268
      %3281 = vmatprep.subr.bf16.mxu0 0
      %3282 = vmatpush1.bf16.msra.mxu0 %v3269
      %3283 = vmatprep.subr.bf16.mxu0 0
      %3284 = vmatpush1.bf16.msra.mxu0 %v3270
      %3285 = vmatprep.subr.bf16.mxu0 0
      %3286 = vmatpush1.bf16.msra.mxu0 %v3271
      %3287 = vmatprep.subr.bf16.mxu0 0
      %3288 = vmatpush1.bf16.msra.mxu0 0
      %3289 = vmatprep.subr.bf16.mxu0 0
      %3290 = vmatpush1.bf16.msra.mxu0 0
      %3291 = vmatprep.subr.bf16.mxu0 0
      %3292 = vmatpush1.bf16.msra.mxu0 0
      %3293 = vmatprep.subr.bf16.mxu0 0
      %3294 = vmatpush1.bf16.msra.mxu0 0
      %3295 = vmatprep.subr.bf16.mxu0 0
      %3296 = vmatpush1.bf16.msra.mxu0 0
      %3297 = vmatprep.subr.bf16.mxu0 0
      %3298 = vmatpush1.bf16.msra.mxu0 0
      %3299 = vmatprep.subr.bf16.mxu0 0
      %3300 = vmatpush1.bf16.msra.mxu0 0
      %3301 = vmatprep.subr.bf16.mxu0 0
      %3302 = vmatpush1.bf16.msra.mxu0 0
      %3303 = vmatprep.subr.bf16.mxu0 0
      %3304 = vmatpush1.bf16.msra.mxu0 0
      %3305 = vmatprep.subr.bf16.mxu0 0
      %3306 = vmatpush1.bf16.msra.mxu0 0
      %3307 = vmatprep.subr.bf16.mxu0 0
      %3308 = vmatpush1.bf16.msra.mxu0 0
      %3309 = vmatprep.subr.bf16.mxu0 0
      %3310 = vmatpush1.bf16.msra.mxu0 0
      %3311 = vmatprep.mubr.bf16.mxu0 0
      %3312 = vmatmul.mubr.bf16.gmra.mrb[0].mxu0 %v3277
      %v3313 = vpop.f32.mrb[0].mxu0
      %v3314 = vadd.f32 0.0, %v3313
      %v3315 = vpop.f32.mrb[0].mxu0
      %v3316 = vpop.f32.mrb[0].mxu0
      %v3317 = vpop.f32.mrb[0].mxu0
      %3318 = vdwg.mxu0
      %v3319 = vadd.f32 %v3192, %v3314
      %s3320 = scalar_lea.vmem %s13, 3
      %v3321 = vld [vmem:[%s3320] sm:$0x1]
      %v3323 = vsel %vm2951, %v3321, 0
      %3325 = vmatprep.subr.bf16.mxu0 0
      %3326 = vmatpush1.bf16.msra.mxu0 %v2957
      %3327 = vmatprep.subr.bf16.mxu0 0
      %3328 = vmatpush1.bf16.msra.mxu0 0
      %3329 = vmatprep.subr.bf16.mxu0 0
      %3330 = vmatpush1.bf16.msra.mxu0 0
      %3331 = vmatprep.subr.bf16.mxu0 0
      %3332 = vmatpush1.bf16.msra.mxu0 0
      %3333 = vmatprep.subr.bf16.mxu0 0
      %3334 = vmatpush1.bf16.msra.mxu0 0
      %3335 = vmatprep.subr.bf16.mxu0 0
      %3336 = vmatpush1.bf16.msra.mxu0 0
      %3337 = vmatprep.subr.bf16.mxu0 0
      %3338 = vmatpush1.bf16.msra.mxu0 0
      %3339 = vmatprep.subr.bf16.mxu0 0
      %3340 = vmatpush1.bf16.msra.mxu0 0
      %3341 = vmatprep.subr.bf16.mxu0 0
      %3342 = vmatpush1.bf16.msra.mxu0 0
      %3343 = vmatprep.subr.bf16.mxu0 0
      %3344 = vmatpush1.bf16.msra.mxu0 0
      %3345 = vmatprep.subr.bf16.mxu0 0
      %3346 = vmatpush1.bf16.msra.mxu0 0
      %3347 = vmatprep.subr.bf16.mxu0 0
      %3348 = vmatpush1.bf16.msra.mxu0 0
      %3349 = vmatprep.subr.bf16.mxu0 0
      %3350 = vmatpush1.bf16.msra.mxu0 0
      %3351 = vmatprep.subr.bf16.mxu0 0
      %3352 = vmatpush1.bf16.msra.mxu0 0
      %3353 = vmatprep.subr.bf16.mxu0 0
      %3354 = vmatpush1.bf16.msra.mxu0 0
      %3355 = vmatprep.subr.bf16.mxu0 0
      %3356 = vmatpush1.bf16.msra.mxu0 0
      %3357 = vmatprep.mubr.bf16.mxu0 0
      %3358 = vmatmul.mubr.bf16.gmra.mrb[0].mxu0 %v3323
      %v3359 = vpop.f32.mrb[0].mxu0
      %v3360 = vadd.f32 0.0, %v3359
      %v3361 = vpop.f32.mrb[0].mxu0
      %v3362 = vpop.f32.mrb[0].mxu0
      %v3363 = vpop.f32.mrb[0].mxu0
      %3364 = vdwg.mxu0
      %v3365 = vpack.c.bf16 %v3360, %v3360
      %s3366 = scalar_lea.vmem %s14, 96
      %v3367 = vld [vmem:[%s3366] sm:$0xf]
      %v3368 = vld [vmem:[%s3366 + $0x4] sm:$0xf]
      %v3369 = vld [vmem:[%s3366 + $0x8] sm:$0xf]
      %v3370 = vld [vmem:[%s3366 + $0xc] sm:$0xf]
      %v3371 = vld [vmem:[%s3366 + $0x10] sm:$0xf]
      %v3372 = vld [vmem:[%s3366 + $0x14] sm:$0xf]
      %v3373 = vld [vmem:[%s3366 + $0x18] sm:$0xf]
      %v3374 = vld [vmem:[%s3366 + $0x1c] sm:$0xf]
      %v3383 = vunpack.c.l.b16 %v3367
      %v3384 = vunpack.c.l.b16 %v3368
      %v3385 = vunpack.c.l.b16 %v3369
      %v3386 = vunpack.c.l.b16 %v3370
      %v3387 = vunpack.c.l.b16 %v3371
      %v3388 = vunpack.c.l.b16 %v3372
      %v3389 = vunpack.c.l.b16 %v3373
      %v3390 = vunpack.c.l.b16 %v3374
      %v3391 = vpack.c.b16 %v3384, %v3383
      %v3392 = vpack.c.b16 %v3386, %v3385
      %v3393 = vpack.c.b16 %v3388, %v3387
      %v3394 = vpack.c.b16 %v3390, %v3389
      %v3400 = vsel %vm967, %v3365, 0
      %3402 = vmatprep.subr.bf16.mxu0 0
      %3403 = vmatpush1.bf16.msra.mxu0 %v3391
      %3404 = vmatprep.subr.bf16.mxu0 0
      %3405 = vmatpush1.bf16.msra.mxu0 %v3392
      %3406 = vmatprep.subr.bf16.mxu0 0
      %3407 = vmatpush1.bf16.msra.mxu0 %v3393
      %3408 = vmatprep.subr.bf16.mxu0 0
      %3409 = vmatpush1.bf16.msra.mxu0 %v3394
      %3410 = vmatprep.subr.bf16.mxu0 0
      %3411 = vmatpush1.bf16.msra.mxu0 0
      %3412 = vmatprep.subr.bf16.mxu0 0
      %3413 = vmatpush1.bf16.msra.mxu0 0
      %3414 = vmatprep.subr.bf16.mxu0 0
      %3415 = vmatpush1.bf16.msra.mxu0 0
      %3416 = vmatprep.subr.bf16.mxu0 0
      %3417 = vmatpush1.bf16.msra.mxu0 0
      %3418 = vmatprep.subr.bf16.mxu0 0
      %3419 = vmatpush1.bf16.msra.mxu0 0
      %3420 = vmatprep.subr.bf16.mxu0 0
      %3421 = vmatpush1.bf16.msra.mxu0 0
      %3422 = vmatprep.subr.bf16.mxu0 0
      %3423 = vmatpush1.bf16.msra.mxu0 0
      %3424 = vmatprep.subr.bf16.mxu0 0
      %3425 = vmatpush1.bf16.msra.mxu0 0
      %3426 = vmatprep.subr.bf16.mxu0 0
      %3427 = vmatpush1.bf16.msra.mxu0 0
      %3428 = vmatprep.subr.bf16.mxu0 0
      %3429 = vmatpush1.bf16.msra.mxu0 0
      %3430 = vmatprep.subr.bf16.mxu0 0
      %3431 = vmatpush1.bf16.msra.mxu0 0
      %3432 = vmatprep.subr.bf16.mxu0 0
      %3433 = vmatpush1.bf16.msra.mxu0 0
      %3434 = vmatprep.mubr.bf16.mxu0 0
      %3435 = vmatmul.mubr.bf16.gmra.mrb[0].mxu0 %v3400
      %v3436 = vpop.f32.mrb[0].mxu0
      %v3437 = vadd.f32 0.0, %v3436
      %v3438 = vpop.f32.mrb[0].mxu0
      %v3439 = vpop.f32.mrb[0].mxu0
      %v3440 = vpop.f32.mrb[0].mxu0
      %3441 = vdwg.mxu0
      %v3442 = vadd.f32 %v3319, %v3437
      %v3443 = vld [vmem:[%s15] sm:$0x1]
      %v3444 = vadd.f32 %v3442, %v3443
      %vm3445 = vcmp.gt.f32.partialorder %v3444, 0.0
      %v3446 = vmul.f32 %v3444, 0.2
      %v3447 = vsel %vm3445, %v3444, %v3446
      %v3448 = vld [vmem:[%s16] sm:$0x1]
      %v3449 = vmul.f32 %v3447, %v3448
      %v3450 = vld [vmem:[%s17] sm:$0x1]
      %v3451 = vadd.f32 %v3449, %v3450
      %v3452 = vpack.c.bf16 %v3451, %v3451
      %v3453 = vld [vmem:[%s19] sm:$0xf]
      %v3454 = vld [vmem:[%s19 + $0x4] sm:$0xf]
      %v3455 = vld [vmem:[%s19 + $0x8] sm:$0xf]
      %v3456 = vld [vmem:[%s19 + $0xc] sm:$0xf]
      %v3457 = vld [vmem:[%s19 + $0x10] sm:$0xf]
      %v3458 = vld [vmem:[%s19 + $0x14] sm:$0xf]
      %v3459 = vld [vmem:[%s19 + $0x18] sm:$0xf]
      %v3460 = vld [vmem:[%s19 + $0x1c] sm:$0xf]
      %v3461 = vld [vmem:[%s19 + $0x20] sm:$0xf]
      %v3462 = vld [vmem:[%s19 + $0x24] sm:$0xf]
      %v3463 = vld [vmem:[%s19 + $0x28] sm:$0xf]
      %v3464 = vld [vmem:[%s19 + $0x2c] sm:$0xf]
      %v3465 = vld [vmem:[%s19 + $0x30] sm:$0xf]
      %v3466 = vld [vmem:[%s19 + $0x34] sm:$0xf]
      %v3467 = vld [vmem:[%s19 + $0x38] sm:$0xf]
      %v3468 = vld [vmem:[%s19 + $0x3c] sm:$0xf]
      %v3469 = vld [vmem:[%s20] sm:$0x1]
      %v3486 = vunpack.c.l.b16 %v3453
      %v3487 = vunpack.c.l.b16 %v3454
      %v3488 = vunpack.c.l.b16 %v3455
      %v3489 = vunpack.c.l.b16 %v3456
      %v3490 = vunpack.c.l.b16 %v3457
      %v3491 = vunpack.c.l.b16 %v3458
      %v3492 = vunpack.c.l.b16 %v3459
      %v3493 = vunpack.c.l.b16 %v3460
      %v3494 = vunpack.c.l.b16 %v3461
      %v3495 = vunpack.c.l.b16 %v3462
      %v3496 = vunpack.c.l.b16 %v3463
      %v3497 = vunpack.c.l.b16 %v3464
      %v3498 = vunpack.c.l.b16 %v3465
      %v3499 = vunpack.c.l.b16 %v3466
      %v3500 = vunpack.c.l.b16 %v3467
      %v3501 = vunpack.c.l.b16 %v3468
      %v3502 = vpack.c.b16 %v3487, %v3486
      %v3503 = vpack.c.b16 %v3489, %v3488
      %v3504 = vpack.c.b16 %v3491, %v3490
      %v3505 = vpack.c.b16 %v3493, %v3492
      %v3506 = vpack.c.b16 %v3495, %v3494
      %v3507 = vpack.c.b16 %v3497, %v3496
      %v3508 = vpack.c.b16 %v3499, %v3498
      %v3509 = vpack.c.b16 %v3501, %v3500
      %3518 = vmatprep.subr.bf16.mxu0 0
      %3519 = vmatpush1.bf16.msra.mxu0 %v3502
      %3520 = vmatprep.subr.bf16.mxu0 0
      %3521 = vmatpush1.bf16.msra.mxu0 %v3503
      %3522 = vmatprep.subr.bf16.mxu0 0
      %3523 = vmatpush1.bf16.msra.mxu0 %v3504
      %3524 = vmatprep.subr.bf16.mxu0 0
      %3525 = vmatpush1.bf16.msra.mxu0 %v3505
      %3526 = vmatprep.subr.bf16.mxu0 0
      %3527 = vmatpush1.bf16.msra.mxu0 %v3506
      %3528 = vmatprep.subr.bf16.mxu0 0
      %3529 = vmatpush1.bf16.msra.mxu0 %v3507
      %3530 = vmatprep.subr.bf16.mxu0 0
      %3531 = vmatpush1.bf16.msra.mxu0 %v3508
      %3532 = vmatprep.subr.bf16.mxu0 0
      %3533 = vmatpush1.bf16.msra.mxu0 %v3509
      %3534 = vmatprep.subr.bf16.mxu0 0
      %3535 = vmatpush1.bf16.msra.mxu0 0
      %3536 = vmatprep.subr.bf16.mxu0 0
      %3537 = vmatpush1.bf16.msra.mxu0 0
      %3538 = vmatprep.subr.bf16.mxu0 0
      %3539 = vmatpush1.bf16.msra.mxu0 0
      %3540 = vmatprep.subr.bf16.mxu0 0
      %3541 = vmatpush1.bf16.msra.mxu0 0
      %3542 = vmatprep.subr.bf16.mxu0 0
      %3543 = vmatpush1.bf16.msra.mxu0 0
      %3544 = vmatprep.subr.bf16.mxu0 0
      %3545 = vmatpush1.bf16.msra.mxu0 0
      %3546 = vmatprep.subr.bf16.mxu0 0
      %3547 = vmatpush1.bf16.msra.mxu0 0
      %3548 = vmatprep.subr.bf16.mxu0 0
      %3549 = vmatpush1.bf16.msra.mxu0 0
      %3550 = vmatprep.mubr.bf16.mxu0 0
      %3551 = vmatmul.mubr.bf16.gmra.mrb[0].mxu0 %v3452
      %v3552 = vpop.f32.mrb[0].mxu0
      %v3553 = vadd.f32 %v3469, %v3552
      %v3554 = vpop.f32.mrb[0].mxu0
      %v3555 = vpop.f32.mrb[0].mxu0
      %v3556 = vpop.f32.mrb[0].mxu0
      %3557 = vdwg.mxu0
      %v3558 = vmax.f32 %v3553, 0.0
      %v3559 = vpack.c.bf16 %v3558, %v3558
      %v3560 = vld [vmem:[%s22] sm:$0xf]
      %v3561 = vld [vmem:[%s22 + $0x4] sm:$0xf]
      %v3562 = vld [vmem:[%s22 + $0x8] sm:$0xf]
      %v3563 = vld [vmem:[%s22 + $0xc] sm:$0xf]
      %v3564 = vld [vmem:[%s22 + $0x10] sm:$0xf]
      %v3565 = vld [vmem:[%s22 + $0x14] sm:$0xf]
      %v3566 = vld [vmem:[%s22 + $0x18] sm:$0xf]
      %v3567 = vld [vmem:[%s22 + $0x1c] sm:$0xf]
      %v3568 = vld [vmem:[%s22 + $0x20] sm:$0xf]
      %v3569 = vld [vmem:[%s22 + $0x24] sm:$0xf]
      %v3570 = vld [vmem:[%s22 + $0x28] sm:$0xf]
      %v3571 = vld [vmem:[%s22 + $0x2c] sm:$0xf]
      %v3572 = vld [vmem:[%s22 + $0x30] sm:$0xf]
      %v3573 = vld [vmem:[%s22 + $0x34] sm:$0xf]
      %v3574 = vld [vmem:[%s22 + $0x38] sm:$0xf]
      %v3575 = vld [vmem:[%s22 + $0x3c] sm:$0xf]
      %v3592 = vunpack.c.l.b16 %v3560
      %v3593 = vunpack.c.l.b16 %v3561
      %v3594 = vunpack.c.l.b16 %v3562
      %v3595 = vunpack.c.l.b16 %v3563
      %v3596 = vunpack.c.l.b16 %v3564
      %v3597 = vunpack.c.l.b16 %v3565
      %v3598 = vunpack.c.l.b16 %v3566
      %v3599 = vunpack.c.l.b16 %v3567
      %v3600 = vunpack.c.l.b16 %v3568
      %v3601 = vunpack.c.l.b16 %v3569
      %v3602 = vunpack.c.l.b16 %v3570
      %v3603 = vunpack.c.l.b16 %v3571
      %v3604 = vunpack.c.l.b16 %v3572
      %v3605 = vunpack.c.l.b16 %v3573
      %v3606 = vunpack.c.l.b16 %v3574
      %v3607 = vunpack.c.l.b16 %v3575
      %v3608 = vpack.c.b16 %v3593, %v3592
      %v3609 = vpack.c.b16 %v3595, %v3594
      %v3610 = vpack.c.b16 %v3597, %v3596
      %v3611 = vpack.c.b16 %v3599, %v3598
      %v3612 = vpack.c.b16 %v3601, %v3600
      %v3613 = vpack.c.b16 %v3603, %v3602
      %v3614 = vpack.c.b16 %v3605, %v3604
      %v3615 = vpack.c.b16 %v3607, %v3606
      %3624 = vmatprep.subr.bf16.mxu0 0
      %3625 = vmatpush1.bf16.msra.mxu0 %v3608
      %3626 = vmatprep.subr.bf16.mxu0 0
      %3627 = vmatpush1.bf16.msra.mxu0 %v3609
      %3628 = vmatprep.subr.bf16.mxu0 0
      %3629 = vmatpush1.bf16.msra.mxu0 %v3610
      %3630 = vmatprep.subr.bf16.mxu0 0
      %3631 = vmatpush1.bf16.msra.mxu0 %v3611
      %3632 = vmatprep.subr.bf16.mxu0 0
      %3633 = vmatpush1.bf16.msra.mxu0 %v3612
      %3634 = vmatprep.subr.bf16.mxu0 0
      %3635 = vmatpush1.bf16.msra.mxu0 %v3613
      %3636 = vmatprep.subr.bf16.mxu0 0
      %3637 = vmatpush1.bf16.msra.mxu0 %v3614
      %3638 = vmatprep.subr.bf16.mxu0 0
      %3639 = vmatpush1.bf16.msra.mxu0 %v3615
      %3640 = vmatprep.subr.bf16.mxu0 0
      %3641 = vmatpush1.bf16.msra.mxu0 0
      %3642 = vmatprep.subr.bf16.mxu0 0
      %3643 = vmatpush1.bf16.msra.mxu0 0
      %3644 = vmatprep.subr.bf16.mxu0 0
      %3645 = vmatpush1.bf16.msra.mxu0 0
      %3646 = vmatprep.subr.bf16.mxu0 0
      %3647 = vmatpush1.bf16.msra.mxu0 0
      %3648 = vmatprep.subr.bf16.mxu0 0
      %3649 = vmatpush1.bf16.msra.mxu0 0
      %3650 = vmatprep.subr.bf16.mxu0 0
      %3651 = vmatpush1.bf16.msra.mxu0 0
      %3652 = vmatprep.subr.bf16.mxu0 0
      %3653 = vmatpush1.bf16.msra.mxu0 0
      %3654 = vmatprep.subr.bf16.mxu0 0
      %3655 = vmatpush1.bf16.msra.mxu0 0
      %3656 = vmatprep.mubr.bf16.mxu0 0
      %3657 = vmatmul.mubr.bf16.gmra.mrb[0].mxu0 %v3559
      %v3658 = vpop.f32.mrb[0].mxu0
      %v3659 = vadd.f32 0.0, %v3658
      %v3660 = vpop.f32.mrb[0].mxu0
      %v3661 = vpop.f32.mrb[0].mxu0
      %v3662 = vpop.f32.mrb[0].mxu0
      %3663 = vdwg.mxu0
      %v3664 = vadd.f32 %v3451, %v3659
      %v3665 = vld [vmem:[%s23] sm:$0x1]
      %v3666 = vadd.f32 %v3664, %v3665
      %v3667 = vpack.c.bf16 %v3666, %v3666
      %v3668 = vld [vmem:[%s24] sm:$0xf]
      %v3669 = vld [vmem:[%s24 + $0x4] sm:$0xf]
      %v3670 = vld [vmem:[%s24 + $0x8] sm:$0xf]
      %v3671 = vld [vmem:[%s24 + $0xc] sm:$0xf]
      %v3672 = vld [vmem:[%s24 + $0x10] sm:$0xf]
      %v3673 = vld [vmem:[%s24 + $0x14] sm:$0xf]
      %v3674 = vld [vmem:[%s24 + $0x18] sm:$0xf]
      %v3675 = vld [vmem:[%s24 + $0x1c] sm:$0xf]
      %v3676 = vld [vmem:[%s24 + $0x20] sm:$0xf]
      %v3677 = vld [vmem:[%s24 + $0x24] sm:$0xf]
      %v3678 = vld [vmem:[%s24 + $0x28] sm:$0xf]
      %v3679 = vld [vmem:[%s24 + $0x2c] sm:$0xf]
      %v3680 = vld [vmem:[%s24 + $0x30] sm:$0xf]
      %v3681 = vld [vmem:[%s24 + $0x34] sm:$0xf]
      %v3682 = vld [vmem:[%s24 + $0x38] sm:$0xf]
      %v3683 = vld [vmem:[%s24 + $0x3c] sm:$0xf]
      %v3684 = vld [vmem:[%s25] sm:$0x1]
      %v3701 = vunpack.c.l.b16 %v3668
      %v3702 = vunpack.c.l.b16 %v3669
      %v3703 = vunpack.c.l.b16 %v3670
      %v3704 = vunpack.c.l.b16 %v3671
      %v3705 = vunpack.c.l.b16 %v3672
      %v3706 = vunpack.c.l.b16 %v3673
      %v3707 = vunpack.c.l.b16 %v3674
      %v3708 = vunpack.c.l.b16 %v3675
      %v3709 = vunpack.c.l.b16 %v3676
      %v3710 = vunpack.c.l.b16 %v3677
      %v3711 = vunpack.c.l.b16 %v3678
      %v3712 = vunpack.c.l.b16 %v3679
      %v3713 = vunpack.c.l.b16 %v3680
      %v3714 = vunpack.c.l.b16 %v3681
      %v3715 = vunpack.c.l.b16 %v3682
      %v3716 = vunpack.c.l.b16 %v3683
      %v3717 = vpack.c.b16 %v3702, %v3701
      %v3718 = vpack.c.b16 %v3704, %v3703
      %v3719 = vpack.c.b16 %v3706, %v3705
      %v3720 = vpack.c.b16 %v3708, %v3707
      %v3721 = vpack.c.b16 %v3710, %v3709
      %v3722 = vpack.c.b16 %v3712, %v3711
      %v3723 = vpack.c.b16 %v3714, %v3713
      %v3724 = vpack.c.b16 %v3716, %v3715
      %3733 = vmatprep.subr.bf16.mxu0 0
      %3734 = vmatpush1.bf16.msra.mxu0 %v3717
      %3735 = vmatprep.subr.bf16.mxu0 0
      %3736 = vmatpush1.bf16.msra.mxu0 %v3718
      %3737 = vmatprep.subr.bf16.mxu0 0
      %3738 = vmatpush1.bf16.msra.mxu0 %v3719
      %3739 = vmatprep.subr.bf16.mxu0 0
      %3740 = vmatpush1.bf16.msra.mxu0 %v3720
      %3741 = vmatprep.subr.bf16.mxu0 0
      %3742 = vmatpush1.bf16.msra.mxu0 %v3721
      %3743 = vmatprep.subr.bf16.mxu0 0
      %3744 = vmatpush1.bf16.msra.mxu0 %v3722
      %3745 = vmatprep.subr.bf16.mxu0 0
      %3746 = vmatpush1.bf16.msra.mxu0 %v3723
      %3747 = vmatprep.subr.bf16.mxu0 0
      %3748 = vmatpush1.bf16.msra.mxu0 %v3724
      %3749 = vmatprep.subr.bf16.mxu0 0
      %3750 = vmatpush1.bf16.msra.mxu0 0
      %3751 = vmatprep.subr.bf16.mxu0 0
      %3752 = vmatpush1.bf16.msra.mxu0 0
      %3753 = vmatprep.subr.bf16.mxu0 0
      %3754 = vmatpush1.bf16.msra.mxu0 0
      %3755 = vmatprep.subr.bf16.mxu0 0
      %3756 = vmatpush1.bf16.msra.mxu0 0
      %3757 = vmatprep.subr.bf16.mxu0 0
      %3758 = vmatpush1.bf16.msra.mxu0 0
      %3759 = vmatprep.subr.bf16.mxu0 0
      %3760 = vmatpush1.bf16.msra.mxu0 0
      %3761 = vmatprep.subr.bf16.mxu0 0
      %3762 = vmatpush1.bf16.msra.mxu0 0
      %3763 = vmatprep.subr.bf16.mxu0 0
      %3764 = vmatpush1.bf16.msra.mxu0 0
      %3765 = vmatprep.mubr.bf16.mxu0 0
      %3766 = vmatmul.mubr.bf16.gmra.mrb[0].mxu0 %v3667
      %v3767 = vpop.f32.mrb[0].mxu0
      %v3768 = vadd.f32 %v3684, %v3767
      %v3769 = vpop.f32.mrb[0].mxu0
      %v3770 = vpop.f32.mrb[0].mxu0
      %v3771 = vpop.f32.mrb[0].mxu0
      %3772 = vdwg.mxu0
      %v3773 = vlaneseq
      %v3774 = vand.u32 %v3773, 127
      %v3775 = vsub.f32 0.0, %v3768
      %v3776 = vmul.f32 %v3775, 1.442695
      %v3777 = vpow.pop %v3776
      %v3778 = vadd.f32 %v3777, 1.0
      %v3779 = vrcp.pop %v3778
      %v3780 = vmul.f32 %v3778, %v3779
      %v3781 = vsub.f32 2.0, %v3780
      %v3782 = vmul.f32 %v3779, %v3781
      %vm3783 = vcmp.ge.s32.totalorder %v3774, 1
      %vm3784 = vcmp.le.s32.totalorder %v3774, 4
      %vm3785 = vmand %vm3783, %vm3784
      %v3786 = vsel %vm3785, %v3768, -1e+30
      %vm3787 = vcmask 1040384
      %v3788 = vsel %vm3787, %v3786, -inf
      %3789 = vmax.xlane.f32.xlu0 %v3788
      %v3790 = vpop.xlane.xlu0 %3789
      %v3791 = vsub.f32 %v3768, %v3790
      %v3792 = vmul.f32 %v3791, 1.442695
      %v3793 = vpow.pop %v3792
      %v3794 = vsel %vm3785, %v3793, 0.0
      %v3795 = vsel %vm3787, %v3794, 0.0
      %3796 = vadd.xlane.f32.xlu0 %v3795
      %v3797 = vpop.xlane.xlu0 %3796
      %v3798 = vrcp.pop %v3797
      %v3799 = vmul.f32 %v3797, %v3798
      %v3800 = vsub.f32 2.0, %v3799
      %v3801 = vmul.f32 %v3798, %v3800
      %v3802 = vmul.f32 %v3794, %v3801
      %vm3803 = vcmp.eq.s32.totalorder %v3774, 0
      %v3804 = vsel %vm3803, %v3782, %v3802
      %v3805 = vlaneseq
      %v3806 = vshrl.u32 %v3805, 7
      %v3807 = vsub.s32 0, %v3806
      %v3808 = vrot.slane %v3804, %v3807
      %3809 = vst [vmem:[%s795] sm:$0xff] %v3808
      %p3810 = scmp.lt.s32.totalorder %s41, 1
      %s3811 = scalar_select %p3810, %s41, 1
      %s3812 = smul.addr %s3811, 8
      %s3813 = scalar_lea.vmem %s26, %s3812
      // Predicated region
      $region125: #{discriminator_forward.1} parent=123 // pred_check
        %p3814 = pneg %p610
      $region126: #{discriminator_forward.1} parent=123 // pred_check_branch
        %3816 = sbr.rel (%p3814) target = $region128
      $region127: #{discriminator_forward.1} parent=123 // pred_region
        _
      $region128: #{discriminator_forward.1} parent=123 // pred_fallthru
        _
    $region124: #{discriminator_forward.1} parent=5 // pred_fallthru
      _
    %p3817 = scmp.le.s32.totalorder 2, %s36
    // Predicated region
    $region129: #{discriminator_forward.1} parent=5 // pred_check
      %p3818 = pneg %p3817
    $region130: #{discriminator_forward.1} parent=5 // pred_check_branch
      %3820 = sbr.rel (%p3818) target = $region132
    $region131: #{discriminator_forward.1} parent=5 // pred_region
      %s3821 = ssub.s32 %s36, 2
      // Predicated region
      $region133: #{discriminator_forward.1} parent=131 // pred_check
        %p3822 = pneg %p616
      $region134: #{discriminator_forward.1} parent=131 // pred_check_branch
        %3824 = sbr.rel (%p3822) target = $region136
      $region135: #{discriminator_forward.1} parent=131 // pred_region
        %p3825 = scmp.lt.s32.totalorder %s42, 1
        %s3826 = scalar_select %p3825, %s42, 1
        %s3827 = smul.addr %s3826, 8
        %s3828 = scalar_lea.vmem %s26, %s3827
      $region136: #{discriminator_forward.1} parent=131 // pred_fallthru
        _
    $region132: #{discriminator_forward.1} parent=5 // pred_fallthru
      _
  $region6: #{discriminator_forward.1} parent=0 // loop_footer
    %s40 = sadd.s32 1, %s36
  $region7: #{discriminator_forward.1} parent=0 // loop_footer_branch
    %35 = sbr.rel target = $region3
  $region8: #{discriminator_forward.1} parent=0 // loop_exit
    _

</llo_original>
